<compile_context>
chip_gen: v7x
topology: tpu7x:2x2x1
jax: 0.10.0
libtpu: 0.0.40
codegen_flags: <defaults>
</compile_context>

<pallas_src>
import functools

import jax
import jax.numpy as jnp
from jax.experimental import pallas as pl
from jax.experimental.pallas import tpu as pltpu


# ----------------------------- Pallas kernels -------------------------------
def _conv_stats_kernel(xp_ref, w_ref, out_ref, stats_ref, patches_ref, *,
                       stride, Hp, Ho, Wo, Cin, Cout):
    """3x3 conv for one batch element + partial BatchNorm statistics.

    xp_ref     : (1, s*s*Hp, Wp, Cin) bf16  zero-padded (parity-decomposed) input
    w_ref      : (9*Cin, Cout)        bf16  flattened conv weight (VMEM-resident)
    out_ref    : (1, Ho*Wo, Cout)     f32   raw conv output
    stats_ref  : (1, 2, Cout)         f32   per-tile [sum, sum-of-squares]
    patches_ref: (Ho, Wo, 9*Cin)      bf16  VMEM scratch (on-chip im2col)
    """
    s = stride
    # Nine unit-stride static slices of the VMEM halo tile -> im2col scratch.
    # (For stride 2 the wrapper's parity decomposition already turned the
    # strided taps into unit-stride slices of four parity planes.)
    for dy in range(3):
        for dx in range(3):
            t = dy * 3 + dx
            plane = (dy % s) * s + (dx % s)          # parity plane (s=2), 0 (s=1)
            r0 = plane * Hp + dy // s
            c0 = dx // s
            patches_ref[:, :, t * Cin:(t + 1) * Cin] = (
                xp_ref[0, r0:r0 + Ho, c0:c0 + Wo, :])

    # Single MXU matmul: taps folded into the contraction dim (K = 9*Cin),
    # bf16 operands, f32 accumulation.
    patches = patches_ref[...].reshape(Ho * Wo, 9 * Cin)
    acc = jnp.dot(patches, w_ref[...], preferred_element_type=jnp.float32)
    # Conv bias intentionally omitted: it is cancelled exactly by the
    # training-mode BatchNorm mean subtraction.
    out_ref[0] = acc

    # Partial statistics for the BatchNorm (finalized in the wrapper).
    stats_ref[0, 0:1, :] = jnp.sum(acc, axis=0, keepdims=True)
    stats_ref[0, 1:2, :] = jnp.sum(acc * acc, axis=0, keepdims=True)


def _bn_lrelu_kernel(y_ref, scale_ref, shift_ref, out_ref):
    """BatchNorm affine (pre-folded per-channel scale/shift) + LeakyReLU(0.2)."""
    z = y_ref[0] * scale_ref[...] + shift_ref[...]          # f32
    out_ref[0] = jnp.where(z > 0.0, z, 0.2 * z).astype(out_ref.dtype)


# ------------------------------ JAX wrapper ---------------------------------
def _conv_bn_lrelu(x_nhwc, w_hwio, gamma, beta, *, stride, out_dtype):
    """One Conv2d(k=3, pad=1, stride) + BatchNorm2d(batch stats) + LeakyReLU."""
    N, H, W, Cin = x_nhwc.shape
    Cout = w_hwio.shape[-1]
    Ho = (H - 1) // stride + 1
    Wo = (W - 1) // stride + 1
    s = stride

    # Zero-pad once (pad=1) and feed the MXU in bf16 (f32 accumulation).
    xp = jnp.pad(x_nhwc, ((0, 0), (1, 1), (1, 1), (0, 0))).astype(jnp.bfloat16)

    if s == 1:
        Hp, Wp = H + 2, W + 2
        xp_dec = xp                                          # (N, Hp, Wp, Cin)
    else:
        # Space-to-depth (parity) decomposition: stride-2 taps become
        # unit-stride slices of 4 parity planes. Pure 1x data movement in HBM.
        assert s == 2 and H % 2 == 0 and W % 2 == 0
        Hp, Wp = Ho + 1, Wo + 1
        xp_dec = xp.reshape(N, Hp, 2, Wp, 2, Cin).transpose(0, 2, 4, 1, 3, 5)
        xp_dec = xp_dec.reshape(N, 4 * Hp, Wp, Cin)

    w_flat = w_hwio.reshape(9 * Cin, Cout).astype(jnp.bfloat16)

    conv_kernel = functools.partial(
        _conv_stats_kernel, stride=s, Hp=Hp, Ho=Ho, Wo=Wo, Cin=Cin, Cout=Cout)

    # Pass 1: conv (one matmul per tile) + per-tile BN partial sums.
    conv_raw, stats = pl.pallas_call(
        conv_kernel,
        out_shape=(jax.ShapeDtypeStruct((N, Ho * Wo, Cout), jnp.float32),
                   jax.ShapeDtypeStruct((N, 2, Cout), jnp.float32)),
        grid_spec=pltpu.PrefetchScalarGridSpec(
            num_scalar_prefetch=0,
            grid=(N,),
            in_specs=[
                pl.BlockSpec((1, s * s * Hp, Wp, Cin), lambda n: (n, 0, 0, 0)),
                pl.BlockSpec((9 * Cin, Cout), lambda n: (0, 0)),   # resident
            ],
            out_specs=(
                pl.BlockSpec((1, Ho * Wo, Cout), lambda n: (n, 0, 0)),
                pl.BlockSpec((1, 2, Cout), lambda n: (n, 0, 0)),
            ),
            scratch_shapes=[pltpu.VMEM((Ho, Wo, 9 * Cin), jnp.bfloat16)],
        ),
        compiler_params=pltpu.CompilerParams(
            dimension_semantics=("parallel",),     # v7x: shard batch across TCs
            vmem_limit_bytes=32 * 1024 * 1024,     # explicit (v5e default is 16MiB)
        ),
    )(xp_dec, w_flat)

    # Tiny O(Cout) finalization: biased variance (training-mode BN, eps=1e-5),
    # gamma folded into the rsqrt -> a single scale/shift applied in pass 2.
    cnt = jnp.float32(N * Ho * Wo)
    tot = jnp.sum(stats, axis=0)                             # (2, Cout)
    mean = tot[0] / cnt
    var = jnp.maximum(tot[1] / cnt - mean * mean, 0.0)
    # TODO(synk): for very large N*H*W switch to a Welford / two-pass variance
    # to avoid cancellation in E[x^2] - E[x]^2.
    scale = gamma.astype(jnp.float32) * jax.lax.rsqrt(var + 1e-5)
    shift = beta.astype(jnp.float32) - mean * scale

    # Pass 2: normalize + affine + LeakyReLU(0.2).
    y = pl.pallas_call(
        _bn_lrelu_kernel,
        out_shape=jax.ShapeDtypeStruct((N, Ho * Wo, Cout), out_dtype),
        grid_spec=pltpu.PrefetchScalarGridSpec(
            num_scalar_prefetch=0,
            grid=(N,),
            in_specs=[
                pl.BlockSpec((1, Ho * Wo, Cout), lambda n: (n, 0, 0)),
                pl.BlockSpec((1, Cout), lambda n: (0, 0)),
                pl.BlockSpec((1, Cout), lambda n: (0, 0)),
            ],
            out_specs=pl.BlockSpec((1, Ho * Wo, Cout), lambda n: (n, 0, 0)),
        ),
        compiler_params=pltpu.CompilerParams(
            dimension_semantics=("parallel",),
            vmem_limit_bytes=32 * 1024 * 1024,
        ),
    )(conv_raw, scale.reshape(1, Cout), shift.reshape(1, Cout))

    return y.reshape(N, Ho, Wo, Cout)


def dis_block(x_nchw, params):
    """DisBlock.forward: conv3x3(s=1) -> BN -> LReLU -> conv3x3(s=2) -> BN -> LReLU."""
    x = jnp.transpose(x_nchw, (0, 2, 3, 1))                  # NCHW -> NHWC (C on lanes)
    # Stage-1 activation kept in bf16: it is only consumed by stage-2's bf16
    # MXU feed, so this halves the intermediate HBM traffic at no extra
    # numerical cost.
    y1 = _conv_bn_lrelu(x, params["w1"], params["g1"], params["be1"],
                        stride=1, out_dtype=jnp.bfloat16)
    y2 = _conv_bn_lrelu(y1, params["w2"], params["g2"], params["be2"],
                        stride=2, out_dtype=jnp.float32)
    return jnp.transpose(y2, (0, 3, 1, 2))                   # NHWC -> NCHW


# ------------------------- deterministic parameters -------------------------
def init_params(key, cc):
    """Shapes from DisBlock.__init__ (weights HWIO; BN weight=1, bias=0).

    Conv biases b1/b2 are generated for interface parity but are NOT used by
    the kernel path: a bias added before training-mode BatchNorm is cancelled
    exactly by the mean subtraction (the f32 reference below keeps them).
    """
    k1, k2, k3, k4 = jax.random.split(key, 4)
    bnd1 = 1.0 / jnp.sqrt(cc * 9.0)
    bnd2 = 1.0 / jnp.sqrt(cc * 9.0)
    return {
        "w1": jax.random.uniform(k1, (3, 3, cc, cc), jnp.float32, -bnd1, bnd1),
        "b1": jax.random.uniform(k2, (cc,), jnp.float32, -bnd1, bnd1),
        "g1": jnp.ones((cc,), jnp.float32),
        "be1": jnp.zeros((cc,), jnp.float32),
        "w2": jax.random.uniform(k3, (3, 3, cc, 2 * cc), jnp.float32, -bnd2, bnd2),
        "b2": jax.random.uniform(k4, (2 * cc,), jnp.float32, -bnd2, bnd2),
        "g2": jnp.ones((2 * cc,), jnp.float32),
        "be2": jnp.zeros((2 * cc,), jnp.float32),
    }


# ----------------------------- pure-JAX reference ---------------------------
def _ref_block(x_nchw, params):
    """Full-f32 PyTorch-faithful reference (conv bias included)."""
    def conv(x, w, b, s):
        y = jax.lax.conv_general_dilated(
            x, w, (s, s), ((1, 1), (1, 1)),
            dimension_numbers=("NHWC", "HWIO", "NHWC"))
        return y + b
    def bn_lrelu(y, g, be):
        mean = y.mean(axis=(0, 1, 2), keepdims=True)
        var = ((y - mean) ** 2).mean(axis=(0, 1, 2), keepdims=True)
        z = (y - mean) / jnp.sqrt(var + 1e-5) * g + be
        return jnp.where(z > 0, z, 0.2 * z)
    x = jnp.transpose(x_nchw, (0, 2, 3, 1))
    y1 = bn_lrelu(conv(x, params["w1"], params["b1"], 1), params["g1"], params["be1"])
    y2 = bn_lrelu(conv(y1, params["w2"], params["b2"], 2), params["g2"], params["be2"])
    return jnp.transpose(y2, (0, 3, 1, 2))


if __name__ == "__main__":
    cc = 4
    key = jax.random.PRNGKey(0)
    kx, kp = jax.random.split(key)
    x = jax.random.normal(kx, (2, cc, 16, 16), jnp.float32)  # NCHW input
    params = init_params(kp, cc)

    fwd = jax.jit(dis_block)
    out = jax.block_until_ready(fwd(x, params))
    assert out.shape == (2, 2 * cc, 8, 8), out.shape

    ref = jax.block_until_ready(_ref_block(x, params))
    # bf16 MXU feed with f32 accumulation vs. a full-f32 reference -> loose
    # but principled tolerance (observed max error is ~1e-2).
    max_err = float(jnp.max(jnp.abs(out - ref)))
    assert jnp.allclose(out, ref, rtol=2e-2, atol=2e-2), max_err

    print("KERNEL_OK")
</pallas_src>

<mosaic_0001>
module attributes {stable_mosaic.version = 11 : i64} {
  func.func @_conv_stats_kernel(%arg0: i32, %arg1: memref<1x18x18x4xbf16, #tpu.memory_space<vmem>>, %arg2: memref<36x4xbf16, #tpu.memory_space<vmem>>, %arg3: memref<1x256x4xf32, #tpu.memory_space<vmem>>, %arg4: memref<1x2x4xf32, #tpu.memory_space<vmem>>, %arg5: memref<16x16x36xbf16, #tpu.memory_space<vmem>>) attributes {dimension_semantics = [#tpu.dimension_semantics<parallel>], iteration_bounds = array<i64: 2>, scalar_prefetch = 0 : i64, scratch_operands = 1 : i64, tpu.core_type = #tpu.core_type<tc>, window_params = [{transform_indices = @transform_0, window_bounds = array<i64: 1, 18, 18, 4>}, {pipeline_mode = #tpu.pipeline_mode<synchronous>, transform_indices = @transform_1, window_bounds = array<i64: 36, 4>}, {transform_indices = @transform_2, window_bounds = array<i64: 1, 256, 4>}, {transform_indices = @transform_3, window_bounds = array<i64: 1, 2, 4>}]} {
    %c0 = arith.constant 0 : index
    %c0_0 = arith.constant 0 : index
    %c0_1 = arith.constant 0 : index
    %c0_2 = arith.constant 0 : index
    %0 = vector.load %arg1[%c0, %c0_0, %c0_1, %c0_2] : memref<1x18x18x4xbf16, #tpu.memory_space<vmem>>, vector<1x16x16x4xbf16>
    %1 = vector.shape_cast %0 : vector<1x16x16x4xbf16> to vector<16x16x4xbf16>
    %c0_3 = arith.constant 0 : index
    %c0_4 = arith.constant 0 : index
    %c0_5 = arith.constant 0 : index
    %2 = vector.load %arg5[%c0_3, %c0_4, %c0_5] : memref<16x16x36xbf16, #tpu.memory_space<vmem>>, vector<16x16x4xbf16>
    tpu.vector_store %arg5[%c0_3, %c0_4, %c0_5], %1 {strides = array<i32>} : memref<16x16x36xbf16, #tpu.memory_space<vmem>>, vector<16x16x4xbf16>,
    %c0_6 = arith.constant 0 : index
    %c0_7 = arith.constant 0 : index
    %c1 = arith.constant 1 : index
    %c0_8 = arith.constant 0 : index
    %3 = vector.load %arg1[%c0_6, %c0_7, %c1, %c0_8] : memref<1x18x18x4xbf16, #tpu.memory_space<vmem>>, vector<1x16x16x4xbf16>
    %4 = vector.shape_cast %3 : vector<1x16x16x4xbf16> to vector<16x16x4xbf16>
    %c0_9 = arith.constant 0 : index
    %c0_10 = arith.constant 0 : index
    %c4 = arith.constant 4 : index
    %5 = vector.load %arg5[%c0_9, %c0_10, %c4] : memref<16x16x36xbf16, #tpu.memory_space<vmem>>, vector<16x16x4xbf16>
    tpu.vector_store %arg5[%c0_9, %c0_10, %c4], %4 {strides = array<i32>} : memref<16x16x36xbf16, #tpu.memory_space<vmem>>, vector<16x16x4xbf16>,
    %c0_11 = arith.constant 0 : index
    %c0_12 = arith.constant 0 : index
    %c2 = arith.constant 2 : index
    %c0_13 = arith.constant 0 : index
    %6 = vector.load %arg1[%c0_11, %c0_12, %c2, %c0_13] : memref<1x18x18x4xbf16, #tpu.memory_space<vmem>>, vector<1x16x16x4xbf16>
    %7 = vector.shape_cast %6 : vector<1x16x16x4xbf16> to vector<16x16x4xbf16>
    %c0_14 = arith.constant 0 : index
    %c0_15 = arith.constant 0 : index
    %c8 = arith.constant 8 : index
    %8 = vector.load %arg5[%c0_14, %c0_15, %c8] : memref<16x16x36xbf16, #tpu.memory_space<vmem>>, vector<16x16x4xbf16>
    tpu.vector_store %arg5[%c0_14, %c0_15, %c8], %7 {strides = array<i32>} : memref<16x16x36xbf16, #tpu.memory_space<vmem>>, vector<16x16x4xbf16>,
    %c0_16 = arith.constant 0 : index
    %c1_17 = arith.constant 1 : index
    %c0_18 = arith.constant 0 : index
    %c0_19 = arith.constant 0 : index
    %9 = vector.load %arg1[%c0_16, %c1_17, %c0_18, %c0_19] : memref<1x18x18x4xbf16, #tpu.memory_space<vmem>>, vector<1x16x16x4xbf16>
    %10 = vector.shape_cast %9 : vector<1x16x16x4xbf16> to vector<16x16x4xbf16>
    %c0_20 = arith.constant 0 : index
    %c0_21 = arith.constant 0 : index
    %c12 = arith.constant 12 : index
    %11 = vector.load %arg5[%c0_20, %c0_21, %c12] : memref<16x16x36xbf16, #tpu.memory_space<vmem>>, vector<16x16x4xbf16>
    tpu.vector_store %arg5[%c0_20, %c0_21, %c12], %10 {strides = array<i32>} : memref<16x16x36xbf16, #tpu.memory_space<vmem>>, vector<16x16x4xbf16>,
    %c0_22 = arith.constant 0 : index
    %c1_23 = arith.constant 1 : index
    %c1_24 = arith.constant 1 : index
    %c0_25 = arith.constant 0 : index
    %12 = vector.load %arg1[%c0_22, %c1_23, %c1_24, %c0_25] : memref<1x18x18x4xbf16, #tpu.memory_space<vmem>>, vector<1x16x16x4xbf16>
    %13 = vector.shape_cast %12 : vector<1x16x16x4xbf16> to vector<16x16x4xbf16>
    %c0_26 = arith.constant 0 : index
    %c0_27 = arith.constant 0 : index
    %c16 = arith.constant 16 : index
    %14 = vector.load %arg5[%c0_26, %c0_27, %c16] : memref<16x16x36xbf16, #tpu.memory_space<vmem>>, vector<16x16x4xbf16>
    tpu.vector_store %arg5[%c0_26, %c0_27, %c16], %13 {strides = array<i32>} : memref<16x16x36xbf16, #tpu.memory_space<vmem>>, vector<16x16x4xbf16>,
    %c0_28 = arith.constant 0 : index
    %c1_29 = arith.constant 1 : index
    %c2_30 = arith.constant 2 : index
    %c0_31 = arith.constant 0 : index
    %15 = vector.load %arg1[%c0_28, %c1_29, %c2_30, %c0_31] : memref<1x18x18x4xbf16, #tpu.memory_space<vmem>>, vector<1x16x16x4xbf16>
    %16 = vector.shape_cast %15 : vector<1x16x16x4xbf16> to vector<16x16x4xbf16>
    %c0_32 = arith.constant 0 : index
    %c0_33 = arith.constant 0 : index
    %c20 = arith.constant 20 : index
    %17 = vector.load %arg5[%c0_32, %c0_33, %c20] : memref<16x16x36xbf16, #tpu.memory_space<vmem>>, vector<16x16x4xbf16>
    tpu.vector_store %arg5[%c0_32, %c0_33, %c20], %16 {strides = array<i32>} : memref<16x16x36xbf16, #tpu.memory_space<vmem>>, vector<16x16x4xbf16>,
    %c0_34 = arith.constant 0 : index
    %c2_35 = arith.constant 2 : index
    %c0_36 = arith.constant 0 : index
    %c0_37 = arith.constant 0 : index
    %18 = vector.load %arg1[%c0_34, %c2_35, %c0_36, %c0_37] : memref<1x18x18x4xbf16, #tpu.memory_space<vmem>>, vector<1x16x16x4xbf16>
    %19 = vector.shape_cast %18 : vector<1x16x16x4xbf16> to vector<16x16x4xbf16>
    %c0_38 = arith.constant 0 : index
    %c0_39 = arith.constant 0 : index
    %c24 = arith.constant 24 : index
    %20 = vector.load %arg5[%c0_38, %c0_39, %c24] : memref<16x16x36xbf16, #tpu.memory_space<vmem>>, vector<16x16x4xbf16>
    tpu.vector_store %arg5[%c0_38, %c0_39, %c24], %19 {strides = array<i32>} : memref<16x16x36xbf16, #tpu.memory_space<vmem>>, vector<16x16x4xbf16>,
    %c0_40 = arith.constant 0 : index
    %c2_41 = arith.constant 2 : index
    %c1_42 = arith.constant 1 : index
    %c0_43 = arith.constant 0 : index
    %21 = vector.load %arg1[%c0_40, %c2_41, %c1_42, %c0_43] : memref<1x18x18x4xbf16, #tpu.memory_space<vmem>>, vector<1x16x16x4xbf16>
    %22 = vector.shape_cast %21 : vector<1x16x16x4xbf16> to vector<16x16x4xbf16>
    %c0_44 = arith.constant 0 : index
    %c0_45 = arith.constant 0 : index
    %c28 = arith.constant 28 : index
    %23 = vector.load %arg5[%c0_44, %c0_45, %c28] : memref<16x16x36xbf16, #tpu.memory_space<vmem>>, vector<16x16x4xbf16>
    tpu.vector_store %arg5[%c0_44, %c0_45, %c28], %22 {strides = array<i32>} : memref<16x16x36xbf16, #tpu.memory_space<vmem>>, vector<16x16x4xbf16>,
    %c0_46 = arith.constant 0 : index
    %c2_47 = arith.constant 2 : index
    %c2_48 = arith.constant 2 : index
    %c0_49 = arith.constant 0 : index
    %24 = vector.load %arg1[%c0_46, %c2_47, %c2_48, %c0_49] : memref<1x18x18x4xbf16, #tpu.memory_space<vmem>>, vector<1x16x16x4xbf16>
    %25 = vector.shape_cast %24 : vector<1x16x16x4xbf16> to vector<16x16x4xbf16>
    %c0_50 = arith.constant 0 : index
    %c0_51 = arith.constant 0 : index
    %c32 = arith.constant 32 : index
    %26 = vector.load %arg5[%c0_50, %c0_51, %c32] : memref<16x16x36xbf16, #tpu.memory_space<vmem>>, vector<16x16x4xbf16>
    tpu.vector_store %arg5[%c0_50, %c0_51, %c32], %25 {strides = array<i32>} : memref<16x16x36xbf16, #tpu.memory_space<vmem>>, vector<16x16x4xbf16>,
    %c0_52 = arith.constant 0 : index
    %c0_53 = arith.constant 0 : index
    %c0_54 = arith.constant 0 : index
    %27 = vector.load %arg5[%c0_52, %c0_53, %c0_54] : memref<16x16x36xbf16, #tpu.memory_space<vmem>>, vector<16x16x36xbf16>
    %28 = vector.shape_cast %27 : vector<16x16x36xbf16> to vector<256x36xbf16>
    %c0_55 = arith.constant 0 : index
    %c0_56 = arith.constant 0 : index
    %29 = vector.load %arg2[%c0_55, %c0_56] : memref<36x4xbf16, #tpu.memory_space<vmem>>, vector<36x4xbf16>
    %cst = arith.constant dense<0.000000e+00> : vector<256x4xf32>
    %30 = tpu.matmul %28, %29, %cst {dimension_numbers = #tpu.dot_dimension_numbers<[1], [0], [0], [1], [0, 0, 1, 1], [], []>} : vector<256x36xbf16>, vector<36x4xbf16>, vector<256x4xf32> -> vector<256x4xf32>
    %c0_57 = arith.constant 0 : index
    %c0_58 = arith.constant 0 : index
    %c0_59 = arith.constant 0 : index
    %31 = vector.load %arg3[%c0_57, %c0_58, %c0_59] : memref<1x256x4xf32, #tpu.memory_space<vmem>>, vector<1x256x4xf32>
    %32 = vector.shape_cast %31 : vector<1x256x4xf32> to vector<256x4xf32>
    %33 = vector.shape_cast %30 : vector<256x4xf32> to vector<1x256x4xf32>
    tpu.vector_store %arg3[%c0_57, %c0_58, %c0_59], %33 {strides = array<i32>} : memref<1x256x4xf32, #tpu.memory_space<vmem>>, vector<1x256x4xf32>,
    %cst_60 = arith.constant dense<0.000000e+00> : vector<4xf32>
    %34 = vector.multi_reduction <add>, %30, %cst_60 [0] : vector<256x4xf32> to vector<4xf32>
    %35 = vector.shape_cast %34 : vector<4xf32> to vector<1x4xf32>
    %c0_61 = arith.constant 0 : index
    %c0_62 = arith.constant 0 : index
    %c0_63 = arith.constant 0 : index
    %36 = vector.load %arg4[%c0_61, %c0_62, %c0_63] : memref<1x2x4xf32, #tpu.memory_space<vmem>>, vector<1x1x4xf32>
    %37 = vector.shape_cast %36 : vector<1x1x4xf32> to vector<1x4xf32>
    %38 = vector.shape_cast %35 : vector<1x4xf32> to vector<1x1x4xf32>
    tpu.vector_store %arg4[%c0_61, %c0_62, %c0_63], %38 {strides = array<i32>} : memref<1x2x4xf32, #tpu.memory_space<vmem>>, vector<1x1x4xf32>,
    %39 = arith.mulf %30, %30 : vector<256x4xf32>
    %cst_64 = arith.constant dense<0.000000e+00> : vector<4xf32>
    %40 = vector.multi_reduction <add>, %39, %cst_64 [0] : vector<256x4xf32> to vector<4xf32>
    %41 = vector.shape_cast %40 : vector<4xf32> to vector<1x4xf32>
    %c0_65 = arith.constant 0 : index
    %c1_66 = arith.constant 1 : index
    %c0_67 = arith.constant 0 : index
    %42 = vector.load %arg4[%c0_65, %c1_66, %c0_67] : memref<1x2x4xf32, #tpu.memory_space<vmem>>, vector<1x1x4xf32>
    %43 = vector.shape_cast %42 : vector<1x1x4xf32> to vector<1x4xf32>
    %44 = vector.shape_cast %41 : vector<1x4xf32> to vector<1x1x4xf32>
    tpu.vector_store %arg4[%c0_65, %c1_66, %c0_67], %44 {strides = array<i32>} : memref<1x2x4xf32, #tpu.memory_space<vmem>>, vector<1x1x4xf32>,
    return
  }
  func.func @transform_0(%arg0: i32) -> (i32, i32, i32, i32) {
    %c0_i32 = arith.constant 0 : i32
    %c0_i32_0 = arith.constant 0 : i32
    %c0_i32_1 = arith.constant 0 : i32
    %c0_i32_2 = arith.constant 0 : i32
    return %arg0, %c0_i32, %c0_i32_0, %c0_i32_1 : i32, i32, i32, i32
  }
  func.func @transform_1(%arg0: i32) -> (i32, i32) {
    %c0_i32 = arith.constant 0 : i32
    %c0_i32_0 = arith.constant 0 : i32
    %c0_i32_1 = arith.constant 0 : i32
    return %c0_i32, %c0_i32_0 : i32, i32
  }
  func.func @transform_2(%arg0: i32) -> (i32, i32, i32) {
    %c0_i32 = arith.constant 0 : i32
    %c0_i32_0 = arith.constant 0 : i32
    %c0_i32_1 = arith.constant 0 : i32
    return %arg0, %c0_i32, %c0_i32_0 : i32, i32, i32
  }
  func.func @transform_3(%arg0: i32) -> (i32, i32, i32) {
    %c0_i32 = arith.constant 0 : i32
    %c0_i32_0 = arith.constant 0 : i32
    %c0_i32_1 = arith.constant 0 : i32
    return %arg0, %c0_i32, %c0_i32_0 : i32, i32, i32
  }
}

module attributes {stable_mosaic.version = 11 : i64} {
  func.func @_bn_lrelu_kernel(%arg0: i32, %arg1: memref<1x256x4xf32, #tpu.memory_space<vmem>>, %arg2: memref<1x4xf32, #tpu.memory_space<vmem>>, %arg3: memref<1x4xf32, #tpu.memory_space<vmem>>, %arg4: memref<1x256x4xbf16, #tpu.memory_space<vmem>>) attributes {dimension_semantics = [#tpu.dimension_semantics<parallel>], iteration_bounds = array<i64: 2>, scalar_prefetch = 0 : i64, scratch_operands = 0 : i64, tpu.core_type = #tpu.core_type<tc>, window_params = [{transform_indices = @transform_0, window_bounds = array<i64: 1, 256, 4>}, {pipeline_mode = #tpu.pipeline_mode<synchronous>, transform_indices = @transform_1, window_bounds = array<i64: 1, 4>}, {pipeline_mode = #tpu.pipeline_mode<synchronous>, transform_indices = @transform_2, window_bounds = array<i64: 1, 4>}, {transform_indices = @transform_3, window_bounds = array<i64: 1, 256, 4>}]} {
    %c0 = arith.constant 0 : index
    %c0_0 = arith.constant 0 : index
    %c0_1 = arith.constant 0 : index
    %0 = vector.load %arg1[%c0, %c0_0, %c0_1] : memref<1x256x4xf32, #tpu.memory_space<vmem>>, vector<1x256x4xf32>
    %1 = vector.shape_cast %0 : vector<1x256x4xf32> to vector<256x4xf32>
    %c0_2 = arith.constant 0 : index
    %c0_3 = arith.constant 0 : index
    %2 = vector.load %arg2[%c0_2, %c0_3] : memref<1x4xf32, #tpu.memory_space<vmem>>, vector<1x4xf32>
    %3 = vector.broadcast %2 : vector<1x4xf32> to vector<256x4xf32>
    %4 = arith.mulf %1, %3 : vector<256x4xf32>
    %c0_4 = arith.constant 0 : index
    %c0_5 = arith.constant 0 : index
    %5 = vector.load %arg3[%c0_4, %c0_5] : memref<1x4xf32, #tpu.memory_space<vmem>>, vector<1x4xf32>
    %6 = vector.broadcast %5 : vector<1x4xf32> to vector<256x4xf32>
    %7 = arith.addf %4, %6 : vector<256x4xf32>
    %cst = arith.constant 0.000000e+00 : f32
    %8 = vector.broadcast %cst : f32 to vector<256x4xf32>
    %9 = arith.cmpf ogt, %7, %8 : vector<256x4xf32>
    %cst_6 = arith.constant 2.000000e-01 : f32
    %10 = vector.broadcast %cst_6 : f32 to vector<256x4xf32>
    %11 = arith.mulf %10, %7 : vector<256x4xf32>
    %12 = arith.select %9, %7, %11 : vector<256x4xi1>, vector<256x4xf32>
    %13 = arith.truncf %12 : vector<256x4xf32> to vector<256x4xbf16>
    %c0_7 = arith.constant 0 : index
    %c0_8 = arith.constant 0 : index
    %c0_9 = arith.constant 0 : index
    %14 = vector.load %arg4[%c0_7, %c0_8, %c0_9] : memref<1x256x4xbf16, #tpu.memory_space<vmem>>, vector<1x256x4xbf16>
    %15 = vector.shape_cast %14 : vector<1x256x4xbf16> to vector<256x4xbf16>
    %16 = vector.shape_cast %13 : vector<256x4xbf16> to vector<1x256x4xbf16>
    tpu.vector_store %arg4[%c0_7, %c0_8, %c0_9], %16 {strides = array<i32>} : memref<1x256x4xbf16, #tpu.memory_space<vmem>>, vector<1x256x4xbf16>,
    return
  }
  func.func @transform_0(%arg0: i32) -> (i32, i32, i32) {
    %c0_i32 = arith.constant 0 : i32
    %c0_i32_0 = arith.constant 0 : i32
    %c0_i32_1 = arith.constant 0 : i32
    return %arg0, %c0_i32, %c0_i32_0 : i32, i32, i32
  }
  func.func @transform_1(%arg0: i32) -> (i32, i32) {
    %c0_i32 = arith.constant 0 : i32
    %c0_i32_0 = arith.constant 0 : i32
    %c0_i32_1 = arith.constant 0 : i32
    return %c0_i32, %c0_i32_0 : i32, i32
  }
  func.func @transform_2(%arg0: i32) -> (i32, i32) {
    %c0_i32 = arith.constant 0 : i32
    %c0_i32_0 = arith.constant 0 : i32
    %c0_i32_1 = arith.constant 0 : i32
    return %c0_i32, %c0_i32_0 : i32, i32
  }
  func.func @transform_3(%arg0: i32) -> (i32, i32, i32) {
    %c0_i32 = arith.constant 0 : i32
    %c0_i32_0 = arith.constant 0 : i32
    %c0_i32_1 = arith.constant 0 : i32
    return %arg0, %c0_i32, %c0_i32_0 : i32, i32, i32
  }
}

module attributes {stable_mosaic.version = 11 : i64} {
  func.func @_conv_stats_kernel(%arg0: i32, %arg1: memref<1x36x9x4xbf16, #tpu.memory_space<vmem>>, %arg2: memref<36x8xbf16, #tpu.memory_space<vmem>>, %arg3: memref<1x64x8xf32, #tpu.memory_space<vmem>>, %arg4: memref<1x2x8xf32, #tpu.memory_space<vmem>>, %arg5: memref<8x8x36xbf16, #tpu.memory_space<vmem>>) attributes {dimension_semantics = [#tpu.dimension_semantics<parallel>], iteration_bounds = array<i64: 2>, scalar_prefetch = 0 : i64, scratch_operands = 1 : i64, tpu.core_type = #tpu.core_type<tc>, window_params = [{transform_indices = @transform_0, window_bounds = array<i64: 1, 36, 9, 4>}, {pipeline_mode = #tpu.pipeline_mode<synchronous>, transform_indices = @transform_1, window_bounds = array<i64: 36, 8>}, {transform_indices = @transform_2, window_bounds = array<i64: 1, 64, 8>}, {transform_indices = @transform_3, window_bounds = array<i64: 1, 2, 8>}]} {
    %c0 = arith.constant 0 : index
    %c0_0 = arith.constant 0 : index
    %c0_1 = arith.constant 0 : index
    %c0_2 = arith.constant 0 : index
    %0 = vector.load %arg1[%c0, %c0_0, %c0_1, %c0_2] : memref<1x36x9x4xbf16, #tpu.memory_space<vmem>>, vector<1x8x8x4xbf16>
    %1 = vector.shape_cast %0 : vector<1x8x8x4xbf16> to vector<8x8x4xbf16>
    %c0_3 = arith.constant 0 : index
    %c0_4 = arith.constant 0 : index
    %c0_5 = arith.constant 0 : index
    %2 = vector.load %arg5[%c0_3, %c0_4, %c0_5] : memref<8x8x36xbf16, #tpu.memory_space<vmem>>, vector<8x8x4xbf16>
    tpu.vector_store %arg5[%c0_3, %c0_4, %c0_5], %1 {strides = array<i32>} : memref<8x8x36xbf16, #tpu.memory_space<vmem>>, vector<8x8x4xbf16>,
    %c0_6 = arith.constant 0 : index
    %c9 = arith.constant 9 : index
    %c0_7 = arith.constant 0 : index
    %c0_8 = arith.constant 0 : index
    %3 = vector.load %arg1[%c0_6, %c9, %c0_7, %c0_8] : memref<1x36x9x4xbf16, #tpu.memory_space<vmem>>, vector<1x8x8x4xbf16>
    %4 = vector.shape_cast %3 : vector<1x8x8x4xbf16> to vector<8x8x4xbf16>
    %c0_9 = arith.constant 0 : index
    %c0_10 = arith.constant 0 : index
    %c4 = arith.constant 4 : index
    %5 = vector.load %arg5[%c0_9, %c0_10, %c4] : memref<8x8x36xbf16, #tpu.memory_space<vmem>>, vector<8x8x4xbf16>
    tpu.vector_store %arg5[%c0_9, %c0_10, %c4], %4 {strides = array<i32>} : memref<8x8x36xbf16, #tpu.memory_space<vmem>>, vector<8x8x4xbf16>,
    %c0_11 = arith.constant 0 : index
    %c0_12 = arith.constant 0 : index
    %c1 = arith.constant 1 : index
    %c0_13 = arith.constant 0 : index
    %6 = vector.load %arg1[%c0_11, %c0_12, %c1, %c0_13] : memref<1x36x9x4xbf16, #tpu.memory_space<vmem>>, vector<1x8x8x4xbf16>
    %7 = vector.shape_cast %6 : vector<1x8x8x4xbf16> to vector<8x8x4xbf16>
    %c0_14 = arith.constant 0 : index
    %c0_15 = arith.constant 0 : index
    %c8 = arith.constant 8 : index
    %8 = vector.load %arg5[%c0_14, %c0_15, %c8] : memref<8x8x36xbf16, #tpu.memory_space<vmem>>, vector<8x8x4xbf16>
    tpu.vector_store %arg5[%c0_14, %c0_15, %c8], %7 {strides = array<i32>} : memref<8x8x36xbf16, #tpu.memory_space<vmem>>, vector<8x8x4xbf16>,
    %c0_16 = arith.constant 0 : index
    %c18 = arith.constant 18 : index
    %c0_17 = arith.constant 0 : index
    %c0_18 = arith.constant 0 : index
    %9 = vector.load %arg1[%c0_16, %c18, %c0_17, %c0_18] : memref<1x36x9x4xbf16, #tpu.memory_space<vmem>>, vector<1x8x8x4xbf16>
    %10 = vector.shape_cast %9 : vector<1x8x8x4xbf16> to vector<8x8x4xbf16>
    %c0_19 = arith.constant 0 : index
    %c0_20 = arith.constant 0 : index
    %c12 = arith.constant 12 : index
    %11 = vector.load %arg5[%c0_19, %c0_20, %c12] : memref<8x8x36xbf16, #tpu.memory_space<vmem>>, vector<8x8x4xbf16>
    tpu.vector_store %arg5[%c0_19, %c0_20, %c12], %10 {strides = array<i32>} : memref<8x8x36xbf16, #tpu.memory_space<vmem>>, vector<8x8x4xbf16>,
    %c0_21 = arith.constant 0 : index
    %c27 = arith.constant 27 : index
    %c0_22 = arith.constant 0 : index
    %c0_23 = arith.constant 0 : index
    %12 = vector.load %arg1[%c0_21, %c27, %c0_22, %c0_23] : memref<1x36x9x4xbf16, #tpu.memory_space<vmem>>, vector<1x8x8x4xbf16>
    %13 = vector.shape_cast %12 : vector<1x8x8x4xbf16> to vector<8x8x4xbf16>
    %c0_24 = arith.constant 0 : index
    %c0_25 = arith.constant 0 : index
    %c16 = arith.constant 16 : index
    %14 = vector.load %arg5[%c0_24, %c0_25, %c16] : memref<8x8x36xbf16, #tpu.memory_space<vmem>>, vector<8x8x4xbf16>
    tpu.vector_store %arg5[%c0_24, %c0_25, %c16], %13 {strides = array<i32>} : memref<8x8x36xbf16, #tpu.memory_space<vmem>>, vector<8x8x4xbf16>,
    %c0_26 = arith.constant 0 : index
    %c18_27 = arith.constant 18 : index
    %c1_28 = arith.constant 1 : index
    %c0_29 = arith.constant 0 : index
    %15 = vector.load %arg1[%c0_26, %c18_27, %c1_28, %c0_29] : memref<1x36x9x4xbf16, #tpu.memory_space<vmem>>, vector<1x8x8x4xbf16>
    %16 = vector.shape_cast %15 : vector<1x8x8x4xbf16> to vector<8x8x4xbf16>
    %c0_30 = arith.constant 0 : index
    %c0_31 = arith.constant 0 : index
    %c20 = arith.constant 20 : index
    %17 = vector.load %arg5[%c0_30, %c0_31, %c20] : memref<8x8x36xbf16, #tpu.memory_space<vmem>>, vector<8x8x4xbf16>
    tpu.vector_store %arg5[%c0_30, %c0_31, %c20], %16 {strides = array<i32>} : memref<8x8x36xbf16, #tpu.memory_space<vmem>>, vector<8x8x4xbf16>,
    %c0_32 = arith.constant 0 : index
    %c1_33 = arith.constant 1 : index
    %c0_34 = arith.constant 0 : index
    %c0_35 = arith.constant 0 : index
    %18 = vector.load %arg1[%c0_32, %c1_33, %c0_34, %c0_35] : memref<1x36x9x4xbf16, #tpu.memory_space<vmem>>, vector<1x8x8x4xbf16>
    %19 = vector.shape_cast %18 : vector<1x8x8x4xbf16> to vector<8x8x4xbf16>
    %c0_36 = arith.constant 0 : index
    %c0_37 = arith.constant 0 : index
    %c24 = arith.constant 24 : index
    %20 = vector.load %arg5[%c0_36, %c0_37, %c24] : memref<8x8x36xbf16, #tpu.memory_space<vmem>>, vector<8x8x4xbf16>
    tpu.vector_store %arg5[%c0_36, %c0_37, %c24], %19 {strides = array<i32>} : memref<8x8x36xbf16, #tpu.memory_space<vmem>>, vector<8x8x4xbf16>,
    %c0_38 = arith.constant 0 : index
    %c10 = arith.constant 10 : index
    %c0_39 = arith.constant 0 : index
    %c0_40 = arith.constant 0 : index
    %21 = vector.load %arg1[%c0_38, %c10, %c0_39, %c0_40] : memref<1x36x9x4xbf16, #tpu.memory_space<vmem>>, vector<1x8x8x4xbf16>
    %22 = vector.shape_cast %21 : vector<1x8x8x4xbf16> to vector<8x8x4xbf16>
    %c0_41 = arith.constant 0 : index
    %c0_42 = arith.constant 0 : index
    %c28 = arith.constant 28 : index
    %23 = vector.load %arg5[%c0_41, %c0_42, %c28] : memref<8x8x36xbf16, #tpu.memory_space<vmem>>, vector<8x8x4xbf16>
    tpu.vector_store %arg5[%c0_41, %c0_42, %c28], %22 {strides = array<i32>} : memref<8x8x36xbf16, #tpu.memory_space<vmem>>, vector<8x8x4xbf16>,
    %c0_43 = arith.constant 0 : index
    %c1_44 = arith.constant 1 : index
    %c1_45 = arith.constant 1 : index
    %c0_46 = arith.constant 0 : index
    %24 = vector.load %arg1[%c0_43, %c1_44, %c1_45, %c0_46] : memref<1x36x9x4xbf16, #tpu.memory_space<vmem>>, vector<1x8x8x4xbf16>
    %25 = vector.shape_cast %24 : vector<1x8x8x4xbf16> to vector<8x8x4xbf16>
    %c0_47 = arith.constant 0 : index
    %c0_48 = arith.constant 0 : index
    %c32 = arith.constant 32 : index
    %26 = vector.load %arg5[%c0_47, %c0_48, %c32] : memref<8x8x36xbf16, #tpu.memory_space<vmem>>, vector<8x8x4xbf16>
    tpu.vector_store %arg5[%c0_47, %c0_48, %c32], %25 {strides = array<i32>} : memref<8x8x36xbf16, #tpu.memory_space<vmem>>, vector<8x8x4xbf16>,
    %c0_49 = arith.constant 0 : index
    %c0_50 = arith.constant 0 : index
    %c0_51 = arith.constant 0 : index
    %27 = vector.load %arg5[%c0_49, %c0_50, %c0_51] : memref<8x8x36xbf16, #tpu.memory_space<vmem>>, vector<8x8x36xbf16>
    %28 = vector.shape_cast %27 : vector<8x8x36xbf16> to vector<64x36xbf16>
    %c0_52 = arith.constant 0 : index
    %c0_53 = arith.constant 0 : index
    %29 = vector.load %arg2[%c0_52, %c0_53] : memref<36x8xbf16, #tpu.memory_space<vmem>>, vector<36x8xbf16>
    %cst = arith.constant dense<0.000000e+00> : vector<64x8xf32>
    %30 = tpu.matmul %28, %29, %cst {dimension_numbers = #tpu.dot_dimension_numbers<[1], [0], [0], [1], [0, 0, 1, 1], [], []>} : vector<64x36xbf16>, vector<36x8xbf16>, vector<64x8xf32> -> vector<64x8xf32>
    %c0_54 = arith.constant 0 : index
    %c0_55 = arith.constant 0 : index
    %c0_56 = arith.constant 0 : index
    %31 = vector.load %arg3[%c0_54, %c0_55, %c0_56] : memref<1x64x8xf32, #tpu.memory_space<vmem>>, vector<1x64x8xf32>
    %32 = vector.shape_cast %31 : vector<1x64x8xf32> to vector<64x8xf32>
    %33 = vector.shape_cast %30 : vector<64x8xf32> to vector<1x64x8xf32>
    tpu.vector_store %arg3[%c0_54, %c0_55, %c0_56], %33 {strides = array<i32>} : memref<1x64x8xf32, #tpu.memory_space<vmem>>, vector<1x64x8xf32>,
    %cst_57 = arith.constant dense<0.000000e+00> : vector<8xf32>
    %34 = vector.multi_reduction <add>, %30, %cst_57 [0] : vector<64x8xf32> to vector<8xf32>
    %35 = vector.shape_cast %34 : vector<8xf32> to vector<1x8xf32>
    %c0_58 = arith.constant 0 : index
    %c0_59 = arith.constant 0 : index
    %c0_60 = arith.constant 0 : index
    %36 = vector.load %arg4[%c0_58, %c0_59, %c0_60] : memref<1x2x8xf32, #tpu.memory_space<vmem>>, vector<1x1x8xf32>
    %37 = vector.shape_cast %36 : vector<1x1x8xf32> to vector<1x8xf32>
    %38 = vector.shape_cast %35 : vector<1x8xf32> to vector<1x1x8xf32>
    tpu.vector_store %arg4[%c0_58, %c0_59, %c0_60], %38 {strides = array<i32>} : memref<1x2x8xf32, #tpu.memory_space<vmem>>, vector<1x1x8xf32>,
    %39 = arith.mulf %30, %30 : vector<64x8xf32>
    %cst_61 = arith.constant dense<0.000000e+00> : vector<8xf32>
    %40 = vector.multi_reduction <add>, %39, %cst_61 [0] : vector<64x8xf32> to vector<8xf32>
    %41 = vector.shape_cast %40 : vector<8xf32> to vector<1x8xf32>
    %c0_62 = arith.constant 0 : index
    %c1_63 = arith.constant 1 : index
    %c0_64 = arith.constant 0 : index
    %42 = vector.load %arg4[%c0_62, %c1_63, %c0_64] : memref<1x2x8xf32, #tpu.memory_space<vmem>>, vector<1x1x8xf32>
    %43 = vector.shape_cast %42 : vector<1x1x8xf32> to vector<1x8xf32>
    %44 = vector.shape_cast %41 : vector<1x8xf32> to vector<1x1x8xf32>
    tpu.vector_store %arg4[%c0_62, %c1_63, %c0_64], %44 {strides = array<i32>} : memref<1x2x8xf32, #tpu.memory_space<vmem>>, vector<1x1x8xf32>,
    return
  }
  func.func @transform_0(%arg0: i32) -> (i32, i32, i32, i32) {
    %c0_i32 = arith.constant 0 : i32
    %c0_i32_0 = arith.constant 0 : i32
    %c0_i32_1 = arith.constant 0 : i32
    %c0_i32_2 = arith.constant 0 : i32
    return %arg0, %c0_i32, %c0_i32_0, %c0_i32_1 : i32, i32, i32, i32
  }
  func.func @transform_1(%arg0: i32) -> (i32, i32) {
    %c0_i32 = arith.constant 0 : i32
    %c0_i32_0 = arith.constant 0 : i32
    %c0_i32_1 = arith.constant 0 : i32
    return %c0_i32, %c0_i32_0 : i32, i32
  }
  func.func @transform_2(%arg0: i32) -> (i32, i32, i32) {
    %c0_i32 = arith.constant 0 : i32
    %c0_i32_0 = arith.constant 0 : i32
    %c0_i32_1 = arith.constant 0 : i32
    return %arg0, %c0_i32, %c0_i32_0 : i32, i32, i32
  }
  func.func @transform_3(%arg0: i32) -> (i32, i32, i32) {
    %c0_i32 = arith.constant 0 : i32
    %c0_i32_0 = arith.constant 0 : i32
    %c0_i32_1 = arith.constant 0 : i32
    return %arg0, %c0_i32, %c0_i32_0 : i32, i32, i32
  }
}

module attributes {stable_mosaic.version = 11 : i64} {
  func.func @_bn_lrelu_kernel(%arg0: i32, %arg1: memref<1x64x8xf32, #tpu.memory_space<vmem>>, %arg2: memref<1x8xf32, #tpu.memory_space<vmem>>, %arg3: memref<1x8xf32, #tpu.memory_space<vmem>>, %arg4: memref<1x64x8xf32, #tpu.memory_space<vmem>>) attributes {dimension_semantics = [#tpu.dimension_semantics<parallel>], iteration_bounds = array<i64: 2>, scalar_prefetch = 0 : i64, scratch_operands = 0 : i64, tpu.core_type = #tpu.core_type<tc>, window_params = [{transform_indices = @transform_0, window_bounds = array<i64: 1, 64, 8>}, {pipeline_mode = #tpu.pipeline_mode<synchronous>, transform_indices = @transform_1, window_bounds = array<i64: 1, 8>}, {pipeline_mode = #tpu.pipeline_mode<synchronous>, transform_indices = @transform_2, window_bounds = array<i64: 1, 8>}, {transform_indices = @transform_3, window_bounds = array<i64: 1, 64, 8>}]} {
    %c0 = arith.constant 0 : index
    %c0_0 = arith.constant 0 : index
    %c0_1 = arith.constant 0 : index
    %0 = vector.load %arg1[%c0, %c0_0, %c0_1] : memref<1x64x8xf32, #tpu.memory_space<vmem>>, vector<1x64x8xf32>
    %1 = vector.shape_cast %0 : vector<1x64x8xf32> to vector<64x8xf32>
    %c0_2 = arith.constant 0 : index
    %c0_3 = arith.constant 0 : index
    %2 = vector.load %arg2[%c0_2, %c0_3] : memref<1x8xf32, #tpu.memory_space<vmem>>, vector<1x8xf32>
    %3 = vector.broadcast %2 : vector<1x8xf32> to vector<64x8xf32>
    %4 = arith.mulf %1, %3 : vector<64x8xf32>
    %c0_4 = arith.constant 0 : index
    %c0_5 = arith.constant 0 : index
    %5 = vector.load %arg3[%c0_4, %c0_5] : memref<1x8xf32, #tpu.memory_space<vmem>>, vector<1x8xf32>
    %6 = vector.broadcast %5 : vector<1x8xf32> to vector<64x8xf32>
    %7 = arith.addf %4, %6 : vector<64x8xf32>
    %cst = arith.constant 0.000000e+00 : f32
    %8 = vector.broadcast %cst : f32 to vector<64x8xf32>
    %9 = arith.cmpf ogt, %7, %8 : vector<64x8xf32>
    %cst_6 = arith.constant 2.000000e-01 : f32
    %10 = vector.broadcast %cst_6 : f32 to vector<64x8xf32>
    %11 = arith.mulf %10, %7 : vector<64x8xf32>
    %12 = arith.select %9, %7, %11 : vector<64x8xi1>, vector<64x8xf32>
    %c0_7 = arith.constant 0 : index
    %c0_8 = arith.constant 0 : index
    %c0_9 = arith.constant 0 : index
    %13 = vector.load %arg4[%c0_7, %c0_8, %c0_9] : memref<1x64x8xf32, #tpu.memory_space<vmem>>, vector<1x64x8xf32>
    %14 = vector.shape_cast %13 : vector<1x64x8xf32> to vector<64x8xf32>
    %15 = vector.shape_cast %12 : vector<64x8xf32> to vector<1x64x8xf32>
    tpu.vector_store %arg4[%c0_7, %c0_8, %c0_9], %15 {strides = array<i32>} : memref<1x64x8xf32, #tpu.memory_space<vmem>>, vector<1x64x8xf32>,
    return
  }
  func.func @transform_0(%arg0: i32) -> (i32, i32, i32) {
    %c0_i32 = arith.constant 0 : i32
    %c0_i32_0 = arith.constant 0 : i32
    %c0_i32_1 = arith.constant 0 : i32
    return %arg0, %c0_i32, %c0_i32_0 : i32, i32, i32
  }
  func.func @transform_1(%arg0: i32) -> (i32, i32) {
    %c0_i32 = arith.constant 0 : i32
    %c0_i32_0 = arith.constant 0 : i32
    %c0_i32_1 = arith.constant 0 : i32
    return %c0_i32, %c0_i32_0 : i32, i32
  }
  func.func @transform_2(%arg0: i32) -> (i32, i32) {
    %c0_i32 = arith.constant 0 : i32
    %c0_i32_0 = arith.constant 0 : i32
    %c0_i32_1 = arith.constant 0 : i32
    return %c0_i32, %c0_i32_0 : i32, i32
  }
  func.func @transform_3(%arg0: i32) -> (i32, i32, i32) {
    %c0_i32 = arith.constant 0 : i32
    %c0_i32_0 = arith.constant 0 : i32
    %c0_i32_1 = arith.constant 0 : i32
    return %arg0, %c0_i32, %c0_i32_0 : i32, i32, i32
  }
}

</mosaic_0001>

<llo_original>
// kernel: dis_block.5
$region0: #{dis_block.5}
  #allocation0 [shape = 'u32[]', space=smem, size = 0x4, offset = 0x4, fixed_abs, tag = 'smem constant byte address 0x4 - core index']
  #allocation1 [shape = 'u32[144,128]{1,0:T(1,128)}', space=vmem, size = 0x12000, scoped, tag = 'internal scratch']
  %s0 = inlined_call_operand.vmem [shape: f32[2,256,4], index: 0, kind: input, shape index: {}]
  %s1 = inlined_call_operand.vmem [shape: f32[1,4], index: 1, kind: input, shape index: {}]
  %s2 = inlined_call_operand.vmem [shape: f32[1,4], index: 2, kind: input, shape index: {}]
  %s3 = inlined_call_operand.vmem [shape: bf16[2,256,4], index: 3, kind: output, shape index: {}]
  %s4 = sld [smem:[#allocation0]]
  $region45: #{dis_block.5} parent=0
    _
  %s6 = ssub.s32 1, %s4
  %s7 = scalar_select 0, %s6, %s4
  loop: start=0, step=1, limit=4
  $region2: #{dis_block.5} parent=0 // loop_pre_header
    _
  $region3: #{dis_block.5} parent=0 // loop_header
    %s9 = sphi 0, %s13
    %p10 = scmp.ge.s32.totalorder %s9, 4
    %s19 = sphi 0, %s21
    %s22 = sphi 0, %s19
    %s23 = sphi 0, %s22
    %s39 = sphi 0, %s23
    %s43 = sphi 0, %s43
    %s45 = sphi 0, %s43
    %s46 = sphi 0, %s45
    %s60 = sphi 0, %s46
    %s64 = sphi 0, %s64
    %s66 = sphi 0, %s64
    %s67 = sphi 0, %s66
    %s81 = sphi 0, %s67
    %s87 = sphi 0, %s89
    %s90 = sphi 0, %s87
    %s91 = sphi 0, %s90
    %s107 = sphi 0, %s91
  $region4: #{dis_block.5} parent=0 // loop_header_branch
    %12 = sbr.rel (%p10) target = $region8
  $region5: #{dis_block.5} parent=0 // loop_body
    %s14 = ssub.s32 %s9, 1
    %s15 = ssub.s32 %s9, 2
    %s16 = sadd.s32 %s9, 1
    %s17 = ssub.s32 %s9, %s16
    %p18 = scmp.eq.s32.totalorder %s17, 0
    %s20 = sadd.s32 %s19, 1
    %s21 = scalar_select %p18, %s19, %s20
    %p24 = pneg %p18
    %p25 = scmp.eq.s32.totalorder %s9, 1
    %p26 = por %p24, %p25
    %p27 = scmp.ne.s32.totalorder %s19, %s22
    %p28 = scmp.eq.s32.totalorder %s9, 0
    %p29 = por %p27, %p28
    %p30 = scmp.ne.s32.totalorder %s19, %s22
    %p31 = scmp.eq.s32.totalorder %s14, 1
    %p32 = por %p30, %p31
    %p33 = scmp.ne.s32.totalorder %s22, %s23
    %p34 = scmp.eq.s32.totalorder %s14, 0
    %p35 = por %p33, %p34
    %p36 = scmp.ne.s32.totalorder %s22, %s23
    %p37 = scmp.eq.s32.totalorder %s15, 1
    %p38 = por %p36, %p37
    %p40 = scmp.ne.s32.totalorder %s23, %s39
    %p41 = scmp.eq.s32.totalorder %s15, 0
    %p42 = por %p40, %p41
    %s44 = sadd.s32 %s43, 1
    %p47 = scmp.eq.s32.totalorder %s9, 1
    %p48 = scmp.ne.s32.totalorder %s43, %s45
    %p49 = scmp.eq.s32.totalorder %s9, 0
    %p50 = por %p48, %p49
    %p51 = scmp.ne.s32.totalorder %s43, %s45
    %p52 = scmp.eq.s32.totalorder %s14, 1
    %p53 = por %p51, %p52
    %p54 = scmp.ne.s32.totalorder %s45, %s46
    %p55 = scmp.eq.s32.totalorder %s14, 0
    %p56 = por %p54, %p55
    %p57 = scmp.ne.s32.totalorder %s45, %s46
    %p58 = scmp.eq.s32.totalorder %s15, 1
    %p59 = por %p57, %p58
    %p61 = scmp.ne.s32.totalorder %s46, %s60
    %p62 = scmp.eq.s32.totalorder %s15, 0
    %p63 = por %p61, %p62
    %s65 = sadd.s32 %s64, 1
    %p68 = scmp.eq.s32.totalorder %s9, 1
    %p69 = scmp.ne.s32.totalorder %s64, %s66
    %p70 = scmp.eq.s32.totalorder %s9, 0
    %p71 = por %p69, %p70
    %p72 = scmp.ne.s32.totalorder %s64, %s66
    %p73 = scmp.eq.s32.totalorder %s14, 1
    %p74 = por %p72, %p73
    %p75 = scmp.ne.s32.totalorder %s66, %s67
    %p76 = scmp.eq.s32.totalorder %s14, 0
    %p77 = por %p75, %p76
    %p78 = scmp.ne.s32.totalorder %s66, %s67
    %p79 = scmp.eq.s32.totalorder %s15, 1
    %p80 = por %p78, %p79
    %p82 = scmp.ne.s32.totalorder %s67, %s81
    %p83 = scmp.eq.s32.totalorder %s15, 0
    %p84 = por %p82, %p83
    %s85 = ssub.s32 %s9, %s16
    %p86 = scmp.eq.s32.totalorder %s85, 0
    %s88 = sadd.s32 %s87, 1
    %s89 = scalar_select %p86, %s87, %s88
    %p92 = pneg %p86
    %p93 = scmp.eq.s32.totalorder %s9, 1
    %p94 = por %p92, %p93
    %p95 = scmp.ne.s32.totalorder %s87, %s90
    %p96 = scmp.eq.s32.totalorder %s9, 0
    %p97 = por %p95, %p96
    %p98 = scmp.ne.s32.totalorder %s87, %s90
    %p99 = scmp.eq.s32.totalorder %s14, 1
    %p100 = por %p98, %p99
    %p101 = scmp.ne.s32.totalorder %s90, %s91
    %p102 = scmp.eq.s32.totalorder %s14, 0
    %p103 = por %p101, %p102
    %p104 = scmp.ne.s32.totalorder %s90, %s91
    %p105 = scmp.eq.s32.totalorder %s15, 1
    %p106 = por %p104, %p105
    %p108 = scmp.ne.s32.totalorder %s91, %s107
    %p109 = scmp.eq.s32.totalorder %s15, 0
    %p110 = por %p108, %p109
    %p111 = scmp.le.s32.totalorder 1, %s9
    %p112 = scmp.lt.s32.totalorder %s9, 3
    %p113 = pnand %p111, %p112
    %p114 = pneg %p113
    // Predicated region
    $region9: #{dis_block.5} parent=5 // pred_check
      _
    $region10: #{dis_block.5} parent=5 // pred_check_branch
      %116 = sbr.rel (%p113) target = $region12
    $region11: #{dis_block.5} parent=5 // pred_region
      %s117 = ssub.s32 %s9, 1
      // Predicated region
      $region13: #{dis_block.5} parent=11 // pred_check
        %p118 = pneg %p56
      $region14: #{dis_block.5} parent=11 // pred_check_branch
        %120 = sbr.rel (%p118) target = $region16
      $region15: #{dis_block.5} parent=11 // pred_region
        _
      $region16: #{dis_block.5} parent=11 // pred_fallthru
        _
      // Predicated region
      $region17: #{dis_block.5} parent=11 // pred_check
        %p121 = pneg %p77
      $region18: #{dis_block.5} parent=11 // pred_check_branch
        %123 = sbr.rel (%p121) target = $region20
      $region19: #{dis_block.5} parent=11 // pred_region
        _
      $region20: #{dis_block.5} parent=11 // pred_fallthru
        _
    $region12: #{dis_block.5} parent=5 // pred_fallthru
      _
    %p124 = scmp.lt.s32.totalorder %s9, 2
    // Predicated region
    $region21: #{dis_block.5} parent=5 // pred_check
      %p125 = pneg %p124
    $region22: #{dis_block.5} parent=5 // pred_check_branch
      %127 = sbr.rel (%p125) target = $region24
    $region23: #{dis_block.5} parent=5 // pred_region
      // Predicated region
      $region25: #{dis_block.5} parent=23 // pred_check
        %p128 = pneg %p29
      $region26: #{dis_block.5} parent=23 // pred_check_branch
        %130 = sbr.rel (%p128) target = $region28
      $region27: #{dis_block.5} parent=23 // pred_region
        %p131 = scmp.lt.s32.totalorder %s9, 1
        %s132 = scalar_select %p131, %s9, 1
        %s133 = smul.addr %s132, 32
        %s134 = smul.addr %s133, 8
        %s135 = scalar_lea.vmem %s0, %s134
      $region28: #{dis_block.5} parent=23 // pred_fallthru
        _
    $region24: #{dis_block.5} parent=5 // pred_fallthru
      _
    %p136 = scmp.le.s32.totalorder 1, %s9
    %p137 = scmp.lt.s32.totalorder %s9, 3
    %p138 = pnand %p136, %p137
    %p139 = pneg %p138
    // Predicated region
    $region29: #{dis_block.5} parent=5 // pred_check
      _
    $region30: #{dis_block.5} parent=5 // pred_check_branch
      %141 = sbr.rel (%p138) target = $region32
    $region31: #{dis_block.5} parent=5 // pred_region
      %s142 = ssub.s32 %s9, 1
      %p143 = scmp.lt.s32.totalorder %s14, 1
      %s144 = scalar_select %p143, %s14, 1
      %s145 = smul.addr %s144, 32
      %s146 = smul.addr %s145, 8
      %s147 = scalar_lea.vmem %s0, %s146
      %p148 = pneg %p35
      %p149 = pneg %p32
      %p150 = pneg %p56
      %p151 = pneg %p53
      %p152 = pneg %p77
      %p153 = pneg %p74
      %p154 = pneg %p103
      %p155 = pneg %p100
      %p156 = scmp.lt.s32.totalorder %s14, 1
      %s157 = scalar_select %p156, %s14, 1
      %s158 = smul.addr %s157, 32
      %s159 = smul.addr %s158, 4
      %s160 = scalar_lea.vmem %s3, %s159
      %p161 = scmp.lt.s32.totalorder %s14, 1
      %s162 = scalar_select %p161, %s14, 1
      %s163 = smul.addr %s162, 32
      %s164 = smul.addr %s163, 8
      %s165 = scalar_lea.vmem %s0, %s164
      %p166 = scmp.lt.s32.totalorder %s14, 1
      %s167 = scalar_select %p166, %s14, 1
      %s168 = smul.addr %s167, 32
      %s169 = smul.addr %s168, 4
      %s170 = scalar_lea.vmem %s3, %s169
      %v171 = vld [vmem:[%s165] sm:$0xff]
      %v172 = vld [vmem:[%s165 + $0x8] sm:$0xff]
      %v173 = vld [vmem:[%s165 + $0x10] sm:$0xff]
      %v174 = vld [vmem:[%s165 + $0x18] sm:$0xff]
      %v175 = vld [vmem:[%s165 + $0x20] sm:$0xff]
      %v176 = vld [vmem:[%s165 + $0x28] sm:$0xff]
      %v177 = vld [vmem:[%s165 + $0x30] sm:$0xff]
      %v178 = vld [vmem:[%s165 + $0x38] sm:$0xff]
      %v179 = vld [vmem:[%s165 + $0x40] sm:$0xff]
      %v180 = vld [vmem:[%s165 + $0x48] sm:$0xff]
      %v181 = vld [vmem:[%s165 + $0x50] sm:$0xff]
      %v182 = vld [vmem:[%s165 + $0x58] sm:$0xff]
      %v183 = vld [vmem:[%s165 + $0x60] sm:$0xff]
      %v184 = vld [vmem:[%s165 + $0x68] sm:$0xff]
      %v185 = vld [vmem:[%s165 + $0x70] sm:$0xff]
      %v186 = vld [vmem:[%s165 + $0x78] sm:$0xff]
      %v187 = vld [vmem:[%s165 + $0x80] sm:$0xff]
      %v188 = vld [vmem:[%s165 + $0x88] sm:$0xff]
      %v189 = vld [vmem:[%s165 + $0x90] sm:$0xff]
      %v190 = vld [vmem:[%s165 + $0x98] sm:$0xff]
      %v191 = vld [vmem:[%s165 + $0xa0] sm:$0xff]
      %v192 = vld [vmem:[%s165 + $0xa8] sm:$0xff]
      %v193 = vld [vmem:[%s165 + $0xb0] sm:$0xff]
      %v194 = vld [vmem:[%s165 + $0xb8] sm:$0xff]
      %v195 = vld [vmem:[%s165 + $0xc0] sm:$0xff]
      %v196 = vld [vmem:[%s165 + $0xc8] sm:$0xff]
      %v197 = vld [vmem:[%s165 + $0xd0] sm:$0xff]
      %v198 = vld [vmem:[%s165 + $0xd8] sm:$0xff]
      %v199 = vld [vmem:[%s165 + $0xe0] sm:$0xff]
      %v200 = vld [vmem:[%s165 + $0xe8] sm:$0xff]
      %v201 = vld [vmem:[%s165 + $0xf0] sm:$0xff]
      %v202 = vld [vmem:[%s165 + $0xf8] sm:$0xff]
      %v203 = vld [vmem:[%s1] sm:$0x1]
      %v205 = vlaneseq
      %v206 = vshrl.u32 %v205, 7
      %v207 = vsub.s32 0, %v206
      %v208 = vrot.slane %v203, %v207
      %v210 = vmul.f32 %v171, %v208
      %v211 = vmul.f32 %v172, %v208
      %v212 = vmul.f32 %v173, %v208
      %v213 = vmul.f32 %v174, %v208
      %v214 = vmul.f32 %v175, %v208
      %v215 = vmul.f32 %v176, %v208
      %v216 = vmul.f32 %v177, %v208
      %v217 = vmul.f32 %v178, %v208
      %v218 = vmul.f32 %v179, %v208
      %v219 = vmul.f32 %v180, %v208
      %v220 = vmul.f32 %v181, %v208
      %v221 = vmul.f32 %v182, %v208
      %v222 = vmul.f32 %v183, %v208
      %v223 = vmul.f32 %v184, %v208
      %v224 = vmul.f32 %v185, %v208
      %v225 = vmul.f32 %v186, %v208
      %v226 = vmul.f32 %v187, %v208
      %v227 = vmul.f32 %v188, %v208
      %v228 = vmul.f32 %v189, %v208
      %v229 = vmul.f32 %v190, %v208
      %v230 = vmul.f32 %v191, %v208
      %v231 = vmul.f32 %v192, %v208
      %v232 = vmul.f32 %v193, %v208
      %v233 = vmul.f32 %v194, %v208
      %v234 = vmul.f32 %v195, %v208
      %v235 = vmul.f32 %v196, %v208
      %v236 = vmul.f32 %v197, %v208
      %v237 = vmul.f32 %v198, %v208
      %v238 = vmul.f32 %v199, %v208
      %v239 = vmul.f32 %v200, %v208
      %v240 = vmul.f32 %v201, %v208
      %v241 = vmul.f32 %v202, %v208
      %v242 = vld [vmem:[%s2] sm:$0x1]
      %v244 = vlaneseq
      %v245 = vshrl.u32 %v244, 7
      %v246 = vsub.s32 0, %v245
      %v247 = vrot.slane %v242, %v246
      %v249 = vadd.f32 %v210, %v247
      %v250 = vadd.f32 %v211, %v247
      %v251 = vadd.f32 %v212, %v247
      %v252 = vadd.f32 %v213, %v247
      %v253 = vadd.f32 %v214, %v247
      %v254 = vadd.f32 %v215, %v247
      %v255 = vadd.f32 %v216, %v247
      %v256 = vadd.f32 %v217, %v247
      %v257 = vadd.f32 %v218, %v247
      %v258 = vadd.f32 %v219, %v247
      %v259 = vadd.f32 %v220, %v247
      %v260 = vadd.f32 %v221, %v247
      %v261 = vadd.f32 %v222, %v247
      %v262 = vadd.f32 %v223, %v247
      %v263 = vadd.f32 %v224, %v247
      %v264 = vadd.f32 %v225, %v247
      %v265 = vadd.f32 %v226, %v247
      %v266 = vadd.f32 %v227, %v247
      %v267 = vadd.f32 %v228, %v247
      %v268 = vadd.f32 %v229, %v247
      %v269 = vadd.f32 %v230, %v247
      %v270 = vadd.f32 %v231, %v247
      %v271 = vadd.f32 %v232, %v247
      %v272 = vadd.f32 %v233, %v247
      %v273 = vadd.f32 %v234, %v247
      %v274 = vadd.f32 %v235, %v247
      %v275 = vadd.f32 %v236, %v247
      %v276 = vadd.f32 %v237, %v247
      %v277 = vadd.f32 %v238, %v247
      %v278 = vadd.f32 %v239, %v247
      %v279 = vadd.f32 %v240, %v247
      %v280 = vadd.f32 %v241, %v247
      %vm281 = vcmp.gt.f32.partialorder %v249, 0.0
      %vm282 = vcmp.gt.f32.partialorder %v250, 0.0
      %vm283 = vcmp.gt.f32.partialorder %v251, 0.0
      %vm284 = vcmp.gt.f32.partialorder %v252, 0.0
      %vm285 = vcmp.gt.f32.partialorder %v253, 0.0
      %vm286 = vcmp.gt.f32.partialorder %v254, 0.0
      %vm287 = vcmp.gt.f32.partialorder %v255, 0.0
      %vm288 = vcmp.gt.f32.partialorder %v256, 0.0
      %vm289 = vcmp.gt.f32.partialorder %v257, 0.0
      %vm290 = vcmp.gt.f32.partialorder %v258, 0.0
      %vm291 = vcmp.gt.f32.partialorder %v259, 0.0
      %vm292 = vcmp.gt.f32.partialorder %v260, 0.0
      %vm293 = vcmp.gt.f32.partialorder %v261, 0.0
      %vm294 = vcmp.gt.f32.partialorder %v262, 0.0
      %vm295 = vcmp.gt.f32.partialorder %v263, 0.0
      %vm296 = vcmp.gt.f32.partialorder %v264, 0.0
      %vm297 = vcmp.gt.f32.partialorder %v265, 0.0
      %vm298 = vcmp.gt.f32.partialorder %v266, 0.0
      %vm299 = vcmp.gt.f32.partialorder %v267, 0.0
      %vm300 = vcmp.gt.f32.partialorder %v268, 0.0
      %vm301 = vcmp.gt.f32.partialorder %v269, 0.0
      %vm302 = vcmp.gt.f32.partialorder %v270, 0.0
      %vm303 = vcmp.gt.f32.partialorder %v271, 0.0
      %vm304 = vcmp.gt.f32.partialorder %v272, 0.0
      %vm305 = vcmp.gt.f32.partialorder %v273, 0.0
      %vm306 = vcmp.gt.f32.partialorder %v274, 0.0
      %vm307 = vcmp.gt.f32.partialorder %v275, 0.0
      %vm308 = vcmp.gt.f32.partialorder %v276, 0.0
      %vm309 = vcmp.gt.f32.partialorder %v277, 0.0
      %vm310 = vcmp.gt.f32.partialorder %v278, 0.0
      %vm311 = vcmp.gt.f32.partialorder %v279, 0.0
      %vm312 = vcmp.gt.f32.partialorder %v280, 0.0
      %v313 = vmul.f32 %v249, 0.2
      %v314 = vmul.f32 %v250, 0.2
      %v315 = vmul.f32 %v251, 0.2
      %v316 = vmul.f32 %v252, 0.2
      %v317 = vmul.f32 %v253, 0.2
      %v318 = vmul.f32 %v254, 0.2
      %v319 = vmul.f32 %v255, 0.2
      %v320 = vmul.f32 %v256, 0.2
      %v321 = vmul.f32 %v257, 0.2
      %v322 = vmul.f32 %v258, 0.2
      %v323 = vmul.f32 %v259, 0.2
      %v324 = vmul.f32 %v260, 0.2
      %v325 = vmul.f32 %v261, 0.2
      %v326 = vmul.f32 %v262, 0.2
      %v327 = vmul.f32 %v263, 0.2
      %v328 = vmul.f32 %v264, 0.2
      %v329 = vmul.f32 %v265, 0.2
      %v330 = vmul.f32 %v266, 0.2
      %v331 = vmul.f32 %v267, 0.2
      %v332 = vmul.f32 %v268, 0.2
      %v333 = vmul.f32 %v269, 0.2
      %v334 = vmul.f32 %v270, 0.2
      %v335 = vmul.f32 %v271, 0.2
      %v336 = vmul.f32 %v272, 0.2
      %v337 = vmul.f32 %v273, 0.2
      %v338 = vmul.f32 %v274, 0.2
      %v339 = vmul.f32 %v275, 0.2
      %v340 = vmul.f32 %v276, 0.2
      %v341 = vmul.f32 %v277, 0.2
      %v342 = vmul.f32 %v278, 0.2
      %v343 = vmul.f32 %v279, 0.2
      %v344 = vmul.f32 %v280, 0.2
      %v345 = vsel %vm281, %v249, %v313
      %v346 = vsel %vm282, %v250, %v314
      %v347 = vsel %vm283, %v251, %v315
      %v348 = vsel %vm284, %v252, %v316
      %v349 = vsel %vm285, %v253, %v317
      %v350 = vsel %vm286, %v254, %v318
      %v351 = vsel %vm287, %v255, %v319
      %v352 = vsel %vm288, %v256, %v320
      %v353 = vsel %vm289, %v257, %v321
      %v354 = vsel %vm290, %v258, %v322
      %v355 = vsel %vm291, %v259, %v323
      %v356 = vsel %vm292, %v260, %v324
      %v357 = vsel %vm293, %v261, %v325
      %v358 = vsel %vm294, %v262, %v326
      %v359 = vsel %vm295, %v263, %v327
      %v360 = vsel %vm296, %v264, %v328
      %v361 = vsel %vm297, %v265, %v329
      %v362 = vsel %vm298, %v266, %v330
      %v363 = vsel %vm299, %v267, %v331
      %v364 = vsel %vm300, %v268, %v332
      %v365 = vsel %vm301, %v269, %v333
      %v366 = vsel %vm302, %v270, %v334
      %v367 = vsel %vm303, %v271, %v335
      %v368 = vsel %vm304, %v272, %v336
      %v369 = vsel %vm305, %v273, %v337
      %v370 = vsel %vm306, %v274, %v338
      %v371 = vsel %vm307, %v275, %v339
      %v372 = vsel %vm308, %v276, %v340
      %v373 = vsel %vm309, %v277, %v341
      %v374 = vsel %vm310, %v278, %v342
      %v375 = vsel %vm311, %v279, %v343
      %v376 = vsel %vm312, %v280, %v344
      %v377 = vpack.c.bf16 %v346, %v345
      %v378 = vpack.c.bf16 %v348, %v347
      %v379 = vpack.c.bf16 %v350, %v349
      %v380 = vpack.c.bf16 %v352, %v351
      %v381 = vpack.c.bf16 %v354, %v353
      %v382 = vpack.c.bf16 %v356, %v355
      %v383 = vpack.c.bf16 %v358, %v357
      %v384 = vpack.c.bf16 %v360, %v359
      %v385 = vpack.c.bf16 %v362, %v361
      %v386 = vpack.c.bf16 %v364, %v363
      %v387 = vpack.c.bf16 %v366, %v365
      %v388 = vpack.c.bf16 %v368, %v367
      %v389 = vpack.c.bf16 %v370, %v369
      %v390 = vpack.c.bf16 %v372, %v371
      %v391 = vpack.c.bf16 %v374, %v373
      %v392 = vpack.c.bf16 %v376, %v375
      %v409 = vunpack.c.l.b16 %v377
      %v410 = vunpack.c.h.b16 %v377
      %v411 = vunpack.c.l.b16 %v378
      %v412 = vunpack.c.h.b16 %v378
      %v413 = vunpack.c.l.b16 %v379
      %v414 = vunpack.c.h.b16 %v379
      %v415 = vunpack.c.l.b16 %v380
      %v416 = vunpack.c.h.b16 %v380
      %v417 = vunpack.c.l.b16 %v381
      %v418 = vunpack.c.h.b16 %v381
      %v419 = vunpack.c.l.b16 %v382
      %v420 = vunpack.c.h.b16 %v382
      %v421 = vunpack.c.l.b16 %v383
      %v422 = vunpack.c.h.b16 %v383
      %v423 = vunpack.c.l.b16 %v384
      %v424 = vunpack.c.h.b16 %v384
      %v425 = vunpack.c.l.b16 %v385
      %v426 = vunpack.c.h.b16 %v385
      %v427 = vunpack.c.l.b16 %v386
      %v428 = vunpack.c.h.b16 %v386
      %v429 = vunpack.c.l.b16 %v387
      %v430 = vunpack.c.h.b16 %v387
      %v431 = vunpack.c.l.b16 %v388
      %v432 = vunpack.c.h.b16 %v388
      %v433 = vunpack.c.l.b16 %v389
      %v434 = vunpack.c.h.b16 %v389
      %v435 = vunpack.c.l.b16 %v390
      %v436 = vunpack.c.h.b16 %v390
      %v437 = vunpack.c.l.b16 %v391
      %v438 = vunpack.c.h.b16 %v391
      %v439 = vunpack.c.l.b16 %v392
      %v440 = vunpack.c.h.b16 %v392
      %v441 = vpack.c.b16 %v409, %v409
      %v442 = vpack.c.b16 %v410, %v410
      %v443 = vpack.c.b16 %v411, %v411
      %v444 = vpack.c.b16 %v412, %v412
      %v445 = vpack.c.b16 %v413, %v413
      %v446 = vpack.c.b16 %v414, %v414
      %v447 = vpack.c.b16 %v415, %v415
      %v448 = vpack.c.b16 %v416, %v416
      %v449 = vpack.c.b16 %v417, %v417
      %v450 = vpack.c.b16 %v418, %v418
      %v451 = vpack.c.b16 %v419, %v419
      %v452 = vpack.c.b16 %v420, %v420
      %v453 = vpack.c.b16 %v421, %v421
      %v454 = vpack.c.b16 %v422, %v422
      %v455 = vpack.c.b16 %v423, %v423
      %v456 = vpack.c.b16 %v424, %v424
      %v457 = vpack.c.b16 %v425, %v425
      %v458 = vpack.c.b16 %v426, %v426
      %v459 = vpack.c.b16 %v427, %v427
      %v460 = vpack.c.b16 %v428, %v428
      %v461 = vpack.c.b16 %v429, %v429
      %v462 = vpack.c.b16 %v430, %v430
      %v463 = vpack.c.b16 %v431, %v431
      %v464 = vpack.c.b16 %v432, %v432
      %v465 = vpack.c.b16 %v433, %v433
      %v466 = vpack.c.b16 %v434, %v434
      %v467 = vpack.c.b16 %v435, %v435
      %v468 = vpack.c.b16 %v436, %v436
      %v469 = vpack.c.b16 %v437, %v437
      %v470 = vpack.c.b16 %v438, %v438
      %v471 = vpack.c.b16 %v439, %v439
      %v472 = vpack.c.b16 %v440, %v440
      %vm505 = vcmask 27648
      %506 = vst.msk [vmem:[%s170] sm:$0xf] %vm505, %v441
      %507 = vst.msk [vmem:[%s170 + $0x4] sm:$0xf] %vm505, %v442
      %508 = vst.msk [vmem:[%s170 + $0x8] sm:$0xf] %vm505, %v443
      %509 = vst.msk [vmem:[%s170 + $0xc] sm:$0xf] %vm505, %v444
      %510 = vst.msk [vmem:[%s170 + $0x10] sm:$0xf] %vm505, %v445
      %511 = vst.msk [vmem:[%s170 + $0x14] sm:$0xf] %vm505, %v446
      %512 = vst.msk [vmem:[%s170 + $0x18] sm:$0xf] %vm505, %v447
      %513 = vst.msk [vmem:[%s170 + $0x1c] sm:$0xf] %vm505, %v448
      %514 = vst.msk [vmem:[%s170 + $0x20] sm:$0xf] %vm505, %v449
      %515 = vst.msk [vmem:[%s170 + $0x24] sm:$0xf] %vm505, %v450
      %516 = vst.msk [vmem:[%s170 + $0x28] sm:$0xf] %vm505, %v451
      %517 = vst.msk [vmem:[%s170 + $0x2c] sm:$0xf] %vm505, %v452
      %518 = vst.msk [vmem:[%s170 + $0x30] sm:$0xf] %vm505, %v453
      %519 = vst.msk [vmem:[%s170 + $0x34] sm:$0xf] %vm505, %v454
      %520 = vst.msk [vmem:[%s170 + $0x38] sm:$0xf] %vm505, %v455
      %521 = vst.msk [vmem:[%s170 + $0x3c] sm:$0xf] %vm505, %v456
      %522 = vst.msk [vmem:[%s170 + $0x40] sm:$0xf] %vm505, %v457
      %523 = vst.msk [vmem:[%s170 + $0x44] sm:$0xf] %vm505, %v458
      %524 = vst.msk [vmem:[%s170 + $0x48] sm:$0xf] %vm505, %v459
      %525 = vst.msk [vmem:[%s170 + $0x4c] sm:$0xf] %vm505, %v460
      %526 = vst.msk [vmem:[%s170 + $0x50] sm:$0xf] %vm505, %v461
      %527 = vst.msk [vmem:[%s170 + $0x54] sm:$0xf] %vm505, %v462
      %528 = vst.msk [vmem:[%s170 + $0x58] sm:$0xf] %vm505, %v463
      %529 = vst.msk [vmem:[%s170 + $0x5c] sm:$0xf] %vm505, %v464
      %530 = vst.msk [vmem:[%s170 + $0x60] sm:$0xf] %vm505, %v465
      %531 = vst.msk [vmem:[%s170 + $0x64] sm:$0xf] %vm505, %v466
      %532 = vst.msk [vmem:[%s170 + $0x68] sm:$0xf] %vm505, %v467
      %533 = vst.msk [vmem:[%s170 + $0x6c] sm:$0xf] %vm505, %v468
      %534 = vst.msk [vmem:[%s170 + $0x70] sm:$0xf] %vm505, %v469
      %535 = vst.msk [vmem:[%s170 + $0x74] sm:$0xf] %vm505, %v470
      %536 = vst.msk [vmem:[%s170 + $0x78] sm:$0xf] %vm505, %v471
      %537 = vst.msk [vmem:[%s170 + $0x7c] sm:$0xf] %vm505, %v472
      %p538 = scmp.lt.s32.totalorder %s14, 1
      %s539 = scalar_select %p538, %s14, 1
      %s540 = smul.addr %s539, 32
      %s541 = smul.addr %s540, 4
      %s542 = scalar_lea.vmem %s3, %s541
      // Predicated region
      $region33: #{dis_block.5} parent=31 // pred_check
        %p543 = pneg %p100
      $region34: #{dis_block.5} parent=31 // pred_check_branch
        %545 = sbr.rel (%p543) target = $region36
      $region35: #{dis_block.5} parent=31 // pred_region
        _
      $region36: #{dis_block.5} parent=31 // pred_fallthru
        _
    $region32: #{dis_block.5} parent=5 // pred_fallthru
      _
    %p546 = scmp.le.s32.totalorder 2, %s9
    // Predicated region
    $region37: #{dis_block.5} parent=5 // pred_check
      %p547 = pneg %p546
    $region38: #{dis_block.5} parent=5 // pred_check_branch
      %549 = sbr.rel (%p547) target = $region40
    $region39: #{dis_block.5} parent=5 // pred_region
      %s550 = ssub.s32 %s9, 2
      // Predicated region
      $region41: #{dis_block.5} parent=39 // pred_check
        %p551 = pneg %p106
      $region42: #{dis_block.5} parent=39 // pred_check_branch
        %553 = sbr.rel (%p551) target = $region44
      $region43: #{dis_block.5} parent=39 // pred_region
        %p554 = scmp.lt.s32.totalorder %s15, 1
        %s555 = scalar_select %p554, %s15, 1
        %s556 = smul.addr %s555, 32
        %s557 = smul.addr %s556, 4
        %s558 = scalar_lea.vmem %s3, %s557
      $region44: #{dis_block.5} parent=39 // pred_fallthru
        _
    $region40: #{dis_block.5} parent=5 // pred_fallthru
      _
  $region6: #{dis_block.5} parent=0 // loop_footer
    %s13 = sadd.s32 1, %s9
  $region7: #{dis_block.5} parent=0 // loop_footer_branch
    %8 = sbr.rel target = $region3
  $region8: #{dis_block.5} parent=0 // loop_exit
    _

// kernel: dis_block.7
$region0: #{dis_block.7}
  #allocation0 [shape = 'u32[]', space=smem, size = 0x4, offset = 0x4, fixed_abs, tag = 'smem constant byte address 0x4 - core index']
  #allocation1 [shape = 'u32[144,128]{1,0:T(1,128)}', space=vmem, size = 0x12000, scoped, tag = 'internal scratch']
  %s0 = inlined_call_operand.vmem [shape: f32[2,64,8], index: 0, kind: input, shape index: {}]
  %s1 = inlined_call_operand.vmem [shape: f32[1,8], index: 1, kind: input, shape index: {}]
  %s2 = inlined_call_operand.vmem [shape: f32[1,8], index: 2, kind: input, shape index: {}]
  %s3 = inlined_call_operand.vmem [shape: f32[2,64,8], index: 3, kind: output, shape index: {}]
  %s4 = sld [smem:[#allocation0]]
  $region45: #{dis_block.7} parent=0
    _
  %s6 = ssub.s32 1, %s4
  %s7 = scalar_select 0, %s6, %s4
  loop: start=0, step=1, limit=4
  $region2: #{dis_block.7} parent=0 // loop_pre_header
    _
  $region3: #{dis_block.7} parent=0 // loop_header
    %s9 = sphi 0, %s13
    %p10 = scmp.ge.s32.totalorder %s9, 4
    %s19 = sphi 0, %s21
    %s22 = sphi 0, %s19
    %s23 = sphi 0, %s22
    %s39 = sphi 0, %s23
    %s43 = sphi 0, %s43
    %s45 = sphi 0, %s43
    %s46 = sphi 0, %s45
    %s60 = sphi 0, %s46
    %s64 = sphi 0, %s64
    %s66 = sphi 0, %s64
    %s67 = sphi 0, %s66
    %s81 = sphi 0, %s67
    %s87 = sphi 0, %s89
    %s90 = sphi 0, %s87
    %s91 = sphi 0, %s90
    %s107 = sphi 0, %s91
  $region4: #{dis_block.7} parent=0 // loop_header_branch
    %12 = sbr.rel (%p10) target = $region8
  $region5: #{dis_block.7} parent=0 // loop_body
    %s14 = ssub.s32 %s9, 1
    %s15 = ssub.s32 %s9, 2
    %s16 = sadd.s32 %s9, 1
    %s17 = ssub.s32 %s9, %s16
    %p18 = scmp.eq.s32.totalorder %s17, 0
    %s20 = sadd.s32 %s19, 1
    %s21 = scalar_select %p18, %s19, %s20
    %p24 = pneg %p18
    %p25 = scmp.eq.s32.totalorder %s9, 1
    %p26 = por %p24, %p25
    %p27 = scmp.ne.s32.totalorder %s19, %s22
    %p28 = scmp.eq.s32.totalorder %s9, 0
    %p29 = por %p27, %p28
    %p30 = scmp.ne.s32.totalorder %s19, %s22
    %p31 = scmp.eq.s32.totalorder %s14, 1
    %p32 = por %p30, %p31
    %p33 = scmp.ne.s32.totalorder %s22, %s23
    %p34 = scmp.eq.s32.totalorder %s14, 0
    %p35 = por %p33, %p34
    %p36 = scmp.ne.s32.totalorder %s22, %s23
    %p37 = scmp.eq.s32.totalorder %s15, 1
    %p38 = por %p36, %p37
    %p40 = scmp.ne.s32.totalorder %s23, %s39
    %p41 = scmp.eq.s32.totalorder %s15, 0
    %p42 = por %p40, %p41
    %s44 = sadd.s32 %s43, 1
    %p47 = scmp.eq.s32.totalorder %s9, 1
    %p48 = scmp.ne.s32.totalorder %s43, %s45
    %p49 = scmp.eq.s32.totalorder %s9, 0
    %p50 = por %p48, %p49
    %p51 = scmp.ne.s32.totalorder %s43, %s45
    %p52 = scmp.eq.s32.totalorder %s14, 1
    %p53 = por %p51, %p52
    %p54 = scmp.ne.s32.totalorder %s45, %s46
    %p55 = scmp.eq.s32.totalorder %s14, 0
    %p56 = por %p54, %p55
    %p57 = scmp.ne.s32.totalorder %s45, %s46
    %p58 = scmp.eq.s32.totalorder %s15, 1
    %p59 = por %p57, %p58
    %p61 = scmp.ne.s32.totalorder %s46, %s60
    %p62 = scmp.eq.s32.totalorder %s15, 0
    %p63 = por %p61, %p62
    %s65 = sadd.s32 %s64, 1
    %p68 = scmp.eq.s32.totalorder %s9, 1
    %p69 = scmp.ne.s32.totalorder %s64, %s66
    %p70 = scmp.eq.s32.totalorder %s9, 0
    %p71 = por %p69, %p70
    %p72 = scmp.ne.s32.totalorder %s64, %s66
    %p73 = scmp.eq.s32.totalorder %s14, 1
    %p74 = por %p72, %p73
    %p75 = scmp.ne.s32.totalorder %s66, %s67
    %p76 = scmp.eq.s32.totalorder %s14, 0
    %p77 = por %p75, %p76
    %p78 = scmp.ne.s32.totalorder %s66, %s67
    %p79 = scmp.eq.s32.totalorder %s15, 1
    %p80 = por %p78, %p79
    %p82 = scmp.ne.s32.totalorder %s67, %s81
    %p83 = scmp.eq.s32.totalorder %s15, 0
    %p84 = por %p82, %p83
    %s85 = ssub.s32 %s9, %s16
    %p86 = scmp.eq.s32.totalorder %s85, 0
    %s88 = sadd.s32 %s87, 1
    %s89 = scalar_select %p86, %s87, %s88
    %p92 = pneg %p86
    %p93 = scmp.eq.s32.totalorder %s9, 1
    %p94 = por %p92, %p93
    %p95 = scmp.ne.s32.totalorder %s87, %s90
    %p96 = scmp.eq.s32.totalorder %s9, 0
    %p97 = por %p95, %p96
    %p98 = scmp.ne.s32.totalorder %s87, %s90
    %p99 = scmp.eq.s32.totalorder %s14, 1
    %p100 = por %p98, %p99
    %p101 = scmp.ne.s32.totalorder %s90, %s91
    %p102 = scmp.eq.s32.totalorder %s14, 0
    %p103 = por %p101, %p102
    %p104 = scmp.ne.s32.totalorder %s90, %s91
    %p105 = scmp.eq.s32.totalorder %s15, 1
    %p106 = por %p104, %p105
    %p108 = scmp.ne.s32.totalorder %s91, %s107
    %p109 = scmp.eq.s32.totalorder %s15, 0
    %p110 = por %p108, %p109
    %p111 = scmp.le.s32.totalorder 1, %s9
    %p112 = scmp.lt.s32.totalorder %s9, 3
    %p113 = pnand %p111, %p112
    %p114 = pneg %p113
    // Predicated region
    $region9: #{dis_block.7} parent=5 // pred_check
      _
    $region10: #{dis_block.7} parent=5 // pred_check_branch
      %116 = sbr.rel (%p113) target = $region12
    $region11: #{dis_block.7} parent=5 // pred_region
      %s117 = ssub.s32 %s9, 1
      // Predicated region
      $region13: #{dis_block.7} parent=11 // pred_check
        %p118 = pneg %p56
      $region14: #{dis_block.7} parent=11 // pred_check_branch
        %120 = sbr.rel (%p118) target = $region16
      $region15: #{dis_block.7} parent=11 // pred_region
        _
      $region16: #{dis_block.7} parent=11 // pred_fallthru
        _
      // Predicated region
      $region17: #{dis_block.7} parent=11 // pred_check
        %p121 = pneg %p77
      $region18: #{dis_block.7} parent=11 // pred_check_branch
        %123 = sbr.rel (%p121) target = $region20
      $region19: #{dis_block.7} parent=11 // pred_region
        _
      $region20: #{dis_block.7} parent=11 // pred_fallthru
        _
    $region12: #{dis_block.7} parent=5 // pred_fallthru
      _
    %p124 = scmp.lt.s32.totalorder %s9, 2
    // Predicated region
    $region21: #{dis_block.7} parent=5 // pred_check
      %p125 = pneg %p124
    $region22: #{dis_block.7} parent=5 // pred_check_branch
      %127 = sbr.rel (%p125) target = $region24
    $region23: #{dis_block.7} parent=5 // pred_region
      // Predicated region
      $region25: #{dis_block.7} parent=23 // pred_check
        %p128 = pneg %p29
      $region26: #{dis_block.7} parent=23 // pred_check_branch
        %130 = sbr.rel (%p128) target = $region28
      $region27: #{dis_block.7} parent=23 // pred_region
        %p131 = scmp.lt.s32.totalorder %s9, 1
        %s132 = scalar_select %p131, %s9, 1
        %s133 = smul.addr %s132, 8
        %s134 = smul.addr %s133, 8
        %s135 = scalar_lea.vmem %s0, %s134
      $region28: #{dis_block.7} parent=23 // pred_fallthru
        _
    $region24: #{dis_block.7} parent=5 // pred_fallthru
      _
    %p136 = scmp.le.s32.totalorder 1, %s9
    %p137 = scmp.lt.s32.totalorder %s9, 3
    %p138 = pnand %p136, %p137
    %p139 = pneg %p138
    // Predicated region
    $region29: #{dis_block.7} parent=5 // pred_check
      _
    $region30: #{dis_block.7} parent=5 // pred_check_branch
      %141 = sbr.rel (%p138) target = $region32
    $region31: #{dis_block.7} parent=5 // pred_region
      %s142 = ssub.s32 %s9, 1
      %p143 = scmp.lt.s32.totalorder %s14, 1
      %s144 = scalar_select %p143, %s14, 1
      %s145 = smul.addr %s144, 8
      %s146 = smul.addr %s145, 8
      %s147 = scalar_lea.vmem %s0, %s146
      %p148 = pneg %p35
      %p149 = pneg %p32
      %p150 = pneg %p56
      %p151 = pneg %p53
      %p152 = pneg %p77
      %p153 = pneg %p74
      %p154 = pneg %p103
      %p155 = pneg %p100
      %p156 = scmp.lt.s32.totalorder %s14, 1
      %s157 = scalar_select %p156, %s14, 1
      %s158 = smul.addr %s157, 8
      %s159 = smul.addr %s158, 8
      %s160 = scalar_lea.vmem %s3, %s159
      %p161 = scmp.lt.s32.totalorder %s14, 1
      %s162 = scalar_select %p161, %s14, 1
      %s163 = smul.addr %s162, 8
      %s164 = smul.addr %s163, 8
      %s165 = scalar_lea.vmem %s0, %s164
      %p166 = scmp.lt.s32.totalorder %s14, 1
      %s167 = scalar_select %p166, %s14, 1
      %s168 = smul.addr %s167, 8
      %s169 = smul.addr %s168, 8
      %s170 = scalar_lea.vmem %s3, %s169
      %v171 = vld [vmem:[%s165] sm:$0xff]
      %v172 = vld [vmem:[%s165 + $0x8] sm:$0xff]
      %v173 = vld [vmem:[%s165 + $0x10] sm:$0xff]
      %v174 = vld [vmem:[%s165 + $0x18] sm:$0xff]
      %v175 = vld [vmem:[%s165 + $0x20] sm:$0xff]
      %v176 = vld [vmem:[%s165 + $0x28] sm:$0xff]
      %v177 = vld [vmem:[%s165 + $0x30] sm:$0xff]
      %v178 = vld [vmem:[%s165 + $0x38] sm:$0xff]
      %v179 = vld [vmem:[%s1] sm:$0x1]
      %v181 = vlaneseq
      %v182 = vshrl.u32 %v181, 7
      %v183 = vsub.s32 0, %v182
      %v184 = vrot.slane %v179, %v183
      %v186 = vmul.f32 %v171, %v184
      %v187 = vmul.f32 %v172, %v184
      %v188 = vmul.f32 %v173, %v184
      %v189 = vmul.f32 %v174, %v184
      %v190 = vmul.f32 %v175, %v184
      %v191 = vmul.f32 %v176, %v184
      %v192 = vmul.f32 %v177, %v184
      %v193 = vmul.f32 %v178, %v184
      %v194 = vld [vmem:[%s2] sm:$0x1]
      %v196 = vlaneseq
      %v197 = vshrl.u32 %v196, 7
      %v198 = vsub.s32 0, %v197
      %v199 = vrot.slane %v194, %v198
      %v201 = vadd.f32 %v186, %v199
      %v202 = vadd.f32 %v187, %v199
      %v203 = vadd.f32 %v188, %v199
      %v204 = vadd.f32 %v189, %v199
      %v205 = vadd.f32 %v190, %v199
      %v206 = vadd.f32 %v191, %v199
      %v207 = vadd.f32 %v192, %v199
      %v208 = vadd.f32 %v193, %v199
      %vm209 = vcmp.gt.f32.partialorder %v201, 0.0
      %vm210 = vcmp.gt.f32.partialorder %v202, 0.0
      %vm211 = vcmp.gt.f32.partialorder %v203, 0.0
      %vm212 = vcmp.gt.f32.partialorder %v204, 0.0
      %vm213 = vcmp.gt.f32.partialorder %v205, 0.0
      %vm214 = vcmp.gt.f32.partialorder %v206, 0.0
      %vm215 = vcmp.gt.f32.partialorder %v207, 0.0
      %vm216 = vcmp.gt.f32.partialorder %v208, 0.0
      %v217 = vmul.f32 %v201, 0.2
      %v218 = vmul.f32 %v202, 0.2
      %v219 = vmul.f32 %v203, 0.2
      %v220 = vmul.f32 %v204, 0.2
      %v221 = vmul.f32 %v205, 0.2
      %v222 = vmul.f32 %v206, 0.2
      %v223 = vmul.f32 %v207, 0.2
      %v224 = vmul.f32 %v208, 0.2
      %v225 = vsel %vm209, %v201, %v217
      %v226 = vsel %vm210, %v202, %v218
      %v227 = vsel %vm211, %v203, %v219
      %v228 = vsel %vm212, %v204, %v220
      %v229 = vsel %vm213, %v205, %v221
      %v230 = vsel %vm214, %v206, %v222
      %v231 = vsel %vm215, %v207, %v223
      %v232 = vsel %vm216, %v208, %v224
      %vm233 = vcmask 64512
      %234 = vst.msk [vmem:[%s170] sm:$0xff] %vm233, %v225
      %235 = vst.msk [vmem:[%s170 + $0x8] sm:$0xff] %vm233, %v226
      %236 = vst.msk [vmem:[%s170 + $0x10] sm:$0xff] %vm233, %v227
      %237 = vst.msk [vmem:[%s170 + $0x18] sm:$0xff] %vm233, %v228
      %238 = vst.msk [vmem:[%s170 + $0x20] sm:$0xff] %vm233, %v229
      %239 = vst.msk [vmem:[%s170 + $0x28] sm:$0xff] %vm233, %v230
      %240 = vst.msk [vmem:[%s170 + $0x30] sm:$0xff] %vm233, %v231
      %241 = vst.msk [vmem:[%s170 + $0x38] sm:$0xff] %vm233, %v232
      %p242 = scmp.lt.s32.totalorder %s14, 1
      %s243 = scalar_select %p242, %s14, 1
      %s244 = smul.addr %s243, 8
      %s245 = smul.addr %s244, 8
      %s246 = scalar_lea.vmem %s3, %s245
      // Predicated region
      $region33: #{dis_block.7} parent=31 // pred_check
        %p247 = pneg %p100
      $region34: #{dis_block.7} parent=31 // pred_check_branch
        %249 = sbr.rel (%p247) target = $region36
      $region35: #{dis_block.7} parent=31 // pred_region
        _
      $region36: #{dis_block.7} parent=31 // pred_fallthru
        _
    $region32: #{dis_block.7} parent=5 // pred_fallthru
      _
    %p250 = scmp.le.s32.totalorder 2, %s9
    // Predicated region
    $region37: #{dis_block.7} parent=5 // pred_check
      %p251 = pneg %p250
    $region38: #{dis_block.7} parent=5 // pred_check_branch
      %253 = sbr.rel (%p251) target = $region40
    $region39: #{dis_block.7} parent=5 // pred_region
      %s254 = ssub.s32 %s9, 2
      // Predicated region
      $region41: #{dis_block.7} parent=39 // pred_check
        %p255 = pneg %p106
      $region42: #{dis_block.7} parent=39 // pred_check_branch
        %257 = sbr.rel (%p255) target = $region44
      $region43: #{dis_block.7} parent=39 // pred_region
        %p258 = scmp.lt.s32.totalorder %s15, 1
        %s259 = scalar_select %p258, %s15, 1
        %s260 = smul.addr %s259, 8
        %s261 = smul.addr %s260, 8
        %s262 = scalar_lea.vmem %s3, %s261
      $region44: #{dis_block.7} parent=39 // pred_fallthru
        _
    $region40: #{dis_block.7} parent=5 // pred_fallthru
      _
  $region6: #{dis_block.7} parent=0 // loop_footer
    %s13 = sadd.s32 1, %s9
  $region7: #{dis_block.7} parent=0 // loop_footer_branch
    %8 = sbr.rel target = $region3
  $region8: #{dis_block.7} parent=0 // loop_exit
    _

// kernel: dis_block.6
$region0: #{dis_block.6}
  #allocation0 [shape = 'u32[]', space=smem, size = 0x4, offset = 0x4, fixed_abs, tag = 'smem constant byte address 0x4 - core index']
  #allocation1 [shape = 'u32[144,128]{1,0:T(1,128)}', space=vmem, size = 0x12000, scoped, tag = 'internal scratch']
  #allocation2 [shape = 'bf16[8,8,36]{2,1,0:T(8,128)(2,1)}', space=vmem, size = 0x4000, scoped, tag = 'scratch operand']
  %s0 = inlined_call_operand.vmem [shape: bf16[2,36,9,4], index: 0, kind: input, shape index: {}]
  %s1 = inlined_call_operand.vmem [shape: bf16[36,8], index: 1, kind: input, shape index: {}]
  %s2 = inlined_call_operand.vmem [shape: f32[2,64,8], index: 2, kind: output, shape index: {0}]
  %s3 = inlined_call_operand.vmem [shape: f32[2,2,8], index: 3, kind: output, shape index: {1}]
  %4 = xla_tuple %s2, %s3
  %s5 = sld [smem:[#allocation0]]
  $region49: #{dis_block.6} parent=0
    _
  %s7 = ssub.s32 1, %s5
  %s8 = scalar_select 0, %s7, %s5
  loop: start=0, step=1, limit=4
  $region2: #{dis_block.6} parent=0 // loop_pre_header
    _
  $region3: #{dis_block.6} parent=0 // loop_header
    %s10 = sphi 0, %s14
    %p11 = scmp.ge.s32.totalorder %s10, 4
    %s20 = sphi 0, %s22
    %s23 = sphi 0, %s20
    %s24 = sphi 0, %s23
    %s40 = sphi 0, %s24
    %s44 = sphi 0, %s44
    %s46 = sphi 0, %s44
    %s47 = sphi 0, %s46
    %s61 = sphi 0, %s47
    %s67 = sphi 0, %s69
    %s70 = sphi 0, %s67
    %s71 = sphi 0, %s70
    %s87 = sphi 0, %s71
    %s93 = sphi 0, %s95
    %s96 = sphi 0, %s93
    %s97 = sphi 0, %s96
    %s113 = sphi 0, %s97
  $region4: #{dis_block.6} parent=0 // loop_header_branch
    %13 = sbr.rel (%p11) target = $region8
  $region5: #{dis_block.6} parent=0 // loop_body
    %s15 = ssub.s32 %s10, 1
    %s16 = ssub.s32 %s10, 2
    %s17 = sadd.s32 %s10, 1
    %s18 = ssub.s32 %s10, %s17
    %p19 = scmp.eq.s32.totalorder %s18, 0
    %s21 = sadd.s32 %s20, 1
    %s22 = scalar_select %p19, %s20, %s21
    %p25 = pneg %p19
    %p26 = scmp.eq.s32.totalorder %s10, 1
    %p27 = por %p25, %p26
    %p28 = scmp.ne.s32.totalorder %s20, %s23
    %p29 = scmp.eq.s32.totalorder %s10, 0
    %p30 = por %p28, %p29
    %p31 = scmp.ne.s32.totalorder %s20, %s23
    %p32 = scmp.eq.s32.totalorder %s15, 1
    %p33 = por %p31, %p32
    %p34 = scmp.ne.s32.totalorder %s23, %s24
    %p35 = scmp.eq.s32.totalorder %s15, 0
    %p36 = por %p34, %p35
    %p37 = scmp.ne.s32.totalorder %s23, %s24
    %p38 = scmp.eq.s32.totalorder %s16, 1
    %p39 = por %p37, %p38
    %p41 = scmp.ne.s32.totalorder %s24, %s40
    %p42 = scmp.eq.s32.totalorder %s16, 0
    %p43 = por %p41, %p42
    %s45 = sadd.s32 %s44, 1
    %p48 = scmp.eq.s32.totalorder %s10, 1
    %p49 = scmp.ne.s32.totalorder %s44, %s46
    %p50 = scmp.eq.s32.totalorder %s10, 0
    %p51 = por %p49, %p50
    %p52 = scmp.ne.s32.totalorder %s44, %s46
    %p53 = scmp.eq.s32.totalorder %s15, 1
    %p54 = por %p52, %p53
    %p55 = scmp.ne.s32.totalorder %s46, %s47
    %p56 = scmp.eq.s32.totalorder %s15, 0
    %p57 = por %p55, %p56
    %p58 = scmp.ne.s32.totalorder %s46, %s47
    %p59 = scmp.eq.s32.totalorder %s16, 1
    %p60 = por %p58, %p59
    %p62 = scmp.ne.s32.totalorder %s47, %s61
    %p63 = scmp.eq.s32.totalorder %s16, 0
    %p64 = por %p62, %p63
    %s65 = ssub.s32 %s10, %s17
    %p66 = scmp.eq.s32.totalorder %s65, 0
    %s68 = sadd.s32 %s67, 1
    %s69 = scalar_select %p66, %s67, %s68
    %p72 = pneg %p66
    %p73 = scmp.eq.s32.totalorder %s10, 1
    %p74 = por %p72, %p73
    %p75 = scmp.ne.s32.totalorder %s67, %s70
    %p76 = scmp.eq.s32.totalorder %s10, 0
    %p77 = por %p75, %p76
    %p78 = scmp.ne.s32.totalorder %s67, %s70
    %p79 = scmp.eq.s32.totalorder %s15, 1
    %p80 = por %p78, %p79
    %p81 = scmp.ne.s32.totalorder %s70, %s71
    %p82 = scmp.eq.s32.totalorder %s15, 0
    %p83 = por %p81, %p82
    %p84 = scmp.ne.s32.totalorder %s70, %s71
    %p85 = scmp.eq.s32.totalorder %s16, 1
    %p86 = por %p84, %p85
    %p88 = scmp.ne.s32.totalorder %s71, %s87
    %p89 = scmp.eq.s32.totalorder %s16, 0
    %p90 = por %p88, %p89
    %s91 = ssub.s32 %s10, %s17
    %p92 = scmp.eq.s32.totalorder %s91, 0
    %s94 = sadd.s32 %s93, 1
    %s95 = scalar_select %p92, %s93, %s94
    %p98 = pneg %p92
    %p99 = scmp.eq.s32.totalorder %s10, 1
    %p100 = por %p98, %p99
    %p101 = scmp.ne.s32.totalorder %s93, %s96
    %p102 = scmp.eq.s32.totalorder %s10, 0
    %p103 = por %p101, %p102
    %p104 = scmp.ne.s32.totalorder %s93, %s96
    %p105 = scmp.eq.s32.totalorder %s15, 1
    %p106 = por %p104, %p105
    %p107 = scmp.ne.s32.totalorder %s96, %s97
    %p108 = scmp.eq.s32.totalorder %s15, 0
    %p109 = por %p107, %p108
    %p110 = scmp.ne.s32.totalorder %s96, %s97
    %p111 = scmp.eq.s32.totalorder %s16, 1
    %p112 = por %p110, %p111
    %p114 = scmp.ne.s32.totalorder %s97, %s113
    %p115 = scmp.eq.s32.totalorder %s16, 0
    %p116 = por %p114, %p115
    %p117 = scmp.le.s32.totalorder 1, %s10
    %p118 = scmp.lt.s32.totalorder %s10, 3
    %p119 = pnand %p117, %p118
    %p120 = pneg %p119
    // Predicated region
    $region9: #{dis_block.6} parent=5 // pred_check
      _
    $region10: #{dis_block.6} parent=5 // pred_check_branch
      %122 = sbr.rel (%p119) target = $region12
    $region11: #{dis_block.6} parent=5 // pred_region
      %s123 = ssub.s32 %s10, 1
      // Predicated region
      $region13: #{dis_block.6} parent=11 // pred_check
        %p124 = pneg %p57
      $region14: #{dis_block.6} parent=11 // pred_check_branch
        %126 = sbr.rel (%p124) target = $region16
      $region15: #{dis_block.6} parent=11 // pred_region
        _
      $region16: #{dis_block.6} parent=11 // pred_fallthru
        _
    $region12: #{dis_block.6} parent=5 // pred_fallthru
      _
    %p127 = scmp.lt.s32.totalorder %s10, 2
    // Predicated region
    $region17: #{dis_block.6} parent=5 // pred_check
      %p128 = pneg %p127
    $region18: #{dis_block.6} parent=5 // pred_check_branch
      %130 = sbr.rel (%p128) target = $region20
    $region19: #{dis_block.6} parent=5 // pred_region
      // Predicated region
      $region21: #{dis_block.6} parent=19 // pred_check
        %p131 = pneg %p30
      $region22: #{dis_block.6} parent=19 // pred_check_branch
        %133 = sbr.rel (%p131) target = $region24
      $region23: #{dis_block.6} parent=19 // pred_region
        %p134 = scmp.lt.s32.totalorder %s10, 1
        %s135 = scalar_select %p134, %s10, 1
        %s136 = smul.addr %s135, 72
        %s137 = smul.addr %s136, 4
        %s138 = scalar_lea.vmem %s0, %s137
      $region24: #{dis_block.6} parent=19 // pred_fallthru
        _
    $region20: #{dis_block.6} parent=5 // pred_fallthru
      _
    %p139 = scmp.le.s32.totalorder 1, %s10
    %p140 = scmp.lt.s32.totalorder %s10, 3
    %p141 = pnand %p139, %p140
    %p142 = pneg %p141
    // Predicated region
    $region25: #{dis_block.6} parent=5 // pred_check
      _
    $region26: #{dis_block.6} parent=5 // pred_check_branch
      %144 = sbr.rel (%p141) target = $region28
    $region27: #{dis_block.6} parent=5 // pred_region
      %s145 = ssub.s32 %s10, 1
      %p146 = scmp.lt.s32.totalorder %s15, 1
      %s147 = scalar_select %p146, %s15, 1
      %s148 = smul.addr %s147, 72
      %s149 = smul.addr %s148, 4
      %s150 = scalar_lea.vmem %s0, %s149
      %p151 = pneg %p36
      %p152 = pneg %p33
      %p153 = pneg %p57
      %p154 = pneg %p54
      %p155 = pneg %p83
      %p156 = pneg %p80
      %p157 = scmp.lt.s32.totalorder %s15, 1
      %s158 = scalar_select %p157, %s15, 1
      %s159 = smul.addr %s158, 8
      %s160 = smul.addr %s159, 8
      %s161 = scalar_lea.vmem %s2, %s160
      %p162 = pneg %p109
      %p163 = pneg %p106
      %p164 = scmp.lt.s32.totalorder %s15, 1
      %s165 = scalar_select %p164, %s15, 1
      %s166 = smul.addr %s165, 2
      %s167 = scalar_lea.vmem %s3, %s166
      %p168 = scmp.lt.s32.totalorder %s15, 1
      %s169 = scalar_select %p168, %s15, 1
      %s170 = smul.addr %s169, 72
      %s171 = smul.addr %s170, 4
      %s172 = scalar_lea.vmem %s0, %s171
      %p173 = scmp.lt.s32.totalorder %s15, 1
      %s174 = scalar_select %p173, %s15, 1
      %s175 = smul.addr %s174, 8
      %s176 = smul.addr %s175, 8
      %s177 = scalar_lea.vmem %s2, %s176
      %p178 = scmp.lt.s32.totalorder %s15, 1
      %s179 = scalar_select %p178, %s15, 1
      %s180 = smul.addr %s179, 2
      %s181 = scalar_lea.vmem %s3, %s180
      %v183 = vld [vmem:[%s172] sm:$0xf]
      %v184 = vld [vmem:[%s172 + $0x8] sm:$0xf]
      %v185 = vld [vmem:[%s172 + $0x10] sm:$0xf]
      %v186 = vld [vmem:[%s172 + $0x18] sm:$0xf]
      %v187 = vld [vmem:[%s172 + $0x20] sm:$0xf]
      %v188 = vld [vmem:[%s172 + $0x28] sm:$0xf]
      %v189 = vld [vmem:[%s172 + $0x30] sm:$0xf]
      %v190 = vld [vmem:[%s172 + $0x38] sm:$0xf]
      %vm191 = vcmask 27648
      %192 = vst.msk [vmem:[#allocation2] sm:$0xf] %vm191, %v183
      %193 = vst.msk [vmem:[#allocation2 + $0x4] sm:$0xf] %vm191, %v184
      %194 = vst.msk [vmem:[#allocation2 + $0x8] sm:$0xf] %vm191, %v185
      %195 = vst.msk [vmem:[#allocation2 + $0xc] sm:$0xf] %vm191, %v186
      %196 = vst.msk [vmem:[#allocation2 + $0x10] sm:$0xf] %vm191, %v187
      %197 = vst.msk [vmem:[#allocation2 + $0x14] sm:$0xf] %vm191, %v188
      %198 = vst.msk [vmem:[#allocation2 + $0x18] sm:$0xf] %vm191, %v189
      %199 = vst.msk [vmem:[#allocation2 + $0x1c] sm:$0xf] %vm191, %v190
      %s200 = scalar_lea.vmem %s172, 72
      %v201 = vld [vmem:[%s200] sm:$0xf]
      %v202 = vld [vmem:[%s200 + $0x8] sm:$0xf]
      %v203 = vld [vmem:[%s200 + $0x10] sm:$0xf]
      %v204 = vld [vmem:[%s200 + $0x18] sm:$0xf]
      %v205 = vld [vmem:[%s200 + $0x20] sm:$0xf]
      %v206 = vld [vmem:[%s200 + $0x28] sm:$0xf]
      %v207 = vld [vmem:[%s200 + $0x30] sm:$0xf]
      %v208 = vld [vmem:[%s200 + $0x38] sm:$0xf]
      %217 = vrot.lane.b32.xlu0 %v201, 4
      %v218 = vpop.permute.xlu0 %217
      %219 = vrot.lane.b32.xlu0 %v202, 4
      %v220 = vpop.permute.xlu0 %219
      %221 = vrot.lane.b32.xlu0 %v203, 4
      %v222 = vpop.permute.xlu0 %221
      %223 = vrot.lane.b32.xlu0 %v204, 4
      %v224 = vpop.permute.xlu0 %223
      %225 = vrot.lane.b32.xlu0 %v205, 4
      %v226 = vpop.permute.xlu0 %225
      %227 = vrot.lane.b32.xlu0 %v206, 4
      %v228 = vpop.permute.xlu0 %227
      %229 = vrot.lane.b32.xlu0 %v207, 4
      %v230 = vpop.permute.xlu0 %229
      %231 = vrot.lane.b32.xlu0 %v208, 4
      %v232 = vpop.permute.xlu0 %231
      %vm241 = vcmask 60448
      %242 = vst.msk [vmem:[#allocation2] sm:$0xf] %vm241, %v218
      %243 = vst.msk [vmem:[#allocation2 + $0x4] sm:$0xf] %vm241, %v220
      %244 = vst.msk [vmem:[#allocation2 + $0x8] sm:$0xf] %vm241, %v222
      %245 = vst.msk [vmem:[#allocation2 + $0xc] sm:$0xf] %vm241, %v224
      %246 = vst.msk [vmem:[#allocation2 + $0x10] sm:$0xf] %vm241, %v226
      %247 = vst.msk [vmem:[#allocation2 + $0x14] sm:$0xf] %vm241, %v228
      %248 = vst.msk [vmem:[#allocation2 + $0x18] sm:$0xf] %vm241, %v230
      %249 = vst.msk [vmem:[#allocation2 + $0x1c] sm:$0xf] %vm241, %v232
      %v250 = vld [vmem:[%s172] sm:$0xf]
      %v251 = vld [vmem:[%s172 + $0x4] sm:$0x1]
      %v252 = vld [vmem:[%s172 + $0x8] sm:$0xf]
      %v253 = vld [vmem:[%s172 + $0xc] sm:$0x1]
      %v254 = vld [vmem:[%s172 + $0x10] sm:$0xf]
      %v255 = vld [vmem:[%s172 + $0x14] sm:$0x1]
      %v256 = vld [vmem:[%s172 + $0x18] sm:$0xf]
      %v257 = vld [vmem:[%s172 + $0x1c] sm:$0x1]
      %v258 = vld [vmem:[%s172 + $0x20] sm:$0xf]
      %v259 = vld [vmem:[%s172 + $0x24] sm:$0x1]
      %v260 = vld [vmem:[%s172 + $0x28] sm:$0xf]
      %v261 = vld [vmem:[%s172 + $0x2c] sm:$0x1]
      %v262 = vld [vmem:[%s172 + $0x30] sm:$0xf]
      %v263 = vld [vmem:[%s172 + $0x34] sm:$0x1]
      %v264 = vld [vmem:[%s172 + $0x38] sm:$0xf]
      %v265 = vld [vmem:[%s172 + $0x3c] sm:$0x1]
      %vm266 = vsmask.f32 3328
      %vm267 = vsmask.f32 7440
      %vm268 = vmor %vm266, %vm267
      %v270 = vshrl.u32 %v250, 16
      %v272 = vrot.slane %v270, 4
      %v273 = vshll.u32 %v250, 16
      %v275 = vrot.slane %v273, 5
      %v276 = vor.u32 %v272, %v275
      %v277 = vrot.slane %v276, 4
      %v279 = vshll.u32 %v251, 16
      %v281 = vrot.slane %v279, 5
      %v282 = vsel %vm268, %v277, %v281
      %v284 = vshrl.u32 %v252, 16
      %v286 = vrot.slane %v284, 4
      %v287 = vshll.u32 %v252, 16
      %v289 = vrot.slane %v287, 5
      %v290 = vor.u32 %v286, %v289
      %v291 = vrot.slane %v290, 4
      %v293 = vshll.u32 %v253, 16
      %v295 = vrot.slane %v293, 5
      %v296 = vsel %vm268, %v291, %v295
      %v298 = vshrl.u32 %v254, 16
      %v300 = vrot.slane %v298, 4
      %v301 = vshll.u32 %v254, 16
      %v303 = vrot.slane %v301, 5
      %v304 = vor.u32 %v300, %v303
      %v305 = vrot.slane %v304, 4
      %v307 = vshll.u32 %v255, 16
      %v309 = vrot.slane %v307, 5
      %v310 = vsel %vm268, %v305, %v309
      %v312 = vshrl.u32 %v256, 16
      %v314 = vrot.slane %v312, 4
      %v315 = vshll.u32 %v256, 16
      %v317 = vrot.slane %v315, 5
      %v318 = vor.u32 %v314, %v317
      %v319 = vrot.slane %v318, 4
      %v321 = vshll.u32 %v257, 16
      %v323 = vrot.slane %v321, 5
      %v324 = vsel %vm268, %v319, %v323
      %v326 = vshrl.u32 %v258, 16
      %v328 = vrot.slane %v326, 4
      %v329 = vshll.u32 %v258, 16
      %v331 = vrot.slane %v329, 5
      %v332 = vor.u32 %v328, %v331
      %v333 = vrot.slane %v332, 4
      %v335 = vshll.u32 %v259, 16
      %v337 = vrot.slane %v335, 5
      %v338 = vsel %vm268, %v333, %v337
      %v340 = vshrl.u32 %v260, 16
      %v342 = vrot.slane %v340, 4
      %v343 = vshll.u32 %v260, 16
      %v345 = vrot.slane %v343, 5
      %v346 = vor.u32 %v342, %v345
      %v347 = vrot.slane %v346, 4
      %v349 = vshll.u32 %v261, 16
      %v351 = vrot.slane %v349, 5
      %v352 = vsel %vm268, %v347, %v351
      %v354 = vshrl.u32 %v262, 16
      %v356 = vrot.slane %v354, 4
      %v357 = vshll.u32 %v262, 16
      %v359 = vrot.slane %v357, 5
      %v360 = vor.u32 %v356, %v359
      %v361 = vrot.slane %v360, 4
      %v363 = vshll.u32 %v263, 16
      %v365 = vrot.slane %v363, 5
      %v366 = vsel %vm268, %v361, %v365
      %v368 = vshrl.u32 %v264, 16
      %v370 = vrot.slane %v368, 4
      %v371 = vshll.u32 %v264, 16
      %v373 = vrot.slane %v371, 5
      %v374 = vor.u32 %v370, %v373
      %v375 = vrot.slane %v374, 4
      %v377 = vshll.u32 %v265, 16
      %v379 = vrot.slane %v377, 5
      %v380 = vsel %vm268, %v375, %v379
      %381 = vrot.lane.b32.xlu0 %v282, 8
      %v382 = vpop.permute.xlu0 %381
      %383 = vrot.lane.b32.xlu0 %v296, 8
      %v384 = vpop.permute.xlu0 %383
      %385 = vrot.lane.b32.xlu0 %v310, 8
      %v386 = vpop.permute.xlu0 %385
      %387 = vrot.lane.b32.xlu0 %v324, 8
      %v388 = vpop.permute.xlu0 %387
      %389 = vrot.lane.b32.xlu0 %v338, 8
      %v390 = vpop.permute.xlu0 %389
      %391 = vrot.lane.b32.xlu0 %v352, 8
      %v392 = vpop.permute.xlu0 %391
      %393 = vrot.lane.b32.xlu0 %v366, 8
      %v394 = vpop.permute.xlu0 %393
      %395 = vrot.lane.b32.xlu0 %v380, 8
      %v396 = vpop.permute.xlu0 %395
      %vm405 = vcmask 93248
      %406 = vst.msk [vmem:[#allocation2] sm:$0xf] %vm405, %v382
      %407 = vst.msk [vmem:[#allocation2 + $0x4] sm:$0xf] %vm405, %v384
      %408 = vst.msk [vmem:[#allocation2 + $0x8] sm:$0xf] %vm405, %v386
      %409 = vst.msk [vmem:[#allocation2 + $0xc] sm:$0xf] %vm405, %v388
      %410 = vst.msk [vmem:[#allocation2 + $0x10] sm:$0xf] %vm405, %v390
      %411 = vst.msk [vmem:[#allocation2 + $0x14] sm:$0xf] %vm405, %v392
      %412 = vst.msk [vmem:[#allocation2 + $0x18] sm:$0xf] %vm405, %v394
      %413 = vst.msk [vmem:[#allocation2 + $0x1c] sm:$0xf] %vm405, %v396
      %s414 = scalar_lea.vmem %s172, 144
      %v415 = vld [vmem:[%s414] sm:$0xf]
      %v416 = vld [vmem:[%s414 + $0x8] sm:$0xf]
      %v417 = vld [vmem:[%s414 + $0x10] sm:$0xf]
      %v418 = vld [vmem:[%s414 + $0x18] sm:$0xf]
      %v419 = vld [vmem:[%s414 + $0x20] sm:$0xf]
      %v420 = vld [vmem:[%s414 + $0x28] sm:$0xf]
      %v421 = vld [vmem:[%s414 + $0x30] sm:$0xf]
      %v422 = vld [vmem:[%s414 + $0x38] sm:$0xf]
      %431 = vrot.lane.b32.xlu0 %v415, 12
      %v432 = vpop.permute.xlu0 %431
      %433 = vrot.lane.b32.xlu0 %v416, 12
      %v434 = vpop.permute.xlu0 %433
      %435 = vrot.lane.b32.xlu0 %v417, 12
      %v436 = vpop.permute.xlu0 %435
      %437 = vrot.lane.b32.xlu0 %v418, 12
      %v438 = vpop.permute.xlu0 %437
      %439 = vrot.lane.b32.xlu0 %v419, 12
      %v440 = vpop.permute.xlu0 %439
      %441 = vrot.lane.b32.xlu0 %v420, 12
      %v442 = vpop.permute.xlu0 %441
      %443 = vrot.lane.b32.xlu0 %v421, 12
      %v444 = vpop.permute.xlu0 %443
      %445 = vrot.lane.b32.xlu0 %v422, 12
      %v446 = vpop.permute.xlu0 %445
      %vm455 = vcmask 126048
      %456 = vst.msk [vmem:[#allocation2] sm:$0xf] %vm455, %v432
      %457 = vst.msk [vmem:[#allocation2 + $0x4] sm:$0xf] %vm455, %v434
      %458 = vst.msk [vmem:[#allocation2 + $0x8] sm:$0xf] %vm455, %v436
      %459 = vst.msk [vmem:[#allocation2 + $0xc] sm:$0xf] %vm455, %v438
      %460 = vst.msk [vmem:[#allocation2 + $0x10] sm:$0xf] %vm455, %v440
      %461 = vst.msk [vmem:[#allocation2 + $0x14] sm:$0xf] %vm455, %v442
      %462 = vst.msk [vmem:[#allocation2 + $0x18] sm:$0xf] %vm455, %v444
      %463 = vst.msk [vmem:[#allocation2 + $0x1c] sm:$0xf] %vm455, %v446
      %s464 = scalar_lea.vmem %s172, 216
      %v465 = vld [vmem:[%s464] sm:$0xf]
      %v466 = vld [vmem:[%s464 + $0x8] sm:$0xf]
      %v467 = vld [vmem:[%s464 + $0x10] sm:$0xf]
      %v468 = vld [vmem:[%s464 + $0x18] sm:$0xf]
      %v469 = vld [vmem:[%s464 + $0x20] sm:$0xf]
      %v470 = vld [vmem:[%s464 + $0x28] sm:$0xf]
      %v471 = vld [vmem:[%s464 + $0x30] sm:$0xf]
      %v472 = vld [vmem:[%s464 + $0x38] sm:$0xf]
      %481 = vrot.lane.b32.xlu0 %v465, 16
      %v482 = vpop.permute.xlu0 %481
      %483 = vrot.lane.b32.xlu0 %v466, 16
      %v484 = vpop.permute.xlu0 %483
      %485 = vrot.lane.b32.xlu0 %v467, 16
      %v486 = vpop.permute.xlu0 %485
      %487 = vrot.lane.b32.xlu0 %v468, 16
      %v488 = vpop.permute.xlu0 %487
      %489 = vrot.lane.b32.xlu0 %v469, 16
      %v490 = vpop.permute.xlu0 %489
      %491 = vrot.lane.b32.xlu0 %v470, 16
      %v492 = vpop.permute.xlu0 %491
      %493 = vrot.lane.b32.xlu0 %v471, 16
      %v494 = vpop.permute.xlu0 %493
      %495 = vrot.lane.b32.xlu0 %v472, 16
      %v496 = vpop.permute.xlu0 %495
      %vm505 = vcmask 158848
      %506 = vst.msk [vmem:[#allocation2] sm:$0xf] %vm505, %v482
      %507 = vst.msk [vmem:[#allocation2 + $0x4] sm:$0xf] %vm505, %v484
      %508 = vst.msk [vmem:[#allocation2 + $0x8] sm:$0xf] %vm505, %v486
      %509 = vst.msk [vmem:[#allocation2 + $0xc] sm:$0xf] %vm505, %v488
      %510 = vst.msk [vmem:[#allocation2 + $0x10] sm:$0xf] %vm505, %v490
      %511 = vst.msk [vmem:[#allocation2 + $0x14] sm:$0xf] %vm505, %v492
      %512 = vst.msk [vmem:[#allocation2 + $0x18] sm:$0xf] %vm505, %v494
      %513 = vst.msk [vmem:[#allocation2 + $0x1c] sm:$0xf] %vm505, %v496
      %v514 = vld [vmem:[%s414] sm:$0xf]
      %v515 = vld [vmem:[%s414 + $0x4] sm:$0x1]
      %v516 = vld [vmem:[%s414 + $0x8] sm:$0xf]
      %v517 = vld [vmem:[%s414 + $0xc] sm:$0x1]
      %v518 = vld [vmem:[%s414 + $0x10] sm:$0xf]
      %v519 = vld [vmem:[%s414 + $0x14] sm:$0x1]
      %v520 = vld [vmem:[%s414 + $0x18] sm:$0xf]
      %v521 = vld [vmem:[%s414 + $0x1c] sm:$0x1]
      %v522 = vld [vmem:[%s414 + $0x20] sm:$0xf]
      %v523 = vld [vmem:[%s414 + $0x24] sm:$0x1]
      %v524 = vld [vmem:[%s414 + $0x28] sm:$0xf]
      %v525 = vld [vmem:[%s414 + $0x2c] sm:$0x1]
      %v526 = vld [vmem:[%s414 + $0x30] sm:$0xf]
      %v527 = vld [vmem:[%s414 + $0x34] sm:$0x1]
      %v528 = vld [vmem:[%s414 + $0x38] sm:$0xf]
      %v529 = vld [vmem:[%s414 + $0x3c] sm:$0x1]
      %v531 = vshrl.u32 %v514, 16
      %v533 = vrot.slane %v531, 4
      %v534 = vshll.u32 %v514, 16
      %v536 = vrot.slane %v534, 5
      %v537 = vor.u32 %v533, %v536
      %v538 = vrot.slane %v537, 4
      %v540 = vshll.u32 %v515, 16
      %v542 = vrot.slane %v540, 5
      %v543 = vsel %vm268, %v538, %v542
      %v545 = vshrl.u32 %v516, 16
      %v547 = vrot.slane %v545, 4
      %v548 = vshll.u32 %v516, 16
      %v550 = vrot.slane %v548, 5
      %v551 = vor.u32 %v547, %v550
      %v552 = vrot.slane %v551, 4
      %v554 = vshll.u32 %v517, 16
      %v556 = vrot.slane %v554, 5
      %v557 = vsel %vm268, %v552, %v556
      %v559 = vshrl.u32 %v518, 16
      %v561 = vrot.slane %v559, 4
      %v562 = vshll.u32 %v518, 16
      %v564 = vrot.slane %v562, 5
      %v565 = vor.u32 %v561, %v564
      %v566 = vrot.slane %v565, 4
      %v568 = vshll.u32 %v519, 16
      %v570 = vrot.slane %v568, 5
      %v571 = vsel %vm268, %v566, %v570
      %v573 = vshrl.u32 %v520, 16
      %v575 = vrot.slane %v573, 4
      %v576 = vshll.u32 %v520, 16
      %v578 = vrot.slane %v576, 5
      %v579 = vor.u32 %v575, %v578
      %v580 = vrot.slane %v579, 4
      %v582 = vshll.u32 %v521, 16
      %v584 = vrot.slane %v582, 5
      %v585 = vsel %vm268, %v580, %v584
      %v587 = vshrl.u32 %v522, 16
      %v589 = vrot.slane %v587, 4
      %v590 = vshll.u32 %v522, 16
      %v592 = vrot.slane %v590, 5
      %v593 = vor.u32 %v589, %v592
      %v594 = vrot.slane %v593, 4
      %v596 = vshll.u32 %v523, 16
      %v598 = vrot.slane %v596, 5
      %v599 = vsel %vm268, %v594, %v598
      %v601 = vshrl.u32 %v524, 16
      %v603 = vrot.slane %v601, 4
      %v604 = vshll.u32 %v524, 16
      %v606 = vrot.slane %v604, 5
      %v607 = vor.u32 %v603, %v606
      %v608 = vrot.slane %v607, 4
      %v610 = vshll.u32 %v525, 16
      %v612 = vrot.slane %v610, 5
      %v613 = vsel %vm268, %v608, %v612
      %v615 = vshrl.u32 %v526, 16
      %v617 = vrot.slane %v615, 4
      %v618 = vshll.u32 %v526, 16
      %v620 = vrot.slane %v618, 5
      %v621 = vor.u32 %v617, %v620
      %v622 = vrot.slane %v621, 4
      %v624 = vshll.u32 %v527, 16
      %v626 = vrot.slane %v624, 5
      %v627 = vsel %vm268, %v622, %v626
      %v629 = vshrl.u32 %v528, 16
      %v631 = vrot.slane %v629, 4
      %v632 = vshll.u32 %v528, 16
      %v634 = vrot.slane %v632, 5
      %v635 = vor.u32 %v631, %v634
      %v636 = vrot.slane %v635, 4
      %v638 = vshll.u32 %v529, 16
      %v640 = vrot.slane %v638, 5
      %v641 = vsel %vm268, %v636, %v640
      %642 = vrot.lane.b32.xlu0 %v543, 20
      %v643 = vpop.permute.xlu0 %642
      %644 = vrot.lane.b32.xlu0 %v557, 20
      %v645 = vpop.permute.xlu0 %644
      %646 = vrot.lane.b32.xlu0 %v571, 20
      %v647 = vpop.permute.xlu0 %646
      %648 = vrot.lane.b32.xlu0 %v585, 20
      %v649 = vpop.permute.xlu0 %648
      %650 = vrot.lane.b32.xlu0 %v599, 20
      %v651 = vpop.permute.xlu0 %650
      %652 = vrot.lane.b32.xlu0 %v613, 20
      %v653 = vpop.permute.xlu0 %652
      %654 = vrot.lane.b32.xlu0 %v627, 20
      %v655 = vpop.permute.xlu0 %654
      %656 = vrot.lane.b32.xlu0 %v641, 20
      %v657 = vpop.permute.xlu0 %656
      %vm666 = vcmask 191648
      %667 = vst.msk [vmem:[#allocation2] sm:$0xf] %vm666, %v643
      %668 = vst.msk [vmem:[#allocation2 + $0x4] sm:$0xf] %vm666, %v645
      %669 = vst.msk [vmem:[#allocation2 + $0x8] sm:$0xf] %vm666, %v647
      %670 = vst.msk [vmem:[#allocation2 + $0xc] sm:$0xf] %vm666, %v649
      %671 = vst.msk [vmem:[#allocation2 + $0x10] sm:$0xf] %vm666, %v651
      %672 = vst.msk [vmem:[#allocation2 + $0x14] sm:$0xf] %vm666, %v653
      %673 = vst.msk [vmem:[#allocation2 + $0x18] sm:$0xf] %vm666, %v655
      %674 = vst.msk [vmem:[#allocation2 + $0x1c] sm:$0xf] %vm666, %v657
      %s675 = scalar_lea.vmem %s172, 8
      %v676 = vld [vmem:[%s675] sm:$0xf]
      %v677 = vld [vmem:[%s675 + $0x8] sm:$0xf]
      %v678 = vld [vmem:[%s675 + $0x10] sm:$0xf]
      %v679 = vld [vmem:[%s675 + $0x18] sm:$0xf]
      %v680 = vld [vmem:[%s675 + $0x20] sm:$0xf]
      %v681 = vld [vmem:[%s675 + $0x28] sm:$0xf]
      %v682 = vld [vmem:[%s675 + $0x30] sm:$0xf]
      %v683 = vld [vmem:[%s675 + $0x38] sm:$0xf]
      %692 = vrot.lane.b32.xlu0 %v676, 24
      %v693 = vpop.permute.xlu0 %692
      %694 = vrot.lane.b32.xlu0 %v677, 24
      %v695 = vpop.permute.xlu0 %694
      %696 = vrot.lane.b32.xlu0 %v678, 24
      %v697 = vpop.permute.xlu0 %696
      %698 = vrot.lane.b32.xlu0 %v679, 24
      %v699 = vpop.permute.xlu0 %698
      %700 = vrot.lane.b32.xlu0 %v680, 24
      %v701 = vpop.permute.xlu0 %700
      %702 = vrot.lane.b32.xlu0 %v681, 24
      %v703 = vpop.permute.xlu0 %702
      %704 = vrot.lane.b32.xlu0 %v682, 24
      %v705 = vpop.permute.xlu0 %704
      %706 = vrot.lane.b32.xlu0 %v683, 24
      %v707 = vpop.permute.xlu0 %706
      %vm716 = vcmask 224448
      %717 = vst.msk [vmem:[#allocation2] sm:$0xf] %vm716, %v693
      %718 = vst.msk [vmem:[#allocation2 + $0x4] sm:$0xf] %vm716, %v695
      %719 = vst.msk [vmem:[#allocation2 + $0x8] sm:$0xf] %vm716, %v697
      %720 = vst.msk [vmem:[#allocation2 + $0xc] sm:$0xf] %vm716, %v699
      %721 = vst.msk [vmem:[#allocation2 + $0x10] sm:$0xf] %vm716, %v701
      %722 = vst.msk [vmem:[#allocation2 + $0x14] sm:$0xf] %vm716, %v703
      %723 = vst.msk [vmem:[#allocation2 + $0x18] sm:$0xf] %vm716, %v705
      %724 = vst.msk [vmem:[#allocation2 + $0x1c] sm:$0xf] %vm716, %v707
      %s725 = scalar_lea.vmem %s172, 80
      %v726 = vld [vmem:[%s725] sm:$0xf]
      %v727 = vld [vmem:[%s725 + $0x8] sm:$0xf]
      %v728 = vld [vmem:[%s725 + $0x10] sm:$0xf]
      %v729 = vld [vmem:[%s725 + $0x18] sm:$0xf]
      %v730 = vld [vmem:[%s725 + $0x20] sm:$0xf]
      %v731 = vld [vmem:[%s725 + $0x28] sm:$0xf]
      %v732 = vld [vmem:[%s725 + $0x30] sm:$0xf]
      %v733 = vld [vmem:[%s725 + $0x38] sm:$0xf]
      %742 = vrot.lane.b32.xlu0 %v726, 28
      %v743 = vpop.permute.xlu0 %742
      %744 = vrot.lane.b32.xlu0 %v727, 28
      %v745 = vpop.permute.xlu0 %744
      %746 = vrot.lane.b32.xlu0 %v728, 28
      %v747 = vpop.permute.xlu0 %746
      %748 = vrot.lane.b32.xlu0 %v729, 28
      %v749 = vpop.permute.xlu0 %748
      %750 = vrot.lane.b32.xlu0 %v730, 28
      %v751 = vpop.permute.xlu0 %750
      %752 = vrot.lane.b32.xlu0 %v731, 28
      %v753 = vpop.permute.xlu0 %752
      %754 = vrot.lane.b32.xlu0 %v732, 28
      %v755 = vpop.permute.xlu0 %754
      %756 = vrot.lane.b32.xlu0 %v733, 28
      %v757 = vpop.permute.xlu0 %756
      %vm766 = vcmask 257248
      %767 = vst.msk [vmem:[#allocation2] sm:$0xf] %vm766, %v743
      %768 = vst.msk [vmem:[#allocation2 + $0x4] sm:$0xf] %vm766, %v745
      %769 = vst.msk [vmem:[#allocation2 + $0x8] sm:$0xf] %vm766, %v747
      %770 = vst.msk [vmem:[#allocation2 + $0xc] sm:$0xf] %vm766, %v749
      %771 = vst.msk [vmem:[#allocation2 + $0x10] sm:$0xf] %vm766, %v751
      %772 = vst.msk [vmem:[#allocation2 + $0x14] sm:$0xf] %vm766, %v753
      %773 = vst.msk [vmem:[#allocation2 + $0x18] sm:$0xf] %vm766, %v755
      %774 = vst.msk [vmem:[#allocation2 + $0x1c] sm:$0xf] %vm766, %v757
      %v775 = vld [vmem:[%s675] sm:$0xf]
      %v776 = vld [vmem:[%s675 + $0x4] sm:$0x1]
      %v777 = vld [vmem:[%s675 + $0x8] sm:$0xf]
      %v778 = vld [vmem:[%s675 + $0xc] sm:$0x1]
      %v779 = vld [vmem:[%s675 + $0x10] sm:$0xf]
      %v780 = vld [vmem:[%s675 + $0x14] sm:$0x1]
      %v781 = vld [vmem:[%s675 + $0x18] sm:$0xf]
      %v782 = vld [vmem:[%s675 + $0x1c] sm:$0x1]
      %v783 = vld [vmem:[%s675 + $0x20] sm:$0xf]
      %v784 = vld [vmem:[%s675 + $0x24] sm:$0x1]
      %v785 = vld [vmem:[%s675 + $0x28] sm:$0xf]
      %v786 = vld [vmem:[%s675 + $0x2c] sm:$0x1]
      %v787 = vld [vmem:[%s675 + $0x30] sm:$0xf]
      %v788 = vld [vmem:[%s675 + $0x34] sm:$0x1]
      %v789 = vld [vmem:[%s675 + $0x38] sm:$0xf]
      %v790 = vld [vmem:[%s675 + $0x3c] sm:$0x1]
      %v792 = vshrl.u32 %v775, 16
      %v794 = vrot.slane %v792, 4
      %v795 = vshll.u32 %v775, 16
      %v797 = vrot.slane %v795, 5
      %v798 = vor.u32 %v794, %v797
      %v799 = vrot.slane %v798, 4
      %v801 = vshll.u32 %v776, 16
      %v803 = vrot.slane %v801, 5
      %v804 = vsel %vm268, %v799, %v803
      %v806 = vshrl.u32 %v777, 16
      %v808 = vrot.slane %v806, 4
      %v809 = vshll.u32 %v777, 16
      %v811 = vrot.slane %v809, 5
      %v812 = vor.u32 %v808, %v811
      %v813 = vrot.slane %v812, 4
      %v815 = vshll.u32 %v778, 16
      %v817 = vrot.slane %v815, 5
      %v818 = vsel %vm268, %v813, %v817
      %v820 = vshrl.u32 %v779, 16
      %v822 = vrot.slane %v820, 4
      %v823 = vshll.u32 %v779, 16
      %v825 = vrot.slane %v823, 5
      %v826 = vor.u32 %v822, %v825
      %v827 = vrot.slane %v826, 4
      %v829 = vshll.u32 %v780, 16
      %v831 = vrot.slane %v829, 5
      %v832 = vsel %vm268, %v827, %v831
      %v834 = vshrl.u32 %v781, 16
      %v836 = vrot.slane %v834, 4
      %v837 = vshll.u32 %v781, 16
      %v839 = vrot.slane %v837, 5
      %v840 = vor.u32 %v836, %v839
      %v841 = vrot.slane %v840, 4
      %v843 = vshll.u32 %v782, 16
      %v845 = vrot.slane %v843, 5
      %v846 = vsel %vm268, %v841, %v845
      %v848 = vshrl.u32 %v783, 16
      %v850 = vrot.slane %v848, 4
      %v851 = vshll.u32 %v783, 16
      %v853 = vrot.slane %v851, 5
      %v854 = vor.u32 %v850, %v853
      %v855 = vrot.slane %v854, 4
      %v857 = vshll.u32 %v784, 16
      %v859 = vrot.slane %v857, 5
      %v860 = vsel %vm268, %v855, %v859
      %v862 = vshrl.u32 %v785, 16
      %v864 = vrot.slane %v862, 4
      %v865 = vshll.u32 %v785, 16
      %v867 = vrot.slane %v865, 5
      %v868 = vor.u32 %v864, %v867
      %v869 = vrot.slane %v868, 4
      %v871 = vshll.u32 %v786, 16
      %v873 = vrot.slane %v871, 5
      %v874 = vsel %vm268, %v869, %v873
      %v876 = vshrl.u32 %v787, 16
      %v878 = vrot.slane %v876, 4
      %v879 = vshll.u32 %v787, 16
      %v881 = vrot.slane %v879, 5
      %v882 = vor.u32 %v878, %v881
      %v883 = vrot.slane %v882, 4
      %v885 = vshll.u32 %v788, 16
      %v887 = vrot.slane %v885, 5
      %v888 = vsel %vm268, %v883, %v887
      %v890 = vshrl.u32 %v789, 16
      %v892 = vrot.slane %v890, 4
      %v893 = vshll.u32 %v789, 16
      %v895 = vrot.slane %v893, 5
      %v896 = vor.u32 %v892, %v895
      %v897 = vrot.slane %v896, 4
      %v899 = vshll.u32 %v790, 16
      %v901 = vrot.slane %v899, 5
      %v902 = vsel %vm268, %v897, %v901
      %903 = vrot.lane.b32.xlu0 %v804, 32
      %v904 = vpop.permute.xlu0 %903
      %905 = vrot.lane.b32.xlu0 %v818, 32
      %v906 = vpop.permute.xlu0 %905
      %907 = vrot.lane.b32.xlu0 %v832, 32
      %v908 = vpop.permute.xlu0 %907
      %909 = vrot.lane.b32.xlu0 %v846, 32
      %v910 = vpop.permute.xlu0 %909
      %911 = vrot.lane.b32.xlu0 %v860, 32
      %v912 = vpop.permute.xlu0 %911
      %913 = vrot.lane.b32.xlu0 %v874, 32
      %v914 = vpop.permute.xlu0 %913
      %915 = vrot.lane.b32.xlu0 %v888, 32
      %v916 = vpop.permute.xlu0 %915
      %917 = vrot.lane.b32.xlu0 %v902, 32
      %v918 = vpop.permute.xlu0 %917
      %vm927 = vcmask 290048
      %928 = vst.msk [vmem:[#allocation2] sm:$0xf] %vm927, %v904
      %929 = vst.msk [vmem:[#allocation2 + $0x4] sm:$0xf] %vm927, %v906
      %930 = vst.msk [vmem:[#allocation2 + $0x8] sm:$0xf] %vm927, %v908
      %931 = vst.msk [vmem:[#allocation2 + $0xc] sm:$0xf] %vm927, %v910
      %932 = vst.msk [vmem:[#allocation2 + $0x10] sm:$0xf] %vm927, %v912
      %933 = vst.msk [vmem:[#allocation2 + $0x14] sm:$0xf] %vm927, %v914
      %934 = vst.msk [vmem:[#allocation2 + $0x18] sm:$0xf] %vm927, %v916
      %935 = vst.msk [vmem:[#allocation2 + $0x1c] sm:$0xf] %vm927, %v918
      %v936 = vld [vmem:[#allocation2] sm:$0xf]
      %v937 = vld [vmem:[#allocation2 + $0x4] sm:$0xf]
      %v938 = vld [vmem:[#allocation2 + $0x8] sm:$0xf]
      %v939 = vld [vmem:[#allocation2 + $0xc] sm:$0xf]
      %v940 = vld [vmem:[#allocation2 + $0x10] sm:$0xf]
      %v941 = vld [vmem:[#allocation2 + $0x14] sm:$0xf]
      %v942 = vld [vmem:[#allocation2 + $0x18] sm:$0xf]
      %v943 = vld [vmem:[#allocation2 + $0x1c] sm:$0xf]
      %v944 = vld [vmem:[%s1] sm:$0xf]
      %v945 = vld [vmem:[%s1 + $0x4] sm:$0xf]
      %v946 = vld [vmem:[%s1 + $0x8] sm:$0xf]
      %v947 = vld [vmem:[%s1 + $0xc] sm:$0xf]
      %v948 = vld [vmem:[%s1 + $0x10] sm:$0x3]
      %v957 = vunpack.c.l.b16 %v936
      %v958 = vunpack.c.l.b16 %v937
      %v959 = vunpack.c.l.b16 %v938
      %v960 = vunpack.c.l.b16 %v939
      %v961 = vunpack.c.l.b16 %v940
      %v962 = vunpack.c.l.b16 %v941
      %v963 = vunpack.c.l.b16 %v942
      %v964 = vunpack.c.l.b16 %v943
      %v965 = vpack.c.b16 %v958, %v957
      %v966 = vpack.c.b16 %v960, %v959
      %v967 = vpack.c.b16 %v962, %v961
      %v968 = vpack.c.b16 %v964, %v963
      %v974 = vunpack.c.l.b16 %v944
      %v975 = vunpack.c.l.b16 %v945
      %v976 = vunpack.c.l.b16 %v946
      %v977 = vunpack.c.l.b16 %v947
      %v978 = vunpack.c.l.b16 %v948
      %v979 = vpack.c.b16 %v975, %v974
      %v980 = vpack.c.b16 %v977, %v976
      %v981 = vpack.c.b16 %v978, %v978
      %vm984 = vcmask 293888
      %v986 = vsel %vm984, %v965, 0
      %v989 = vsel %vm984, %v966, 0
      %v992 = vsel %vm984, %v967, 0
      %v995 = vsel %vm984, %v968, 0
      %vm997 = vcmask 1041408
      %v999 = vsel %vm997, %v981, 0
      %1001 = vmatprep.subr.bf16.mxu0 0
      %1002 = vmatpush1.bf16.msra.mxu0 %v979
      %1003 = vmatprep.subr.bf16.mxu0 0
      %1004 = vmatpush1.bf16.msra.mxu0 %v980
      %1005 = vmatprep.subr.bf16.mxu0 0
      %1006 = vmatpush1.bf16.msra.mxu0 %v999
      %1007 = vmatprep.subr.bf16.mxu0 0
      %1008 = vmatpush1.bf16.msra.mxu0 0
      %1009 = vmatprep.subr.bf16.mxu0 0
      %1010 = vmatpush1.bf16.msra.mxu0 0
      %1011 = vmatprep.subr.bf16.mxu0 0
      %1012 = vmatpush1.bf16.msra.mxu0 0
      %1013 = vmatprep.subr.bf16.mxu0 0
      %1014 = vmatpush1.bf16.msra.mxu0 0
      %1015 = vmatprep.subr.bf16.mxu0 0
      %1016 = vmatpush1.bf16.msra.mxu0 0
      %1017 = vmatprep.subr.bf16.mxu0 0
      %1018 = vmatpush1.bf16.msra.mxu0 0
      %1019 = vmatprep.subr.bf16.mxu0 0
      %1020 = vmatpush1.bf16.msra.mxu0 0
      %1021 = vmatprep.subr.bf16.mxu0 0
      %1022 = vmatpush1.bf16.msra.mxu0 0
      %1023 = vmatprep.subr.bf16.mxu0 0
      %1024 = vmatpush1.bf16.msra.mxu0 0
      %1025 = vmatprep.subr.bf16.mxu0 0
      %1026 = vmatpush1.bf16.msra.mxu0 0
      %1027 = vmatprep.subr.bf16.mxu0 0
      %1028 = vmatpush1.bf16.msra.mxu0 0
      %1029 = vmatprep.subr.bf16.mxu0 0
      %1030 = vmatpush1.bf16.msra.mxu0 0
      %1031 = vmatprep.subr.bf16.mxu0 0
      %1032 = vmatpush1.bf16.msra.mxu0 0
      %1033 = vmatprep.mubr.bf16.mxu0 0
      %1034 = vmatmul.mubr.bf16.gmra.mrb[0].mxu0 %v986
      %v1035 = vpop.f32.mrb[0].mxu0
      %v1036 = vadd.f32 0.0, %v1035
      %v1037 = vpop.f32.mrb[0].mxu0
      %v1038 = vpop.f32.mrb[0].mxu0
      %v1039 = vadd.f32 0.0, %v1038
      %v1040 = vpop.f32.mrb[0].mxu0
      %1041 = vmatprep.mubr.bf16.mxu0 0
      %1042 = vmatmul.mubr.bf16.gmra.mrb[0].mxu0 %v989
      %v1043 = vpop.f32.mrb[0].mxu0
      %v1044 = vadd.f32 0.0, %v1043
      %v1045 = vpop.f32.mrb[0].mxu0
      %v1046 = vpop.f32.mrb[0].mxu0
      %v1047 = vadd.f32 0.0, %v1046
      %v1048 = vpop.f32.mrb[0].mxu0
      %1049 = vmatprep.mubr.bf16.mxu0 0
      %1050 = vmatmul.mubr.bf16.gmra.mrb[0].mxu0 %v992
      %v1051 = vpop.f32.mrb[0].mxu0
      %v1052 = vadd.f32 0.0, %v1051
      %v1053 = vpop.f32.mrb[0].mxu0
      %v1054 = vpop.f32.mrb[0].mxu0
      %v1055 = vadd.f32 0.0, %v1054
      %v1056 = vpop.f32.mrb[0].mxu0
      %1057 = vmatprep.mubr.bf16.mxu0 0
      %1058 = vmatmul.mubr.bf16.gmra.mrb[0].mxu0 %v995
      %v1059 = vpop.f32.mrb[0].mxu0
      %v1060 = vadd.f32 0.0, %v1059
      %v1061 = vpop.f32.mrb[0].mxu0
      %v1062 = vpop.f32.mrb[0].mxu0
      %v1063 = vadd.f32 0.0, %v1062
      %v1064 = vpop.f32.mrb[0].mxu0
      %1065 = vdwg.mxu0
      %vm1066 = vcmask 64512
      %1067 = vst.msk [vmem:[%s177] sm:$0xff] %vm1066, %v1036
      %1068 = vst.msk [vmem:[%s177 + $0x8] sm:$0xff] %vm1066, %v1039
      %1069 = vst.msk [vmem:[%s177 + $0x10] sm:$0xff] %vm1066, %v1044
      %1070 = vst.msk [vmem:[%s177 + $0x18] sm:$0xff] %vm1066, %v1047
      %1071 = vst.msk [vmem:[%s177 + $0x20] sm:$0xff] %vm1066, %v1052
      %1072 = vst.msk [vmem:[%s177 + $0x28] sm:$0xff] %vm1066, %v1055
      %1073 = vst.msk [vmem:[%s177 + $0x30] sm:$0xff] %vm1066, %v1060
      %1074 = vst.msk [vmem:[%s177 + $0x38] sm:$0xff] %vm1066, %v1063
      %v1075 = vsel %vm1066, %v1036, 0.0
      %v1076 = vsel %vm1066, %v1039, 0.0
      %v1077 = vadd.f32 %v1075, %v1076
      %v1078 = vsel %vm1066, %v1044, 0.0
      %v1079 = vadd.f32 %v1077, %v1078
      %v1080 = vsel %vm1066, %v1047, 0.0
      %v1081 = vadd.f32 %v1079, %v1080
      %v1082 = vsel %vm1066, %v1052, 0.0
      %v1083 = vadd.f32 %v1081, %v1082
      %v1084 = vsel %vm1066, %v1055, 0.0
      %v1085 = vadd.f32 %v1083, %v1084
      %v1086 = vsel %vm1066, %v1060, 0.0
      %v1087 = vadd.f32 %v1085, %v1086
      %v1088 = vsel %vm1066, %v1063, 0.0
      %v1089 = vadd.f32 %v1087, %v1088
      %v1090 = vrot.slane %v1089, 4
      %v1091 = vadd.f32 %v1089, %v1090
      %v1092 = vrot.slane %v1091, 2
      %v1093 = vadd.f32 %v1091, %v1092
      %v1094 = vrot.slane %v1093, 1
      %v1095 = vadd.f32 %v1093, %v1094
      %vm1096 = vcmask 57344
      %1097 = vst.msk [vmem:[%s181] sm:$0x1] %vm1096, %v1095
      %v1098 = vmul.f32 %v1036, %v1036
      %v1099 = vmul.f32 %v1039, %v1039
      %v1100 = vmul.f32 %v1044, %v1044
      %v1101 = vmul.f32 %v1047, %v1047
      %v1102 = vmul.f32 %v1052, %v1052
      %v1103 = vmul.f32 %v1055, %v1055
      %v1104 = vmul.f32 %v1060, %v1060
      %v1105 = vmul.f32 %v1063, %v1063
      %v1106 = vsel %vm1066, %v1098, 0.0
      %v1107 = vsel %vm1066, %v1099, 0.0
      %v1108 = vadd.f32 %v1106, %v1107
      %v1109 = vsel %vm1066, %v1100, 0.0
      %v1110 = vadd.f32 %v1108, %v1109
      %v1111 = vsel %vm1066, %v1101, 0.0
      %v1112 = vadd.f32 %v1110, %v1111
      %v1113 = vsel %vm1066, %v1102, 0.0
      %v1114 = vadd.f32 %v1112, %v1113
      %v1115 = vsel %vm1066, %v1103, 0.0
      %v1116 = vadd.f32 %v1114, %v1115
      %v1117 = vsel %vm1066, %v1104, 0.0
      %v1118 = vadd.f32 %v1116, %v1117
      %v1119 = vsel %vm1066, %v1105, 0.0
      %v1120 = vadd.f32 %v1118, %v1119
      %v1121 = vrot.slane %v1120, 4
      %v1122 = vadd.f32 %v1120, %v1121
      %v1123 = vrot.slane %v1122, 2
      %v1124 = vadd.f32 %v1122, %v1123
      %v1125 = vrot.slane %v1124, 1
      %v1126 = vadd.f32 %v1124, %v1125
      %1127 = vst.msk [vmem:[%s181 + $0x1] sm:$0x1] %vm1096, %v1126
      %p1128 = scmp.lt.s32.totalorder %s15, 1
      %s1129 = scalar_select %p1128, %s15, 1
      %s1130 = smul.addr %s1129, 8
      %s1131 = smul.addr %s1130, 8
      %s1132 = scalar_lea.vmem %s2, %s1131
      %p1133 = scmp.lt.s32.totalorder %s15, 1
      %s1134 = scalar_select %p1133, %s15, 1
      %s1135 = smul.addr %s1134, 2
      %s1136 = scalar_lea.vmem %s3, %s1135
      // Predicated region
      $region29: #{dis_block.6} parent=27 // pred_check
        %p1137 = pneg %p80
      $region30: #{dis_block.6} parent=27 // pred_check_branch
        %1139 = sbr.rel (%p1137) target = $region32
      $region31: #{dis_block.6} parent=27 // pred_region
        _
      $region32: #{dis_block.6} parent=27 // pred_fallthru
        _
      // Predicated region
      $region33: #{dis_block.6} parent=27 // pred_check
        %p1140 = pneg %p106
      $region34: #{dis_block.6} parent=27 // pred_check_branch
        %1142 = sbr.rel (%p1140) target = $region36
      $region35: #{dis_block.6} parent=27 // pred_region
        _
      $region36: #{dis_block.6} parent=27 // pred_fallthru
        _
    $region28: #{dis_block.6} parent=5 // pred_fallthru
      _
    %p1143 = scmp.le.s32.totalorder 2, %s10
    // Predicated region
    $region37: #{dis_block.6} parent=5 // pred_check
      %p1144 = pneg %p1143
    $region38: #{dis_block.6} parent=5 // pred_check_branch
      %1146 = sbr.rel (%p1144) target = $region40
    $region39: #{dis_block.6} parent=5 // pred_region
      %s1147 = ssub.s32 %s10, 2
      // Predicated region
      $region41: #{dis_block.6} parent=39 // pred_check
        %p1148 = pneg %p86
      $region42: #{dis_block.6} parent=39 // pred_check_branch
        %1150 = sbr.rel (%p1148) target = $region44
      $region43: #{dis_block.6} parent=39 // pred_region
        %p1151 = scmp.lt.s32.totalorder %s16, 1
        %s1152 = scalar_select %p1151, %s16, 1
        %s1153 = smul.addr %s1152, 8
        %s1154 = smul.addr %s1153, 8
        %s1155 = scalar_lea.vmem %s2, %s1154
      $region44: #{dis_block.6} parent=39 // pred_fallthru
        _
      // Predicated region
      $region45: #{dis_block.6} parent=39 // pred_check
        %p1156 = pneg %p112
      $region46: #{dis_block.6} parent=39 // pred_check_branch
        %1158 = sbr.rel (%p1156) target = $region48
      $region47: #{dis_block.6} parent=39 // pred_region
        %p1159 = scmp.lt.s32.totalorder %s16, 1
        %s1160 = scalar_select %p1159, %s16, 1
        %s1161 = smul.addr %s1160, 2
        %s1162 = scalar_lea.vmem %s3, %s1161
      $region48: #{dis_block.6} parent=39 // pred_fallthru
        _
    $region40: #{dis_block.6} parent=5 // pred_fallthru
      _
  $region6: #{dis_block.6} parent=0 // loop_footer
    %s14 = sadd.s32 1, %s10
  $region7: #{dis_block.6} parent=0 // loop_footer_branch
    %9 = sbr.rel target = $region3
  $region8: #{dis_block.6} parent=0 // loop_exit
    _

// kernel: dis_block.4
$region0: #{dis_block.4}
  #allocation0 [shape = 'u32[]', space=smem, size = 0x4, offset = 0x4, fixed_abs, tag = 'smem constant byte address 0x4 - core index']
  #allocation1 [shape = 'u32[144,128]{1,0:T(1,128)}', space=vmem, size = 0x12000, scoped, tag = 'internal scratch']
  #allocation2 [shape = 'bf16[16,16,36]{2,1,0:T(16,128)(2,1)}', space=vmem, size = 0x10000, scoped, tag = 'scratch operand']
  %s0 = inlined_call_operand.vmem [shape: bf16[2,18,18,4], index: 0, kind: input, shape index: {}]
  %s1 = inlined_call_operand.vmem [shape: bf16[36,4], index: 1, kind: input, shape index: {}]
  %s2 = inlined_call_operand.vmem [shape: f32[2,256,4], index: 2, kind: output, shape index: {0}]
  %s3 = inlined_call_operand.vmem [shape: f32[2,2,4], index: 3, kind: output, shape index: {1}]
  %4 = xla_tuple %s2, %s3
  %s5 = sld [smem:[#allocation0]]
  $region49: #{dis_block.4} parent=0
    _
  %s7 = ssub.s32 1, %s5
  %s8 = scalar_select 0, %s7, %s5
  loop: start=0, step=1, limit=4
  $region2: #{dis_block.4} parent=0 // loop_pre_header
    _
  $region3: #{dis_block.4} parent=0 // loop_header
    %s10 = sphi 0, %s14
    %p11 = scmp.ge.s32.totalorder %s10, 4
    %s20 = sphi 0, %s22
    %s23 = sphi 0, %s20
    %s24 = sphi 0, %s23
    %s40 = sphi 0, %s24
    %s44 = sphi 0, %s44
    %s46 = sphi 0, %s44
    %s47 = sphi 0, %s46
    %s61 = sphi 0, %s47
    %s67 = sphi 0, %s69
    %s70 = sphi 0, %s67
    %s71 = sphi 0, %s70
    %s87 = sphi 0, %s71
    %s93 = sphi 0, %s95
    %s96 = sphi 0, %s93
    %s97 = sphi 0, %s96
    %s113 = sphi 0, %s97
  $region4: #{dis_block.4} parent=0 // loop_header_branch
    %13 = sbr.rel (%p11) target = $region8
  $region5: #{dis_block.4} parent=0 // loop_body
    %s15 = ssub.s32 %s10, 1
    %s16 = ssub.s32 %s10, 2
    %s17 = sadd.s32 %s10, 1
    %s18 = ssub.s32 %s10, %s17
    %p19 = scmp.eq.s32.totalorder %s18, 0
    %s21 = sadd.s32 %s20, 1
    %s22 = scalar_select %p19, %s20, %s21
    %p25 = pneg %p19
    %p26 = scmp.eq.s32.totalorder %s10, 1
    %p27 = por %p25, %p26
    %p28 = scmp.ne.s32.totalorder %s20, %s23
    %p29 = scmp.eq.s32.totalorder %s10, 0
    %p30 = por %p28, %p29
    %p31 = scmp.ne.s32.totalorder %s20, %s23
    %p32 = scmp.eq.s32.totalorder %s15, 1
    %p33 = por %p31, %p32
    %p34 = scmp.ne.s32.totalorder %s23, %s24
    %p35 = scmp.eq.s32.totalorder %s15, 0
    %p36 = por %p34, %p35
    %p37 = scmp.ne.s32.totalorder %s23, %s24
    %p38 = scmp.eq.s32.totalorder %s16, 1
    %p39 = por %p37, %p38
    %p41 = scmp.ne.s32.totalorder %s24, %s40
    %p42 = scmp.eq.s32.totalorder %s16, 0
    %p43 = por %p41, %p42
    %s45 = sadd.s32 %s44, 1
    %p48 = scmp.eq.s32.totalorder %s10, 1
    %p49 = scmp.ne.s32.totalorder %s44, %s46
    %p50 = scmp.eq.s32.totalorder %s10, 0
    %p51 = por %p49, %p50
    %p52 = scmp.ne.s32.totalorder %s44, %s46
    %p53 = scmp.eq.s32.totalorder %s15, 1
    %p54 = por %p52, %p53
    %p55 = scmp.ne.s32.totalorder %s46, %s47
    %p56 = scmp.eq.s32.totalorder %s15, 0
    %p57 = por %p55, %p56
    %p58 = scmp.ne.s32.totalorder %s46, %s47
    %p59 = scmp.eq.s32.totalorder %s16, 1
    %p60 = por %p58, %p59
    %p62 = scmp.ne.s32.totalorder %s47, %s61
    %p63 = scmp.eq.s32.totalorder %s16, 0
    %p64 = por %p62, %p63
    %s65 = ssub.s32 %s10, %s17
    %p66 = scmp.eq.s32.totalorder %s65, 0
    %s68 = sadd.s32 %s67, 1
    %s69 = scalar_select %p66, %s67, %s68
    %p72 = pneg %p66
    %p73 = scmp.eq.s32.totalorder %s10, 1
    %p74 = por %p72, %p73
    %p75 = scmp.ne.s32.totalorder %s67, %s70
    %p76 = scmp.eq.s32.totalorder %s10, 0
    %p77 = por %p75, %p76
    %p78 = scmp.ne.s32.totalorder %s67, %s70
    %p79 = scmp.eq.s32.totalorder %s15, 1
    %p80 = por %p78, %p79
    %p81 = scmp.ne.s32.totalorder %s70, %s71
    %p82 = scmp.eq.s32.totalorder %s15, 0
    %p83 = por %p81, %p82
    %p84 = scmp.ne.s32.totalorder %s70, %s71
    %p85 = scmp.eq.s32.totalorder %s16, 1
    %p86 = por %p84, %p85
    %p88 = scmp.ne.s32.totalorder %s71, %s87
    %p89 = scmp.eq.s32.totalorder %s16, 0
    %p90 = por %p88, %p89
    %s91 = ssub.s32 %s10, %s17
    %p92 = scmp.eq.s32.totalorder %s91, 0
    %s94 = sadd.s32 %s93, 1
    %s95 = scalar_select %p92, %s93, %s94
    %p98 = pneg %p92
    %p99 = scmp.eq.s32.totalorder %s10, 1
    %p100 = por %p98, %p99
    %p101 = scmp.ne.s32.totalorder %s93, %s96
    %p102 = scmp.eq.s32.totalorder %s10, 0
    %p103 = por %p101, %p102
    %p104 = scmp.ne.s32.totalorder %s93, %s96
    %p105 = scmp.eq.s32.totalorder %s15, 1
    %p106 = por %p104, %p105
    %p107 = scmp.ne.s32.totalorder %s96, %s97
    %p108 = scmp.eq.s32.totalorder %s15, 0
    %p109 = por %p107, %p108
    %p110 = scmp.ne.s32.totalorder %s96, %s97
    %p111 = scmp.eq.s32.totalorder %s16, 1
    %p112 = por %p110, %p111
    %p114 = scmp.ne.s32.totalorder %s97, %s113
    %p115 = scmp.eq.s32.totalorder %s16, 0
    %p116 = por %p114, %p115
    %p117 = scmp.le.s32.totalorder 1, %s10
    %p118 = scmp.lt.s32.totalorder %s10, 3
    %p119 = pnand %p117, %p118
    %p120 = pneg %p119
    // Predicated region
    $region9: #{dis_block.4} parent=5 // pred_check
      _
    $region10: #{dis_block.4} parent=5 // pred_check_branch
      %122 = sbr.rel (%p119) target = $region12
    $region11: #{dis_block.4} parent=5 // pred_region
      %s123 = ssub.s32 %s10, 1
      // Predicated region
      $region13: #{dis_block.4} parent=11 // pred_check
        %p124 = pneg %p57
      $region14: #{dis_block.4} parent=11 // pred_check_branch
        %126 = sbr.rel (%p124) target = $region16
      $region15: #{dis_block.4} parent=11 // pred_region
        _
      $region16: #{dis_block.4} parent=11 // pred_fallthru
        _
    $region12: #{dis_block.4} parent=5 // pred_fallthru
      _
    %p127 = scmp.lt.s32.totalorder %s10, 2
    // Predicated region
    $region17: #{dis_block.4} parent=5 // pred_check
      %p128 = pneg %p127
    $region18: #{dis_block.4} parent=5 // pred_check_branch
      %130 = sbr.rel (%p128) target = $region20
    $region19: #{dis_block.4} parent=5 // pred_region
      // Predicated region
      $region21: #{dis_block.4} parent=19 // pred_check
        %p131 = pneg %p30
      $region22: #{dis_block.4} parent=19 // pred_check_branch
        %133 = sbr.rel (%p131) target = $region24
      $region23: #{dis_block.4} parent=19 // pred_region
        %p134 = scmp.lt.s32.totalorder %s10, 1
        %s135 = scalar_select %p134, %s10, 1
        %s136 = smul.addr %s135, 54
        %s137 = smul.addr %s136, 4
        %s138 = scalar_lea.vmem %s0, %s137
      $region24: #{dis_block.4} parent=19 // pred_fallthru
        _
    $region20: #{dis_block.4} parent=5 // pred_fallthru
      _
    %p139 = scmp.le.s32.totalorder 1, %s10
    %p140 = scmp.lt.s32.totalorder %s10, 3
    %p141 = pnand %p139, %p140
    %p142 = pneg %p141
    // Predicated region
    $region25: #{dis_block.4} parent=5 // pred_check
      _
    $region26: #{dis_block.4} parent=5 // pred_check_branch
      %144 = sbr.rel (%p141) target = $region28
    $region27: #{dis_block.4} parent=5 // pred_region
      %s145 = ssub.s32 %s10, 1
      %p146 = scmp.lt.s32.totalorder %s15, 1
      %s147 = scalar_select %p146, %s15, 1
      %s148 = smul.addr %s147, 54
      %s149 = smul.addr %s148, 4
      %s150 = scalar_lea.vmem %s0, %s149
      %p151 = pneg %p36
      %p152 = pneg %p33
      %p153 = pneg %p57
      %p154 = pneg %p54
      %p155 = pneg %p83
      %p156 = pneg %p80
      %p157 = scmp.lt.s32.totalorder %s15, 1
      %s158 = scalar_select %p157, %s15, 1
      %s159 = smul.addr %s158, 32
      %s160 = smul.addr %s159, 8
      %s161 = scalar_lea.vmem %s2, %s160
      %p162 = pneg %p109
      %p163 = pneg %p106
      %p164 = scmp.lt.s32.totalorder %s15, 1
      %s165 = scalar_select %p164, %s15, 1
      %s166 = smul.addr %s165, 2
      %s167 = scalar_lea.vmem %s3, %s166
      %p168 = scmp.lt.s32.totalorder %s15, 1
      %s169 = scalar_select %p168, %s15, 1
      %s170 = smul.addr %s169, 54
      %s171 = smul.addr %s170, 4
      %s172 = scalar_lea.vmem %s0, %s171
      %p173 = scmp.lt.s32.totalorder %s15, 1
      %s174 = scalar_select %p173, %s15, 1
      %s175 = smul.addr %s174, 32
      %s176 = smul.addr %s175, 8
      %s177 = scalar_lea.vmem %s2, %s176
      %p178 = scmp.lt.s32.totalorder %s15, 1
      %s179 = scalar_select %p178, %s15, 1
      %s180 = smul.addr %s179, 2
      %s181 = scalar_lea.vmem %s3, %s180
      %v183 = vld [vmem:[%s172] sm:$0xf]
      %v184 = vld [vmem:[%s172 + $0x4] sm:$0xf]
      %v185 = vld [vmem:[%s172 + $0xc] sm:$0xf]
      %v186 = vld [vmem:[%s172 + $0x10] sm:$0xf]
      %v187 = vld [vmem:[%s172 + $0x18] sm:$0xf]
      %v188 = vld [vmem:[%s172 + $0x1c] sm:$0xf]
      %v189 = vld [vmem:[%s172 + $0x24] sm:$0xf]
      %v190 = vld [vmem:[%s172 + $0x28] sm:$0xf]
      %v191 = vld [vmem:[%s172 + $0x30] sm:$0xf]
      %v192 = vld [vmem:[%s172 + $0x34] sm:$0xf]
      %v193 = vld [vmem:[%s172 + $0x3c] sm:$0xf]
      %v194 = vld [vmem:[%s172 + $0x40] sm:$0xf]
      %v195 = vld [vmem:[%s172 + $0x48] sm:$0xf]
      %v196 = vld [vmem:[%s172 + $0x4c] sm:$0xf]
      %v197 = vld [vmem:[%s172 + $0x54] sm:$0xf]
      %v198 = vld [vmem:[%s172 + $0x58] sm:$0xf]
      %v199 = vld [vmem:[%s172 + $0x60] sm:$0xf]
      %v200 = vld [vmem:[%s172 + $0x64] sm:$0xf]
      %v201 = vld [vmem:[%s172 + $0x6c] sm:$0xf]
      %v202 = vld [vmem:[%s172 + $0x70] sm:$0xf]
      %v203 = vld [vmem:[%s172 + $0x78] sm:$0xf]
      %v204 = vld [vmem:[%s172 + $0x7c] sm:$0xf]
      %v205 = vld [vmem:[%s172 + $0x84] sm:$0xf]
      %v206 = vld [vmem:[%s172 + $0x88] sm:$0xf]
      %v207 = vld [vmem:[%s172 + $0x90] sm:$0xf]
      %v208 = vld [vmem:[%s172 + $0x94] sm:$0xf]
      %v209 = vld [vmem:[%s172 + $0x9c] sm:$0xf]
      %v210 = vld [vmem:[%s172 + $0xa0] sm:$0xf]
      %v211 = vld [vmem:[%s172 + $0xa8] sm:$0xf]
      %v212 = vld [vmem:[%s172 + $0xac] sm:$0xf]
      %v213 = vld [vmem:[%s172 + $0xb4] sm:$0xf]
      %v214 = vld [vmem:[%s172 + $0xb8] sm:$0xf]
      %v247 = vunpack.c.l.b16 %v183
      %v248 = vunpack.c.l.b16 %v184
      %v249 = vunpack.c.l.b16 %v185
      %v250 = vunpack.c.l.b16 %v186
      %v251 = vunpack.c.l.b16 %v187
      %v252 = vunpack.c.l.b16 %v188
      %v253 = vunpack.c.l.b16 %v189
      %v254 = vunpack.c.l.b16 %v190
      %v255 = vunpack.c.l.b16 %v191
      %v256 = vunpack.c.l.b16 %v192
      %v257 = vunpack.c.l.b16 %v193
      %v258 = vunpack.c.l.b16 %v194
      %v259 = vunpack.c.l.b16 %v195
      %v260 = vunpack.c.l.b16 %v196
      %v261 = vunpack.c.l.b16 %v197
      %v262 = vunpack.c.l.b16 %v198
      %v263 = vunpack.c.l.b16 %v199
      %v264 = vunpack.c.l.b16 %v200
      %v265 = vunpack.c.l.b16 %v201
      %v266 = vunpack.c.l.b16 %v202
      %v267 = vunpack.c.l.b16 %v203
      %v268 = vunpack.c.l.b16 %v204
      %v269 = vunpack.c.l.b16 %v205
      %v270 = vunpack.c.l.b16 %v206
      %v271 = vunpack.c.l.b16 %v207
      %v272 = vunpack.c.l.b16 %v208
      %v273 = vunpack.c.l.b16 %v209
      %v274 = vunpack.c.l.b16 %v210
      %v275 = vunpack.c.l.b16 %v211
      %v276 = vunpack.c.l.b16 %v212
      %v277 = vunpack.c.l.b16 %v213
      %v278 = vunpack.c.l.b16 %v214
      %v279 = vpack.c.b16 %v248, %v247
      %v280 = vpack.c.b16 %v250, %v249
      %v281 = vpack.c.b16 %v252, %v251
      %v282 = vpack.c.b16 %v254, %v253
      %v283 = vpack.c.b16 %v256, %v255
      %v284 = vpack.c.b16 %v258, %v257
      %v285 = vpack.c.b16 %v260, %v259
      %v286 = vpack.c.b16 %v262, %v261
      %v287 = vpack.c.b16 %v264, %v263
      %v288 = vpack.c.b16 %v266, %v265
      %v289 = vpack.c.b16 %v268, %v267
      %v290 = vpack.c.b16 %v270, %v269
      %v291 = vpack.c.b16 %v272, %v271
      %v292 = vpack.c.b16 %v274, %v273
      %v293 = vpack.c.b16 %v276, %v275
      %v294 = vpack.c.b16 %v278, %v277
      %vm311 = vcmask 31744
      %312 = vst.msk [vmem:[#allocation2] sm:$0xff] %vm311, %v279
      %313 = vst.msk [vmem:[#allocation2 + $0x8] sm:$0xff] %vm311, %v280
      %314 = vst.msk [vmem:[#allocation2 + $0x10] sm:$0xff] %vm311, %v281
      %315 = vst.msk [vmem:[#allocation2 + $0x18] sm:$0xff] %vm311, %v282
      %316 = vst.msk [vmem:[#allocation2 + $0x20] sm:$0xff] %vm311, %v283
      %317 = vst.msk [vmem:[#allocation2 + $0x28] sm:$0xff] %vm311, %v284
      %318 = vst.msk [vmem:[#allocation2 + $0x30] sm:$0xff] %vm311, %v285
      %319 = vst.msk [vmem:[#allocation2 + $0x38] sm:$0xff] %vm311, %v286
      %320 = vst.msk [vmem:[#allocation2 + $0x40] sm:$0xff] %vm311, %v287
      %321 = vst.msk [vmem:[#allocation2 + $0x48] sm:$0xff] %vm311, %v288
      %322 = vst.msk [vmem:[#allocation2 + $0x50] sm:$0xff] %vm311, %v289
      %323 = vst.msk [vmem:[#allocation2 + $0x58] sm:$0xff] %vm311, %v290
      %324 = vst.msk [vmem:[#allocation2 + $0x60] sm:$0xff] %vm311, %v291
      %325 = vst.msk [vmem:[#allocation2 + $0x68] sm:$0xff] %vm311, %v292
      %326 = vst.msk [vmem:[#allocation2 + $0x70] sm:$0xff] %vm311, %v293
      %327 = vst.msk [vmem:[#allocation2 + $0x78] sm:$0xff] %vm311, %v294
      %v328 = vld [vmem:[%s172] sm:$0xf]
      %v329 = vld [vmem:[%s172 + $0x4] sm:$0xf]
      %v330 = vld [vmem:[%s172 + $0x8] sm:$0x1]
      %v331 = vld [vmem:[%s172 + $0xc] sm:$0xf]
      %v332 = vld [vmem:[%s172 + $0x10] sm:$0xf]
      %v333 = vld [vmem:[%s172 + $0x14] sm:$0x1]
      %v334 = vld [vmem:[%s172 + $0x18] sm:$0xf]
      %v335 = vld [vmem:[%s172 + $0x1c] sm:$0xf]
      %v336 = vld [vmem:[%s172 + $0x20] sm:$0x1]
      %v337 = vld [vmem:[%s172 + $0x24] sm:$0xf]
      %v338 = vld [vmem:[%s172 + $0x28] sm:$0xf]
      %v339 = vld [vmem:[%s172 + $0x2c] sm:$0x1]
      %v340 = vld [vmem:[%s172 + $0x30] sm:$0xf]
      %v341 = vld [vmem:[%s172 + $0x34] sm:$0xf]
      %v342 = vld [vmem:[%s172 + $0x38] sm:$0x1]
      %v343 = vld [vmem:[%s172 + $0x3c] sm:$0xf]
      %v344 = vld [vmem:[%s172 + $0x40] sm:$0xf]
      %v345 = vld [vmem:[%s172 + $0x44] sm:$0x1]
      %v346 = vld [vmem:[%s172 + $0x48] sm:$0xf]
      %v347 = vld [vmem:[%s172 + $0x4c] sm:$0xf]
      %v348 = vld [vmem:[%s172 + $0x50] sm:$0x1]
      %v349 = vld [vmem:[%s172 + $0x54] sm:$0xf]
      %v350 = vld [vmem:[%s172 + $0x58] sm:$0xf]
      %v351 = vld [vmem:[%s172 + $0x5c] sm:$0x1]
      %v352 = vld [vmem:[%s172 + $0x60] sm:$0xf]
      %v353 = vld [vmem:[%s172 + $0x64] sm:$0xf]
      %v354 = vld [vmem:[%s172 + $0x68] sm:$0x1]
      %v355 = vld [vmem:[%s172 + $0x6c] sm:$0xf]
      %v356 = vld [vmem:[%s172 + $0x70] sm:$0xf]
      %v357 = vld [vmem:[%s172 + $0x74] sm:$0x1]
      %v358 = vld [vmem:[%s172 + $0x78] sm:$0xf]
      %v359 = vld [vmem:[%s172 + $0x7c] sm:$0xf]
      %v360 = vld [vmem:[%s172 + $0x80] sm:$0x1]
      %v361 = vld [vmem:[%s172 + $0x84] sm:$0xf]
      %v362 = vld [vmem:[%s172 + $0x88] sm:$0xf]
      %v363 = vld [vmem:[%s172 + $0x8c] sm:$0x1]
      %v364 = vld [vmem:[%s172 + $0x90] sm:$0xf]
      %v365 = vld [vmem:[%s172 + $0x94] sm:$0xf]
      %v366 = vld [vmem:[%s172 + $0x98] sm:$0x1]
      %v367 = vld [vmem:[%s172 + $0x9c] sm:$0xf]
      %v368 = vld [vmem:[%s172 + $0xa0] sm:$0xf]
      %v369 = vld [vmem:[%s172 + $0xa4] sm:$0x1]
      %v370 = vld [vmem:[%s172 + $0xa8] sm:$0xf]
      %v371 = vld [vmem:[%s172 + $0xac] sm:$0xf]
      %v372 = vld [vmem:[%s172 + $0xb0] sm:$0x1]
      %v373 = vld [vmem:[%s172 + $0xb4] sm:$0xf]
      %v374 = vld [vmem:[%s172 + $0xb8] sm:$0xf]
      %v375 = vld [vmem:[%s172 + $0xbc] sm:$0x1]
      %v424 = vunpack.c.l.b16 %v328
      %v425 = vunpack.c.l.b16 %v329
      %v426 = vunpack.c.l.b16 %v330
      %v427 = vunpack.c.l.b16 %v331
      %v428 = vunpack.c.l.b16 %v332
      %v429 = vunpack.c.l.b16 %v333
      %v430 = vunpack.c.l.b16 %v334
      %v431 = vunpack.c.l.b16 %v335
      %v432 = vunpack.c.l.b16 %v336
      %v433 = vunpack.c.l.b16 %v337
      %v434 = vunpack.c.l.b16 %v338
      %v435 = vunpack.c.l.b16 %v339
      %v436 = vunpack.c.l.b16 %v340
      %v437 = vunpack.c.l.b16 %v341
      %v438 = vunpack.c.l.b16 %v342
      %v439 = vunpack.c.l.b16 %v343
      %v440 = vunpack.c.l.b16 %v344
      %v441 = vunpack.c.l.b16 %v345
      %v442 = vunpack.c.l.b16 %v346
      %v443 = vunpack.c.l.b16 %v347
      %v444 = vunpack.c.l.b16 %v348
      %v445 = vunpack.c.l.b16 %v349
      %v446 = vunpack.c.l.b16 %v350
      %v447 = vunpack.c.l.b16 %v351
      %v448 = vunpack.c.l.b16 %v352
      %v449 = vunpack.c.l.b16 %v353
      %v450 = vunpack.c.l.b16 %v354
      %v451 = vunpack.c.l.b16 %v355
      %v452 = vunpack.c.l.b16 %v356
      %v453 = vunpack.c.l.b16 %v357
      %v454 = vunpack.c.l.b16 %v358
      %v455 = vunpack.c.l.b16 %v359
      %v456 = vunpack.c.l.b16 %v360
      %v457 = vunpack.c.l.b16 %v361
      %v458 = vunpack.c.l.b16 %v362
      %v459 = vunpack.c.l.b16 %v363
      %v460 = vunpack.c.l.b16 %v364
      %v461 = vunpack.c.l.b16 %v365
      %v462 = vunpack.c.l.b16 %v366
      %v463 = vunpack.c.l.b16 %v367
      %v464 = vunpack.c.l.b16 %v368
      %v465 = vunpack.c.l.b16 %v369
      %v466 = vunpack.c.l.b16 %v370
      %v467 = vunpack.c.l.b16 %v371
      %v468 = vunpack.c.l.b16 %v372
      %v469 = vunpack.c.l.b16 %v373
      %v470 = vunpack.c.l.b16 %v374
      %v471 = vunpack.c.l.b16 %v375
      %v472 = vpack.c.b16 %v425, %v424
      %v473 = vpack.c.b16 %v426, %v426
      %v474 = vpack.c.b16 %v428, %v427
      %v475 = vpack.c.b16 %v429, %v429
      %v476 = vpack.c.b16 %v431, %v430
      %v477 = vpack.c.b16 %v432, %v432
      %v478 = vpack.c.b16 %v434, %v433
      %v479 = vpack.c.b16 %v435, %v435
      %v480 = vpack.c.b16 %v437, %v436
      %v481 = vpack.c.b16 %v438, %v438
      %v482 = vpack.c.b16 %v440, %v439
      %v483 = vpack.c.b16 %v441, %v441
      %v484 = vpack.c.b16 %v443, %v442
      %v485 = vpack.c.b16 %v444, %v444
      %v486 = vpack.c.b16 %v446, %v445
      %v487 = vpack.c.b16 %v447, %v447
      %v488 = vpack.c.b16 %v449, %v448
      %v489 = vpack.c.b16 %v450, %v450
      %v490 = vpack.c.b16 %v452, %v451
      %v491 = vpack.c.b16 %v453, %v453
      %v492 = vpack.c.b16 %v455, %v454
      %v493 = vpack.c.b16 %v456, %v456
      %v494 = vpack.c.b16 %v458, %v457
      %v495 = vpack.c.b16 %v459, %v459
      %v496 = vpack.c.b16 %v461, %v460
      %v497 = vpack.c.b16 %v462, %v462
      %v498 = vpack.c.b16 %v464, %v463
      %v499 = vpack.c.b16 %v465, %v465
      %v500 = vpack.c.b16 %v467, %v466
      %v501 = vpack.c.b16 %v468, %v468
      %v502 = vpack.c.b16 %v470, %v469
      %v503 = vpack.c.b16 %v471, %v471
      %vm504 = vsmask.f32 7424
      %v506 = vshrl.u32 %v472, 16
      %v508 = vshll.u32 %v472, 16
      %v510 = vrot.slane %v508, 1
      %v511 = vor.u32 %v506, %v510
      %v513 = vshll.u32 %v473, 16
      %v515 = vrot.slane %v513, 1
      %v516 = vsel %vm504, %v511, %v515
      %v518 = vshrl.u32 %v474, 16
      %v520 = vshll.u32 %v474, 16
      %v522 = vrot.slane %v520, 1
      %v523 = vor.u32 %v518, %v522
      %v525 = vshll.u32 %v475, 16
      %v527 = vrot.slane %v525, 1
      %v528 = vsel %vm504, %v523, %v527
      %v530 = vshrl.u32 %v476, 16
      %v532 = vshll.u32 %v476, 16
      %v534 = vrot.slane %v532, 1
      %v535 = vor.u32 %v530, %v534
      %v537 = vshll.u32 %v477, 16
      %v539 = vrot.slane %v537, 1
      %v540 = vsel %vm504, %v535, %v539
      %v542 = vshrl.u32 %v478, 16
      %v544 = vshll.u32 %v478, 16
      %v546 = vrot.slane %v544, 1
      %v547 = vor.u32 %v542, %v546
      %v549 = vshll.u32 %v479, 16
      %v551 = vrot.slane %v549, 1
      %v552 = vsel %vm504, %v547, %v551
      %v554 = vshrl.u32 %v480, 16
      %v556 = vshll.u32 %v480, 16
      %v558 = vrot.slane %v556, 1
      %v559 = vor.u32 %v554, %v558
      %v561 = vshll.u32 %v481, 16
      %v563 = vrot.slane %v561, 1
      %v564 = vsel %vm504, %v559, %v563
      %v566 = vshrl.u32 %v482, 16
      %v568 = vshll.u32 %v482, 16
      %v570 = vrot.slane %v568, 1
      %v571 = vor.u32 %v566, %v570
      %v573 = vshll.u32 %v483, 16
      %v575 = vrot.slane %v573, 1
      %v576 = vsel %vm504, %v571, %v575
      %v578 = vshrl.u32 %v484, 16
      %v580 = vshll.u32 %v484, 16
      %v582 = vrot.slane %v580, 1
      %v583 = vor.u32 %v578, %v582
      %v585 = vshll.u32 %v485, 16
      %v587 = vrot.slane %v585, 1
      %v588 = vsel %vm504, %v583, %v587
      %v590 = vshrl.u32 %v486, 16
      %v592 = vshll.u32 %v486, 16
      %v594 = vrot.slane %v592, 1
      %v595 = vor.u32 %v590, %v594
      %v597 = vshll.u32 %v487, 16
      %v599 = vrot.slane %v597, 1
      %v600 = vsel %vm504, %v595, %v599
      %v602 = vshrl.u32 %v488, 16
      %v604 = vshll.u32 %v488, 16
      %v606 = vrot.slane %v604, 1
      %v607 = vor.u32 %v602, %v606
      %v609 = vshll.u32 %v489, 16
      %v611 = vrot.slane %v609, 1
      %v612 = vsel %vm504, %v607, %v611
      %v614 = vshrl.u32 %v490, 16
      %v616 = vshll.u32 %v490, 16
      %v618 = vrot.slane %v616, 1
      %v619 = vor.u32 %v614, %v618
      %v621 = vshll.u32 %v491, 16
      %v623 = vrot.slane %v621, 1
      %v624 = vsel %vm504, %v619, %v623
      %v626 = vshrl.u32 %v492, 16
      %v628 = vshll.u32 %v492, 16
      %v630 = vrot.slane %v628, 1
      %v631 = vor.u32 %v626, %v630
      %v633 = vshll.u32 %v493, 16
      %v635 = vrot.slane %v633, 1
      %v636 = vsel %vm504, %v631, %v635
      %v638 = vshrl.u32 %v494, 16
      %v640 = vshll.u32 %v494, 16
      %v642 = vrot.slane %v640, 1
      %v643 = vor.u32 %v638, %v642
      %v645 = vshll.u32 %v495, 16
      %v647 = vrot.slane %v645, 1
      %v648 = vsel %vm504, %v643, %v647
      %v650 = vshrl.u32 %v496, 16
      %v652 = vshll.u32 %v496, 16
      %v654 = vrot.slane %v652, 1
      %v655 = vor.u32 %v650, %v654
      %v657 = vshll.u32 %v497, 16
      %v659 = vrot.slane %v657, 1
      %v660 = vsel %vm504, %v655, %v659
      %v662 = vshrl.u32 %v498, 16
      %v664 = vshll.u32 %v498, 16
      %v666 = vrot.slane %v664, 1
      %v667 = vor.u32 %v662, %v666
      %v669 = vshll.u32 %v499, 16
      %v671 = vrot.slane %v669, 1
      %v672 = vsel %vm504, %v667, %v671
      %v674 = vshrl.u32 %v500, 16
      %v676 = vshll.u32 %v500, 16
      %v678 = vrot.slane %v676, 1
      %v679 = vor.u32 %v674, %v678
      %v681 = vshll.u32 %v501, 16
      %v683 = vrot.slane %v681, 1
      %v684 = vsel %vm504, %v679, %v683
      %v686 = vshrl.u32 %v502, 16
      %v688 = vshll.u32 %v502, 16
      %v690 = vrot.slane %v688, 1
      %v691 = vor.u32 %v686, %v690
      %v693 = vshll.u32 %v503, 16
      %v695 = vrot.slane %v693, 1
      %v696 = vsel %vm504, %v691, %v695
      %697 = vrot.lane.b32.xlu0 %v516, 4
      %v698 = vpop.permute.xlu0 %697
      %699 = vrot.lane.b32.xlu0 %v528, 4
      %v700 = vpop.permute.xlu0 %699
      %701 = vrot.lane.b32.xlu0 %v540, 4
      %v702 = vpop.permute.xlu0 %701
      %703 = vrot.lane.b32.xlu0 %v552, 4
      %v704 = vpop.permute.xlu0 %703
      %705 = vrot.lane.b32.xlu0 %v564, 4
      %v706 = vpop.permute.xlu0 %705
      %707 = vrot.lane.b32.xlu0 %v576, 4
      %v708 = vpop.permute.xlu0 %707
      %709 = vrot.lane.b32.xlu0 %v588, 4
      %v710 = vpop.permute.xlu0 %709
      %711 = vrot.lane.b32.xlu0 %v600, 4
      %v712 = vpop.permute.xlu0 %711
      %713 = vrot.lane.b32.xlu0 %v612, 4
      %v714 = vpop.permute.xlu0 %713
      %715 = vrot.lane.b32.xlu0 %v624, 4
      %v716 = vpop.permute.xlu0 %715
      %717 = vrot.lane.b32.xlu0 %v636, 4
      %v718 = vpop.permute.xlu0 %717
      %719 = vrot.lane.b32.xlu0 %v648, 4
      %v720 = vpop.permute.xlu0 %719
      %721 = vrot.lane.b32.xlu0 %v660, 4
      %v722 = vpop.permute.xlu0 %721
      %723 = vrot.lane.b32.xlu0 %v672, 4
      %v724 = vpop.permute.xlu0 %723
      %725 = vrot.lane.b32.xlu0 %v684, 4
      %v726 = vpop.permute.xlu0 %725
      %727 = vrot.lane.b32.xlu0 %v696, 4
      %v728 = vpop.permute.xlu0 %727
      %vm745 = vcmask 64544
      %746 = vst.msk [vmem:[#allocation2] sm:$0xff] %vm745, %v698
      %747 = vst.msk [vmem:[#allocation2 + $0x8] sm:$0xff] %vm745, %v700
      %748 = vst.msk [vmem:[#allocation2 + $0x10] sm:$0xff] %vm745, %v702
      %749 = vst.msk [vmem:[#allocation2 + $0x18] sm:$0xff] %vm745, %v704
      %750 = vst.msk [vmem:[#allocation2 + $0x20] sm:$0xff] %vm745, %v706
      %751 = vst.msk [vmem:[#allocation2 + $0x28] sm:$0xff] %vm745, %v708
      %752 = vst.msk [vmem:[#allocation2 + $0x30] sm:$0xff] %vm745, %v710
      %753 = vst.msk [vmem:[#allocation2 + $0x38] sm:$0xff] %vm745, %v712
      %754 = vst.msk [vmem:[#allocation2 + $0x40] sm:$0xff] %vm745, %v714
      %755 = vst.msk [vmem:[#allocation2 + $0x48] sm:$0xff] %vm745, %v716
      %756 = vst.msk [vmem:[#allocation2 + $0x50] sm:$0xff] %vm745, %v718
      %757 = vst.msk [vmem:[#allocation2 + $0x58] sm:$0xff] %vm745, %v720
      %758 = vst.msk [vmem:[#allocation2 + $0x60] sm:$0xff] %vm745, %v722
      %759 = vst.msk [vmem:[#allocation2 + $0x68] sm:$0xff] %vm745, %v724
      %760 = vst.msk [vmem:[#allocation2 + $0x70] sm:$0xff] %vm745, %v726
      %761 = vst.msk [vmem:[#allocation2 + $0x78] sm:$0xff] %vm745, %v728
      %v762 = vld [vmem:[%s172] sm:$0xe]
      %v763 = vld [vmem:[%s172 + $0x4] sm:$0xf]
      %v764 = vld [vmem:[%s172 + $0x8] sm:$0x1]
      %v765 = vld [vmem:[%s172 + $0xc] sm:$0xe]
      %v766 = vld [vmem:[%s172 + $0x10] sm:$0xf]
      %v767 = vld [vmem:[%s172 + $0x14] sm:$0x1]
      %v768 = vld [vmem:[%s172 + $0x18] sm:$0xe]
      %v769 = vld [vmem:[%s172 + $0x1c] sm:$0xf]
      %v770 = vld [vmem:[%s172 + $0x20] sm:$0x1]
      %v771 = vld [vmem:[%s172 + $0x24] sm:$0xe]
      %v772 = vld [vmem:[%s172 + $0x28] sm:$0xf]
      %v773 = vld [vmem:[%s172 + $0x2c] sm:$0x1]
      %v774 = vld [vmem:[%s172 + $0x30] sm:$0xe]
      %v775 = vld [vmem:[%s172 + $0x34] sm:$0xf]
      %v776 = vld [vmem:[%s172 + $0x38] sm:$0x1]
      %v777 = vld [vmem:[%s172 + $0x3c] sm:$0xe]
      %v778 = vld [vmem:[%s172 + $0x40] sm:$0xf]
      %v779 = vld [vmem:[%s172 + $0x44] sm:$0x1]
      %v780 = vld [vmem:[%s172 + $0x48] sm:$0xe]
      %v781 = vld [vmem:[%s172 + $0x4c] sm:$0xf]
      %v782 = vld [vmem:[%s172 + $0x50] sm:$0x1]
      %v783 = vld [vmem:[%s172 + $0x54] sm:$0xe]
      %v784 = vld [vmem:[%s172 + $0x58] sm:$0xf]
      %v785 = vld [vmem:[%s172 + $0x5c] sm:$0x1]
      %v786 = vld [vmem:[%s172 + $0x60] sm:$0xe]
      %v787 = vld [vmem:[%s172 + $0x64] sm:$0xf]
      %v788 = vld [vmem:[%s172 + $0x68] sm:$0x1]
      %v789 = vld [vmem:[%s172 + $0x6c] sm:$0xe]
      %v790 = vld [vmem:[%s172 + $0x70] sm:$0xf]
      %v791 = vld [vmem:[%s172 + $0x74] sm:$0x1]
      %v792 = vld [vmem:[%s172 + $0x78] sm:$0xe]
      %v793 = vld [vmem:[%s172 + $0x7c] sm:$0xf]
      %v794 = vld [vmem:[%s172 + $0x80] sm:$0x1]
      %v795 = vld [vmem:[%s172 + $0x84] sm:$0xe]
      %v796 = vld [vmem:[%s172 + $0x88] sm:$0xf]
      %v797 = vld [vmem:[%s172 + $0x8c] sm:$0x1]
      %v798 = vld [vmem:[%s172 + $0x90] sm:$0xe]
      %v799 = vld [vmem:[%s172 + $0x94] sm:$0xf]
      %v800 = vld [vmem:[%s172 + $0x98] sm:$0x1]
      %v801 = vld [vmem:[%s172 + $0x9c] sm:$0xe]
      %v802 = vld [vmem:[%s172 + $0xa0] sm:$0xf]
      %v803 = vld [vmem:[%s172 + $0xa4] sm:$0x1]
      %v804 = vld [vmem:[%s172 + $0xa8] sm:$0xe]
      %v805 = vld [vmem:[%s172 + $0xac] sm:$0xf]
      %v806 = vld [vmem:[%s172 + $0xb0] sm:$0x1]
      %v807 = vld [vmem:[%s172 + $0xb4] sm:$0xe]
      %v808 = vld [vmem:[%s172 + $0xb8] sm:$0xf]
      %v809 = vld [vmem:[%s172 + $0xbc] sm:$0x1]
      %v858 = vunpack.c.l.b16 %v762
      %v859 = vunpack.c.l.b16 %v763
      %v860 = vunpack.c.l.b16 %v764
      %v861 = vunpack.c.l.b16 %v765
      %v862 = vunpack.c.l.b16 %v766
      %v863 = vunpack.c.l.b16 %v767
      %v864 = vunpack.c.l.b16 %v768
      %v865 = vunpack.c.l.b16 %v769
      %v866 = vunpack.c.l.b16 %v770
      %v867 = vunpack.c.l.b16 %v771
      %v868 = vunpack.c.l.b16 %v772
      %v869 = vunpack.c.l.b16 %v773
      %v870 = vunpack.c.l.b16 %v774
      %v871 = vunpack.c.l.b16 %v775
      %v872 = vunpack.c.l.b16 %v776
      %v873 = vunpack.c.l.b16 %v777
      %v874 = vunpack.c.l.b16 %v778
      %v875 = vunpack.c.l.b16 %v779
      %v876 = vunpack.c.l.b16 %v780
      %v877 = vunpack.c.l.b16 %v781
      %v878 = vunpack.c.l.b16 %v782
      %v879 = vunpack.c.l.b16 %v783
      %v880 = vunpack.c.l.b16 %v784
      %v881 = vunpack.c.l.b16 %v785
      %v882 = vunpack.c.l.b16 %v786
      %v883 = vunpack.c.l.b16 %v787
      %v884 = vunpack.c.l.b16 %v788
      %v885 = vunpack.c.l.b16 %v789
      %v886 = vunpack.c.l.b16 %v790
      %v887 = vunpack.c.l.b16 %v791
      %v888 = vunpack.c.l.b16 %v792
      %v889 = vunpack.c.l.b16 %v793
      %v890 = vunpack.c.l.b16 %v794
      %v891 = vunpack.c.l.b16 %v795
      %v892 = vunpack.c.l.b16 %v796
      %v893 = vunpack.c.l.b16 %v797
      %v894 = vunpack.c.l.b16 %v798
      %v895 = vunpack.c.l.b16 %v799
      %v896 = vunpack.c.l.b16 %v800
      %v897 = vunpack.c.l.b16 %v801
      %v898 = vunpack.c.l.b16 %v802
      %v899 = vunpack.c.l.b16 %v803
      %v900 = vunpack.c.l.b16 %v804
      %v901 = vunpack.c.l.b16 %v805
      %v902 = vunpack.c.l.b16 %v806
      %v903 = vunpack.c.l.b16 %v807
      %v904 = vunpack.c.l.b16 %v808
      %v905 = vunpack.c.l.b16 %v809
      %v906 = vpack.c.b16 %v859, %v858
      %v907 = vpack.c.b16 %v860, %v860
      %v908 = vpack.c.b16 %v862, %v861
      %v909 = vpack.c.b16 %v863, %v863
      %v910 = vpack.c.b16 %v865, %v864
      %v911 = vpack.c.b16 %v866, %v866
      %v912 = vpack.c.b16 %v868, %v867
      %v913 = vpack.c.b16 %v869, %v869
      %v914 = vpack.c.b16 %v871, %v870
      %v915 = vpack.c.b16 %v872, %v872
      %v916 = vpack.c.b16 %v874, %v873
      %v917 = vpack.c.b16 %v875, %v875
      %v918 = vpack.c.b16 %v877, %v876
      %v919 = vpack.c.b16 %v878, %v878
      %v920 = vpack.c.b16 %v880, %v879
      %v921 = vpack.c.b16 %v881, %v881
      %v922 = vpack.c.b16 %v883, %v882
      %v923 = vpack.c.b16 %v884, %v884
      %v924 = vpack.c.b16 %v886, %v885
      %v925 = vpack.c.b16 %v887, %v887
      %v926 = vpack.c.b16 %v889, %v888
      %v927 = vpack.c.b16 %v890, %v890
      %v928 = vpack.c.b16 %v892, %v891
      %v929 = vpack.c.b16 %v893, %v893
      %v930 = vpack.c.b16 %v895, %v894
      %v931 = vpack.c.b16 %v896, %v896
      %v932 = vpack.c.b16 %v898, %v897
      %v933 = vpack.c.b16 %v899, %v899
      %v934 = vpack.c.b16 %v901, %v900
      %v935 = vpack.c.b16 %v902, %v902
      %v936 = vpack.c.b16 %v904, %v903
      %v937 = vpack.c.b16 %v905, %v905
      %vm938 = vcmask 1046528
      %v939 = vrot.slane %v906, 1
      %v940 = vrot.slane %v907, 1
      %v941 = vsel %vm938, %v939, %v940
      %v942 = vrot.slane %v908, 1
      %v943 = vrot.slane %v909, 1
      %v944 = vsel %vm938, %v942, %v943
      %v945 = vrot.slane %v910, 1
      %v946 = vrot.slane %v911, 1
      %v947 = vsel %vm938, %v945, %v946
      %v948 = vrot.slane %v912, 1
      %v949 = vrot.slane %v913, 1
      %v950 = vsel %vm938, %v948, %v949
      %v951 = vrot.slane %v914, 1
      %v952 = vrot.slane %v915, 1
      %v953 = vsel %vm938, %v951, %v952
      %v954 = vrot.slane %v916, 1
      %v955 = vrot.slane %v917, 1
      %v956 = vsel %vm938, %v954, %v955
      %v957 = vrot.slane %v918, 1
      %v958 = vrot.slane %v919, 1
      %v959 = vsel %vm938, %v957, %v958
      %v960 = vrot.slane %v920, 1
      %v961 = vrot.slane %v921, 1
      %v962 = vsel %vm938, %v960, %v961
      %v963 = vrot.slane %v922, 1
      %v964 = vrot.slane %v923, 1
      %v965 = vsel %vm938, %v963, %v964
      %v966 = vrot.slane %v924, 1
      %v967 = vrot.slane %v925, 1
      %v968 = vsel %vm938, %v966, %v967
      %v969 = vrot.slane %v926, 1
      %v970 = vrot.slane %v927, 1
      %v971 = vsel %vm938, %v969, %v970
      %v972 = vrot.slane %v928, 1
      %v973 = vrot.slane %v929, 1
      %v974 = vsel %vm938, %v972, %v973
      %v975 = vrot.slane %v930, 1
      %v976 = vrot.slane %v931, 1
      %v977 = vsel %vm938, %v975, %v976
      %v978 = vrot.slane %v932, 1
      %v979 = vrot.slane %v933, 1
      %v980 = vsel %vm938, %v978, %v979
      %v981 = vrot.slane %v934, 1
      %v982 = vrot.slane %v935, 1
      %v983 = vsel %vm938, %v981, %v982
      %v984 = vrot.slane %v936, 1
      %v985 = vrot.slane %v937, 1
      %v986 = vsel %vm938, %v984, %v985
      %987 = vrot.lane.b32.xlu0 %v941, 8
      %v988 = vpop.permute.xlu0 %987
      %989 = vrot.lane.b32.xlu0 %v944, 8
      %v990 = vpop.permute.xlu0 %989
      %991 = vrot.lane.b32.xlu0 %v947, 8
      %v992 = vpop.permute.xlu0 %991
      %993 = vrot.lane.b32.xlu0 %v950, 8
      %v994 = vpop.permute.xlu0 %993
      %995 = vrot.lane.b32.xlu0 %v953, 8
      %v996 = vpop.permute.xlu0 %995
      %997 = vrot.lane.b32.xlu0 %v956, 8
      %v998 = vpop.permute.xlu0 %997
      %999 = vrot.lane.b32.xlu0 %v959, 8
      %v1000 = vpop.permute.xlu0 %999
      %1001 = vrot.lane.b32.xlu0 %v962, 8
      %v1002 = vpop.permute.xlu0 %1001
      %1003 = vrot.lane.b32.xlu0 %v965, 8
      %v1004 = vpop.permute.xlu0 %1003
      %1005 = vrot.lane.b32.xlu0 %v968, 8
      %v1006 = vpop.permute.xlu0 %1005
      %1007 = vrot.lane.b32.xlu0 %v971, 8
      %v1008 = vpop.permute.xlu0 %1007
      %1009 = vrot.lane.b32.xlu0 %v974, 8
      %v1010 = vpop.permute.xlu0 %1009
      %1011 = vrot.lane.b32.xlu0 %v977, 8
      %v1012 = vpop.permute.xlu0 %1011
      %1013 = vrot.lane.b32.xlu0 %v980, 8
      %v1014 = vpop.permute.xlu0 %1013
      %1015 = vrot.lane.b32.xlu0 %v983, 8
      %v1016 = vpop.permute.xlu0 %1015
      %1017 = vrot.lane.b32.xlu0 %v986, 8
      %v1018 = vpop.permute.xlu0 %1017
      %vm1035 = vcmask 97344
      %1036 = vst.msk [vmem:[#allocation2] sm:$0xff] %vm1035, %v988
      %1037 = vst.msk [vmem:[#allocation2 + $0x8] sm:$0xff] %vm1035, %v990
      %1038 = vst.msk [vmem:[#allocation2 + $0x10] sm:$0xff] %vm1035, %v992
      %1039 = vst.msk [vmem:[#allocation2 + $0x18] sm:$0xff] %vm1035, %v994
      %1040 = vst.msk [vmem:[#allocation2 + $0x20] sm:$0xff] %vm1035, %v996
      %1041 = vst.msk [vmem:[#allocation2 + $0x28] sm:$0xff] %vm1035, %v998
      %1042 = vst.msk [vmem:[#allocation2 + $0x30] sm:$0xff] %vm1035, %v1000
      %1043 = vst.msk [vmem:[#allocation2 + $0x38] sm:$0xff] %vm1035, %v1002
      %1044 = vst.msk [vmem:[#allocation2 + $0x40] sm:$0xff] %vm1035, %v1004
      %1045 = vst.msk [vmem:[#allocation2 + $0x48] sm:$0xff] %vm1035, %v1006
      %1046 = vst.msk [vmem:[#allocation2 + $0x50] sm:$0xff] %vm1035, %v1008
      %1047 = vst.msk [vmem:[#allocation2 + $0x58] sm:$0xff] %vm1035, %v1010
      %1048 = vst.msk [vmem:[#allocation2 + $0x60] sm:$0xff] %vm1035, %v1012
      %1049 = vst.msk [vmem:[#allocation2 + $0x68] sm:$0xff] %vm1035, %v1014
      %1050 = vst.msk [vmem:[#allocation2 + $0x70] sm:$0xff] %vm1035, %v1016
      %1051 = vst.msk [vmem:[#allocation2 + $0x78] sm:$0xff] %vm1035, %v1018
      %s1052 = scalar_lea.vmem %s172, 12
      %v1053 = vld [vmem:[%s1052] sm:$0xf]
      %v1054 = vld [vmem:[%s1052 + $0x4] sm:$0xf]
      %v1055 = vld [vmem:[%s1052 + $0xc] sm:$0xf]
      %v1056 = vld [vmem:[%s1052 + $0x10] sm:$0xf]
      %v1057 = vld [vmem:[%s1052 + $0x18] sm:$0xf]
      %v1058 = vld [vmem:[%s1052 + $0x1c] sm:$0xf]
      %v1059 = vld [vmem:[%s1052 + $0x24] sm:$0xf]
      %v1060 = vld [vmem:[%s1052 + $0x28] sm:$0xf]
      %v1061 = vld [vmem:[%s1052 + $0x30] sm:$0xf]
      %v1062 = vld [vmem:[%s1052 + $0x34] sm:$0xf]
      %v1063 = vld [vmem:[%s1052 + $0x3c] sm:$0xf]
      %v1064 = vld [vmem:[%s1052 + $0x40] sm:$0xf]
      %v1065 = vld [vmem:[%s1052 + $0x48] sm:$0xf]
      %v1066 = vld [vmem:[%s1052 + $0x4c] sm:$0xf]
      %v1067 = vld [vmem:[%s1052 + $0x54] sm:$0xf]
      %v1068 = vld [vmem:[%s1052 + $0x58] sm:$0xf]
      %v1069 = vld [vmem:[%s1052 + $0x60] sm:$0xf]
      %v1070 = vld [vmem:[%s1052 + $0x64] sm:$0xf]
      %v1071 = vld [vmem:[%s1052 + $0x6c] sm:$0xf]
      %v1072 = vld [vmem:[%s1052 + $0x70] sm:$0xf]
      %v1073 = vld [vmem:[%s1052 + $0x78] sm:$0xf]
      %v1074 = vld [vmem:[%s1052 + $0x7c] sm:$0xf]
      %v1075 = vld [vmem:[%s1052 + $0x84] sm:$0xf]
      %v1076 = vld [vmem:[%s1052 + $0x88] sm:$0xf]
      %v1077 = vld [vmem:[%s1052 + $0x90] sm:$0xf]
      %v1078 = vld [vmem:[%s1052 + $0x94] sm:$0xf]
      %v1079 = vld [vmem:[%s1052 + $0x9c] sm:$0xf]
      %v1080 = vld [vmem:[%s1052 + $0xa0] sm:$0xf]
      %v1081 = vld [vmem:[%s1052 + $0xa8] sm:$0xf]
      %v1082 = vld [vmem:[%s1052 + $0xac] sm:$0xf]
      %v1083 = vld [vmem:[%s1052 + $0xb4] sm:$0xf]
      %v1084 = vld [vmem:[%s1052 + $0xb8] sm:$0xf]
      %v1117 = vunpack.c.l.b16 %v1053
      %v1118 = vunpack.c.l.b16 %v1054
      %v1119 = vunpack.c.l.b16 %v1055
      %v1120 = vunpack.c.l.b16 %v1056
      %v1121 = vunpack.c.l.b16 %v1057
      %v1122 = vunpack.c.l.b16 %v1058
      %v1123 = vunpack.c.l.b16 %v1059
      %v1124 = vunpack.c.l.b16 %v1060
      %v1125 = vunpack.c.l.b16 %v1061
      %v1126 = vunpack.c.l.b16 %v1062
      %v1127 = vunpack.c.l.b16 %v1063
      %v1128 = vunpack.c.l.b16 %v1064
      %v1129 = vunpack.c.l.b16 %v1065
      %v1130 = vunpack.c.l.b16 %v1066
      %v1131 = vunpack.c.l.b16 %v1067
      %v1132 = vunpack.c.l.b16 %v1068
      %v1133 = vunpack.c.l.b16 %v1069
      %v1134 = vunpack.c.l.b16 %v1070
      %v1135 = vunpack.c.l.b16 %v1071
      %v1136 = vunpack.c.l.b16 %v1072
      %v1137 = vunpack.c.l.b16 %v1073
      %v1138 = vunpack.c.l.b16 %v1074
      %v1139 = vunpack.c.l.b16 %v1075
      %v1140 = vunpack.c.l.b16 %v1076
      %v1141 = vunpack.c.l.b16 %v1077
      %v1142 = vunpack.c.l.b16 %v1078
      %v1143 = vunpack.c.l.b16 %v1079
      %v1144 = vunpack.c.l.b16 %v1080
      %v1145 = vunpack.c.l.b16 %v1081
      %v1146 = vunpack.c.l.b16 %v1082
      %v1147 = vunpack.c.l.b16 %v1083
      %v1148 = vunpack.c.l.b16 %v1084
      %v1149 = vpack.c.b16 %v1118, %v1117
      %v1150 = vpack.c.b16 %v1120, %v1119
      %v1151 = vpack.c.b16 %v1122, %v1121
      %v1152 = vpack.c.b16 %v1124, %v1123
      %v1153 = vpack.c.b16 %v1126, %v1125
      %v1154 = vpack.c.b16 %v1128, %v1127
      %v1155 = vpack.c.b16 %v1130, %v1129
      %v1156 = vpack.c.b16 %v1132, %v1131
      %v1157 = vpack.c.b16 %v1134, %v1133
      %v1158 = vpack.c.b16 %v1136, %v1135
      %v1159 = vpack.c.b16 %v1138, %v1137
      %v1160 = vpack.c.b16 %v1140, %v1139
      %v1161 = vpack.c.b16 %v1142, %v1141
      %v1162 = vpack.c.b16 %v1144, %v1143
      %v1163 = vpack.c.b16 %v1146, %v1145
      %v1164 = vpack.c.b16 %v1148, %v1147
      %1165 = vrot.lane.b32.xlu0 %v1149, 12
      %v1166 = vpop.permute.xlu0 %1165
      %1167 = vrot.lane.b32.xlu0 %v1150, 12
      %v1168 = vpop.permute.xlu0 %1167
      %1169 = vrot.lane.b32.xlu0 %v1151, 12
      %v1170 = vpop.permute.xlu0 %1169
      %1171 = vrot.lane.b32.xlu0 %v1152, 12
      %v1172 = vpop.permute.xlu0 %1171
      %1173 = vrot.lane.b32.xlu0 %v1153, 12
      %v1174 = vpop.permute.xlu0 %1173
      %1175 = vrot.lane.b32.xlu0 %v1154, 12
      %v1176 = vpop.permute.xlu0 %1175
      %1177 = vrot.lane.b32.xlu0 %v1155, 12
      %v1178 = vpop.permute.xlu0 %1177
      %1179 = vrot.lane.b32.xlu0 %v1156, 12
      %v1180 = vpop.permute.xlu0 %1179
      %1181 = vrot.lane.b32.xlu0 %v1157, 12
      %v1182 = vpop.permute.xlu0 %1181
      %1183 = vrot.lane.b32.xlu0 %v1158, 12
      %v1184 = vpop.permute.xlu0 %1183
      %1185 = vrot.lane.b32.xlu0 %v1159, 12
      %v1186 = vpop.permute.xlu0 %1185
      %1187 = vrot.lane.b32.xlu0 %v1160, 12
      %v1188 = vpop.permute.xlu0 %1187
      %1189 = vrot.lane.b32.xlu0 %v1161, 12
      %v1190 = vpop.permute.xlu0 %1189
      %1191 = vrot.lane.b32.xlu0 %v1162, 12
      %v1192 = vpop.permute.xlu0 %1191
      %1193 = vrot.lane.b32.xlu0 %v1163, 12
      %v1194 = vpop.permute.xlu0 %1193
      %1195 = vrot.lane.b32.xlu0 %v1164, 12
      %v1196 = vpop.permute.xlu0 %1195
      %vm1213 = vcmask 130144
      %1214 = vst.msk [vmem:[#allocation2] sm:$0xff] %vm1213, %v1166
      %1215 = vst.msk [vmem:[#allocation2 + $0x8] sm:$0xff] %vm1213, %v1168
      %1216 = vst.msk [vmem:[#allocation2 + $0x10] sm:$0xff] %vm1213, %v1170
      %1217 = vst.msk [vmem:[#allocation2 + $0x18] sm:$0xff] %vm1213, %v1172
      %1218 = vst.msk [vmem:[#allocation2 + $0x20] sm:$0xff] %vm1213, %v1174
      %1219 = vst.msk [vmem:[#allocation2 + $0x28] sm:$0xff] %vm1213, %v1176
      %1220 = vst.msk [vmem:[#allocation2 + $0x30] sm:$0xff] %vm1213, %v1178
      %1221 = vst.msk [vmem:[#allocation2 + $0x38] sm:$0xff] %vm1213, %v1180
      %1222 = vst.msk [vmem:[#allocation2 + $0x40] sm:$0xff] %vm1213, %v1182
      %1223 = vst.msk [vmem:[#allocation2 + $0x48] sm:$0xff] %vm1213, %v1184
      %1224 = vst.msk [vmem:[#allocation2 + $0x50] sm:$0xff] %vm1213, %v1186
      %1225 = vst.msk [vmem:[#allocation2 + $0x58] sm:$0xff] %vm1213, %v1188
      %1226 = vst.msk [vmem:[#allocation2 + $0x60] sm:$0xff] %vm1213, %v1190
      %1227 = vst.msk [vmem:[#allocation2 + $0x68] sm:$0xff] %vm1213, %v1192
      %1228 = vst.msk [vmem:[#allocation2 + $0x70] sm:$0xff] %vm1213, %v1194
      %1229 = vst.msk [vmem:[#allocation2 + $0x78] sm:$0xff] %vm1213, %v1196
      %v1230 = vld [vmem:[%s1052] sm:$0xf]
      %v1231 = vld [vmem:[%s1052 + $0x4] sm:$0xf]
      %v1232 = vld [vmem:[%s1052 + $0x8] sm:$0x1]
      %v1233 = vld [vmem:[%s1052 + $0xc] sm:$0xf]
      %v1234 = vld [vmem:[%s1052 + $0x10] sm:$0xf]
      %v1235 = vld [vmem:[%s1052 + $0x14] sm:$0x1]
      %v1236 = vld [vmem:[%s1052 + $0x18] sm:$0xf]
      %v1237 = vld [vmem:[%s1052 + $0x1c] sm:$0xf]
      %v1238 = vld [vmem:[%s1052 + $0x20] sm:$0x1]
      %v1239 = vld [vmem:[%s1052 + $0x24] sm:$0xf]
      %v1240 = vld [vmem:[%s1052 + $0x28] sm:$0xf]
      %v1241 = vld [vmem:[%s1052 + $0x2c] sm:$0x1]
      %v1242 = vld [vmem:[%s1052 + $0x30] sm:$0xf]
      %v1243 = vld [vmem:[%s1052 + $0x34] sm:$0xf]
      %v1244 = vld [vmem:[%s1052 + $0x38] sm:$0x1]
      %v1245 = vld [vmem:[%s1052 + $0x3c] sm:$0xf]
      %v1246 = vld [vmem:[%s1052 + $0x40] sm:$0xf]
      %v1247 = vld [vmem:[%s1052 + $0x44] sm:$0x1]
      %v1248 = vld [vmem:[%s1052 + $0x48] sm:$0xf]
      %v1249 = vld [vmem:[%s1052 + $0x4c] sm:$0xf]
      %v1250 = vld [vmem:[%s1052 + $0x50] sm:$0x1]
      %v1251 = vld [vmem:[%s1052 + $0x54] sm:$0xf]
      %v1252 = vld [vmem:[%s1052 + $0x58] sm:$0xf]
      %v1253 = vld [vmem:[%s1052 + $0x5c] sm:$0x1]
      %v1254 = vld [vmem:[%s1052 + $0x60] sm:$0xf]
      %v1255 = vld [vmem:[%s1052 + $0x64] sm:$0xf]
      %v1256 = vld [vmem:[%s1052 + $0x68] sm:$0x1]
      %v1257 = vld [vmem:[%s1052 + $0x6c] sm:$0xf]
      %v1258 = vld [vmem:[%s1052 + $0x70] sm:$0xf]
      %v1259 = vld [vmem:[%s1052 + $0x74] sm:$0x1]
      %v1260 = vld [vmem:[%s1052 + $0x78] sm:$0xf]
      %v1261 = vld [vmem:[%s1052 + $0x7c] sm:$0xf]
      %v1262 = vld [vmem:[%s1052 + $0x80] sm:$0x1]
      %v1263 = vld [vmem:[%s1052 + $0x84] sm:$0xf]
      %v1264 = vld [vmem:[%s1052 + $0x88] sm:$0xf]
      %v1265 = vld [vmem:[%s1052 + $0x8c] sm:$0x1]
      %v1266 = vld [vmem:[%s1052 + $0x90] sm:$0xf]
      %v1267 = vld [vmem:[%s1052 + $0x94] sm:$0xf]
      %v1268 = vld [vmem:[%s1052 + $0x98] sm:$0x1]
      %v1269 = vld [vmem:[%s1052 + $0x9c] sm:$0xf]
      %v1270 = vld [vmem:[%s1052 + $0xa0] sm:$0xf]
      %v1271 = vld [vmem:[%s1052 + $0xa4] sm:$0x1]
      %v1272 = vld [vmem:[%s1052 + $0xa8] sm:$0xf]
      %v1273 = vld [vmem:[%s1052 + $0xac] sm:$0xf]
      %v1274 = vld [vmem:[%s1052 + $0xb0] sm:$0x1]
      %v1275 = vld [vmem:[%s1052 + $0xb4] sm:$0xf]
      %v1276 = vld [vmem:[%s1052 + $0xb8] sm:$0xf]
      %v1277 = vld [vmem:[%s1052 + $0xbc] sm:$0x1]
      %v1326 = vunpack.c.l.b16 %v1230
      %v1327 = vunpack.c.l.b16 %v1231
      %v1328 = vunpack.c.l.b16 %v1232
      %v1329 = vunpack.c.l.b16 %v1233
      %v1330 = vunpack.c.l.b16 %v1234
      %v1331 = vunpack.c.l.b16 %v1235
      %v1332 = vunpack.c.l.b16 %v1236
      %v1333 = vunpack.c.l.b16 %v1237
      %v1334 = vunpack.c.l.b16 %v1238
      %v1335 = vunpack.c.l.b16 %v1239
      %v1336 = vunpack.c.l.b16 %v1240
      %v1337 = vunpack.c.l.b16 %v1241
      %v1338 = vunpack.c.l.b16 %v1242
      %v1339 = vunpack.c.l.b16 %v1243
      %v1340 = vunpack.c.l.b16 %v1244
      %v1341 = vunpack.c.l.b16 %v1245
      %v1342 = vunpack.c.l.b16 %v1246
      %v1343 = vunpack.c.l.b16 %v1247
      %v1344 = vunpack.c.l.b16 %v1248
      %v1345 = vunpack.c.l.b16 %v1249
      %v1346 = vunpack.c.l.b16 %v1250
      %v1347 = vunpack.c.l.b16 %v1251
      %v1348 = vunpack.c.l.b16 %v1252
      %v1349 = vunpack.c.l.b16 %v1253
      %v1350 = vunpack.c.l.b16 %v1254
      %v1351 = vunpack.c.l.b16 %v1255
      %v1352 = vunpack.c.l.b16 %v1256
      %v1353 = vunpack.c.l.b16 %v1257
      %v1354 = vunpack.c.l.b16 %v1258
      %v1355 = vunpack.c.l.b16 %v1259
      %v1356 = vunpack.c.l.b16 %v1260
      %v1357 = vunpack.c.l.b16 %v1261
      %v1358 = vunpack.c.l.b16 %v1262
      %v1359 = vunpack.c.l.b16 %v1263
      %v1360 = vunpack.c.l.b16 %v1264
      %v1361 = vunpack.c.l.b16 %v1265
      %v1362 = vunpack.c.l.b16 %v1266
      %v1363 = vunpack.c.l.b16 %v1267
      %v1364 = vunpack.c.l.b16 %v1268
      %v1365 = vunpack.c.l.b16 %v1269
      %v1366 = vunpack.c.l.b16 %v1270
      %v1367 = vunpack.c.l.b16 %v1271
      %v1368 = vunpack.c.l.b16 %v1272
      %v1369 = vunpack.c.l.b16 %v1273
      %v1370 = vunpack.c.l.b16 %v1274
      %v1371 = vunpack.c.l.b16 %v1275
      %v1372 = vunpack.c.l.b16 %v1276
      %v1373 = vunpack.c.l.b16 %v1277
      %v1374 = vpack.c.b16 %v1327, %v1326
      %v1375 = vpack.c.b16 %v1328, %v1328
      %v1376 = vpack.c.b16 %v1330, %v1329
      %v1377 = vpack.c.b16 %v1331, %v1331
      %v1378 = vpack.c.b16 %v1333, %v1332
      %v1379 = vpack.c.b16 %v1334, %v1334
      %v1380 = vpack.c.b16 %v1336, %v1335
      %v1381 = vpack.c.b16 %v1337, %v1337
      %v1382 = vpack.c.b16 %v1339, %v1338
      %v1383 = vpack.c.b16 %v1340, %v1340
      %v1384 = vpack.c.b16 %v1342, %v1341
      %v1385 = vpack.c.b16 %v1343, %v1343
      %v1386 = vpack.c.b16 %v1345, %v1344
      %v1387 = vpack.c.b16 %v1346, %v1346
      %v1388 = vpack.c.b16 %v1348, %v1347
      %v1389 = vpack.c.b16 %v1349, %v1349
      %v1390 = vpack.c.b16 %v1351, %v1350
      %v1391 = vpack.c.b16 %v1352, %v1352
      %v1392 = vpack.c.b16 %v1354, %v1353
      %v1393 = vpack.c.b16 %v1355, %v1355
      %v1394 = vpack.c.b16 %v1357, %v1356
      %v1395 = vpack.c.b16 %v1358, %v1358
      %v1396 = vpack.c.b16 %v1360, %v1359
      %v1397 = vpack.c.b16 %v1361, %v1361
      %v1398 = vpack.c.b16 %v1363, %v1362
      %v1399 = vpack.c.b16 %v1364, %v1364
      %v1400 = vpack.c.b16 %v1366, %v1365
      %v1401 = vpack.c.b16 %v1367, %v1367
      %v1402 = vpack.c.b16 %v1369, %v1368
      %v1403 = vpack.c.b16 %v1370, %v1370
      %v1404 = vpack.c.b16 %v1372, %v1371
      %v1405 = vpack.c.b16 %v1373, %v1373
      %v1407 = vshrl.u32 %v1374, 16
      %v1409 = vshll.u32 %v1374, 16
      %v1411 = vrot.slane %v1409, 1
      %v1412 = vor.u32 %v1407, %v1411
      %v1414 = vshll.u32 %v1375, 16
      %v1416 = vrot.slane %v1414, 1
      %v1417 = vsel %vm504, %v1412, %v1416
      %v1419 = vshrl.u32 %v1376, 16
      %v1421 = vshll.u32 %v1376, 16
      %v1423 = vrot.slane %v1421, 1
      %v1424 = vor.u32 %v1419, %v1423
      %v1426 = vshll.u32 %v1377, 16
      %v1428 = vrot.slane %v1426, 1
      %v1429 = vsel %vm504, %v1424, %v1428
      %v1431 = vshrl.u32 %v1378, 16
      %v1433 = vshll.u32 %v1378, 16
      %v1435 = vrot.slane %v1433, 1
      %v1436 = vor.u32 %v1431, %v1435
      %v1438 = vshll.u32 %v1379, 16
      %v1440 = vrot.slane %v1438, 1
      %v1441 = vsel %vm504, %v1436, %v1440
      %v1443 = vshrl.u32 %v1380, 16
      %v1445 = vshll.u32 %v1380, 16
      %v1447 = vrot.slane %v1445, 1
      %v1448 = vor.u32 %v1443, %v1447
      %v1450 = vshll.u32 %v1381, 16
      %v1452 = vrot.slane %v1450, 1
      %v1453 = vsel %vm504, %v1448, %v1452
      %v1455 = vshrl.u32 %v1382, 16
      %v1457 = vshll.u32 %v1382, 16
      %v1459 = vrot.slane %v1457, 1
      %v1460 = vor.u32 %v1455, %v1459
      %v1462 = vshll.u32 %v1383, 16
      %v1464 = vrot.slane %v1462, 1
      %v1465 = vsel %vm504, %v1460, %v1464
      %v1467 = vshrl.u32 %v1384, 16
      %v1469 = vshll.u32 %v1384, 16
      %v1471 = vrot.slane %v1469, 1
      %v1472 = vor.u32 %v1467, %v1471
      %v1474 = vshll.u32 %v1385, 16
      %v1476 = vrot.slane %v1474, 1
      %v1477 = vsel %vm504, %v1472, %v1476
      %v1479 = vshrl.u32 %v1386, 16
      %v1481 = vshll.u32 %v1386, 16
      %v1483 = vrot.slane %v1481, 1
      %v1484 = vor.u32 %v1479, %v1483
      %v1486 = vshll.u32 %v1387, 16
      %v1488 = vrot.slane %v1486, 1
      %v1489 = vsel %vm504, %v1484, %v1488
      %v1491 = vshrl.u32 %v1388, 16
      %v1493 = vshll.u32 %v1388, 16
      %v1495 = vrot.slane %v1493, 1
      %v1496 = vor.u32 %v1491, %v1495
      %v1498 = vshll.u32 %v1389, 16
      %v1500 = vrot.slane %v1498, 1
      %v1501 = vsel %vm504, %v1496, %v1500
      %v1503 = vshrl.u32 %v1390, 16
      %v1505 = vshll.u32 %v1390, 16
      %v1507 = vrot.slane %v1505, 1
      %v1508 = vor.u32 %v1503, %v1507
      %v1510 = vshll.u32 %v1391, 16
      %v1512 = vrot.slane %v1510, 1
      %v1513 = vsel %vm504, %v1508, %v1512
      %v1515 = vshrl.u32 %v1392, 16
      %v1517 = vshll.u32 %v1392, 16
      %v1519 = vrot.slane %v1517, 1
      %v1520 = vor.u32 %v1515, %v1519
      %v1522 = vshll.u32 %v1393, 16
      %v1524 = vrot.slane %v1522, 1
      %v1525 = vsel %vm504, %v1520, %v1524
      %v1527 = vshrl.u32 %v1394, 16
      %v1529 = vshll.u32 %v1394, 16
      %v1531 = vrot.slane %v1529, 1
      %v1532 = vor.u32 %v1527, %v1531
      %v1534 = vshll.u32 %v1395, 16
      %v1536 = vrot.slane %v1534, 1
      %v1537 = vsel %vm504, %v1532, %v1536
      %v1539 = vshrl.u32 %v1396, 16
      %v1541 = vshll.u32 %v1396, 16
      %v1543 = vrot.slane %v1541, 1
      %v1544 = vor.u32 %v1539, %v1543
      %v1546 = vshll.u32 %v1397, 16
      %v1548 = vrot.slane %v1546, 1
      %v1549 = vsel %vm504, %v1544, %v1548
      %v1551 = vshrl.u32 %v1398, 16
      %v1553 = vshll.u32 %v1398, 16
      %v1555 = vrot.slane %v1553, 1
      %v1556 = vor.u32 %v1551, %v1555
      %v1558 = vshll.u32 %v1399, 16
      %v1560 = vrot.slane %v1558, 1
      %v1561 = vsel %vm504, %v1556, %v1560
      %v1563 = vshrl.u32 %v1400, 16
      %v1565 = vshll.u32 %v1400, 16
      %v1567 = vrot.slane %v1565, 1
      %v1568 = vor.u32 %v1563, %v1567
      %v1570 = vshll.u32 %v1401, 16
      %v1572 = vrot.slane %v1570, 1
      %v1573 = vsel %vm504, %v1568, %v1572
      %v1575 = vshrl.u32 %v1402, 16
      %v1577 = vshll.u32 %v1402, 16
      %v1579 = vrot.slane %v1577, 1
      %v1580 = vor.u32 %v1575, %v1579
      %v1582 = vshll.u32 %v1403, 16
      %v1584 = vrot.slane %v1582, 1
      %v1585 = vsel %vm504, %v1580, %v1584
      %v1587 = vshrl.u32 %v1404, 16
      %v1589 = vshll.u32 %v1404, 16
      %v1591 = vrot.slane %v1589, 1
      %v1592 = vor.u32 %v1587, %v1591
      %v1594 = vshll.u32 %v1405, 16
      %v1596 = vrot.slane %v1594, 1
      %v1597 = vsel %vm504, %v1592, %v1596
      %1598 = vrot.lane.b32.xlu0 %v1417, 16
      %v1599 = vpop.permute.xlu0 %1598
      %1600 = vrot.lane.b32.xlu0 %v1429, 16
      %v1601 = vpop.permute.xlu0 %1600
      %1602 = vrot.lane.b32.xlu0 %v1441, 16
      %v1603 = vpop.permute.xlu0 %1602
      %1604 = vrot.lane.b32.xlu0 %v1453, 16
      %v1605 = vpop.permute.xlu0 %1604
      %1606 = vrot.lane.b32.xlu0 %v1465, 16
      %v1607 = vpop.permute.xlu0 %1606
      %1608 = vrot.lane.b32.xlu0 %v1477, 16
      %v1609 = vpop.permute.xlu0 %1608
      %1610 = vrot.lane.b32.xlu0 %v1489, 16
      %v1611 = vpop.permute.xlu0 %1610
      %1612 = vrot.lane.b32.xlu0 %v1501, 16
      %v1613 = vpop.permute.xlu0 %1612
      %1614 = vrot.lane.b32.xlu0 %v1513, 16
      %v1615 = vpop.permute.xlu0 %1614
      %1616 = vrot.lane.b32.xlu0 %v1525, 16
      %v1617 = vpop.permute.xlu0 %1616
      %1618 = vrot.lane.b32.xlu0 %v1537, 16
      %v1619 = vpop.permute.xlu0 %1618
      %1620 = vrot.lane.b32.xlu0 %v1549, 16
      %v1621 = vpop.permute.xlu0 %1620
      %1622 = vrot.lane.b32.xlu0 %v1561, 16
      %v1623 = vpop.permute.xlu0 %1622
      %1624 = vrot.lane.b32.xlu0 %v1573, 16
      %v1625 = vpop.permute.xlu0 %1624
      %1626 = vrot.lane.b32.xlu0 %v1585, 16
      %v1627 = vpop.permute.xlu0 %1626
      %1628 = vrot.lane.b32.xlu0 %v1597, 16
      %v1629 = vpop.permute.xlu0 %1628
      %vm1646 = vcmask 162944
      %1647 = vst.msk [vmem:[#allocation2] sm:$0xff] %vm1646, %v1599
      %1648 = vst.msk [vmem:[#allocation2 + $0x8] sm:$0xff] %vm1646, %v1601
      %1649 = vst.msk [vmem:[#allocation2 + $0x10] sm:$0xff] %vm1646, %v1603
      %1650 = vst.msk [vmem:[#allocation2 + $0x18] sm:$0xff] %vm1646, %v1605
      %1651 = vst.msk [vmem:[#allocation2 + $0x20] sm:$0xff] %vm1646, %v1607
      %1652 = vst.msk [vmem:[#allocation2 + $0x28] sm:$0xff] %vm1646, %v1609
      %1653 = vst.msk [vmem:[#allocation2 + $0x30] sm:$0xff] %vm1646, %v1611
      %1654 = vst.msk [vmem:[#allocation2 + $0x38] sm:$0xff] %vm1646, %v1613
      %1655 = vst.msk [vmem:[#allocation2 + $0x40] sm:$0xff] %vm1646, %v1615
      %1656 = vst.msk [vmem:[#allocation2 + $0x48] sm:$0xff] %vm1646, %v1617
      %1657 = vst.msk [vmem:[#allocation2 + $0x50] sm:$0xff] %vm1646, %v1619
      %1658 = vst.msk [vmem:[#allocation2 + $0x58] sm:$0xff] %vm1646, %v1621
      %1659 = vst.msk [vmem:[#allocation2 + $0x60] sm:$0xff] %vm1646, %v1623
      %1660 = vst.msk [vmem:[#allocation2 + $0x68] sm:$0xff] %vm1646, %v1625
      %1661 = vst.msk [vmem:[#allocation2 + $0x70] sm:$0xff] %vm1646, %v1627
      %1662 = vst.msk [vmem:[#allocation2 + $0x78] sm:$0xff] %vm1646, %v1629
      %v1663 = vld [vmem:[%s1052] sm:$0xe]
      %v1664 = vld [vmem:[%s1052 + $0x4] sm:$0xf]
      %v1665 = vld [vmem:[%s1052 + $0x8] sm:$0x1]
      %v1666 = vld [vmem:[%s1052 + $0xc] sm:$0xe]
      %v1667 = vld [vmem:[%s1052 + $0x10] sm:$0xf]
      %v1668 = vld [vmem:[%s1052 + $0x14] sm:$0x1]
      %v1669 = vld [vmem:[%s1052 + $0x18] sm:$0xe]
      %v1670 = vld [vmem:[%s1052 + $0x1c] sm:$0xf]
      %v1671 = vld [vmem:[%s1052 + $0x20] sm:$0x1]
      %v1672 = vld [vmem:[%s1052 + $0x24] sm:$0xe]
      %v1673 = vld [vmem:[%s1052 + $0x28] sm:$0xf]
      %v1674 = vld [vmem:[%s1052 + $0x2c] sm:$0x1]
      %v1675 = vld [vmem:[%s1052 + $0x30] sm:$0xe]
      %v1676 = vld [vmem:[%s1052 + $0x34] sm:$0xf]
      %v1677 = vld [vmem:[%s1052 + $0x38] sm:$0x1]
      %v1678 = vld [vmem:[%s1052 + $0x3c] sm:$0xe]
      %v1679 = vld [vmem:[%s1052 + $0x40] sm:$0xf]
      %v1680 = vld [vmem:[%s1052 + $0x44] sm:$0x1]
      %v1681 = vld [vmem:[%s1052 + $0x48] sm:$0xe]
      %v1682 = vld [vmem:[%s1052 + $0x4c] sm:$0xf]
      %v1683 = vld [vmem:[%s1052 + $0x50] sm:$0x1]
      %v1684 = vld [vmem:[%s1052 + $0x54] sm:$0xe]
      %v1685 = vld [vmem:[%s1052 + $0x58] sm:$0xf]
      %v1686 = vld [vmem:[%s1052 + $0x5c] sm:$0x1]
      %v1687 = vld [vmem:[%s1052 + $0x60] sm:$0xe]
      %v1688 = vld [vmem:[%s1052 + $0x64] sm:$0xf]
      %v1689 = vld [vmem:[%s1052 + $0x68] sm:$0x1]
      %v1690 = vld [vmem:[%s1052 + $0x6c] sm:$0xe]
      %v1691 = vld [vmem:[%s1052 + $0x70] sm:$0xf]
      %v1692 = vld [vmem:[%s1052 + $0x74] sm:$0x1]
      %v1693 = vld [vmem:[%s1052 + $0x78] sm:$0xe]
      %v1694 = vld [vmem:[%s1052 + $0x7c] sm:$0xf]
      %v1695 = vld [vmem:[%s1052 + $0x80] sm:$0x1]
      %v1696 = vld [vmem:[%s1052 + $0x84] sm:$0xe]
      %v1697 = vld [vmem:[%s1052 + $0x88] sm:$0xf]
      %v1698 = vld [vmem:[%s1052 + $0x8c] sm:$0x1]
      %v1699 = vld [vmem:[%s1052 + $0x90] sm:$0xe]
      %v1700 = vld [vmem:[%s1052 + $0x94] sm:$0xf]
      %v1701 = vld [vmem:[%s1052 + $0x98] sm:$0x1]
      %v1702 = vld [vmem:[%s1052 + $0x9c] sm:$0xe]
      %v1703 = vld [vmem:[%s1052 + $0xa0] sm:$0xf]
      %v1704 = vld [vmem:[%s1052 + $0xa4] sm:$0x1]
      %v1705 = vld [vmem:[%s1052 + $0xa8] sm:$0xe]
      %v1706 = vld [vmem:[%s1052 + $0xac] sm:$0xf]
      %v1707 = vld [vmem:[%s1052 + $0xb0] sm:$0x1]
      %v1708 = vld [vmem:[%s1052 + $0xb4] sm:$0xe]
      %v1709 = vld [vmem:[%s1052 + $0xb8] sm:$0xf]
      %v1710 = vld [vmem:[%s1052 + $0xbc] sm:$0x1]
      %v1759 = vunpack.c.l.b16 %v1663
      %v1760 = vunpack.c.l.b16 %v1664
      %v1761 = vunpack.c.l.b16 %v1665
      %v1762 = vunpack.c.l.b16 %v1666
      %v1763 = vunpack.c.l.b16 %v1667
      %v1764 = vunpack.c.l.b16 %v1668
      %v1765 = vunpack.c.l.b16 %v1669
      %v1766 = vunpack.c.l.b16 %v1670
      %v1767 = vunpack.c.l.b16 %v1671
      %v1768 = vunpack.c.l.b16 %v1672
      %v1769 = vunpack.c.l.b16 %v1673
      %v1770 = vunpack.c.l.b16 %v1674
      %v1771 = vunpack.c.l.b16 %v1675
      %v1772 = vunpack.c.l.b16 %v1676
      %v1773 = vunpack.c.l.b16 %v1677
      %v1774 = vunpack.c.l.b16 %v1678
      %v1775 = vunpack.c.l.b16 %v1679
      %v1776 = vunpack.c.l.b16 %v1680
      %v1777 = vunpack.c.l.b16 %v1681
      %v1778 = vunpack.c.l.b16 %v1682
      %v1779 = vunpack.c.l.b16 %v1683
      %v1780 = vunpack.c.l.b16 %v1684
      %v1781 = vunpack.c.l.b16 %v1685
      %v1782 = vunpack.c.l.b16 %v1686
      %v1783 = vunpack.c.l.b16 %v1687
      %v1784 = vunpack.c.l.b16 %v1688
      %v1785 = vunpack.c.l.b16 %v1689
      %v1786 = vunpack.c.l.b16 %v1690
      %v1787 = vunpack.c.l.b16 %v1691
      %v1788 = vunpack.c.l.b16 %v1692
      %v1789 = vunpack.c.l.b16 %v1693
      %v1790 = vunpack.c.l.b16 %v1694
      %v1791 = vunpack.c.l.b16 %v1695
      %v1792 = vunpack.c.l.b16 %v1696
      %v1793 = vunpack.c.l.b16 %v1697
      %v1794 = vunpack.c.l.b16 %v1698
      %v1795 = vunpack.c.l.b16 %v1699
      %v1796 = vunpack.c.l.b16 %v1700
      %v1797 = vunpack.c.l.b16 %v1701
      %v1798 = vunpack.c.l.b16 %v1702
      %v1799 = vunpack.c.l.b16 %v1703
      %v1800 = vunpack.c.l.b16 %v1704
      %v1801 = vunpack.c.l.b16 %v1705
      %v1802 = vunpack.c.l.b16 %v1706
      %v1803 = vunpack.c.l.b16 %v1707
      %v1804 = vunpack.c.l.b16 %v1708
      %v1805 = vunpack.c.l.b16 %v1709
      %v1806 = vunpack.c.l.b16 %v1710
      %v1807 = vpack.c.b16 %v1760, %v1759
      %v1808 = vpack.c.b16 %v1761, %v1761
      %v1809 = vpack.c.b16 %v1763, %v1762
      %v1810 = vpack.c.b16 %v1764, %v1764
      %v1811 = vpack.c.b16 %v1766, %v1765
      %v1812 = vpack.c.b16 %v1767, %v1767
      %v1813 = vpack.c.b16 %v1769, %v1768
      %v1814 = vpack.c.b16 %v1770, %v1770
      %v1815 = vpack.c.b16 %v1772, %v1771
      %v1816 = vpack.c.b16 %v1773, %v1773
      %v1817 = vpack.c.b16 %v1775, %v1774
      %v1818 = vpack.c.b16 %v1776, %v1776
      %v1819 = vpack.c.b16 %v1778, %v1777
      %v1820 = vpack.c.b16 %v1779, %v1779
      %v1821 = vpack.c.b16 %v1781, %v1780
      %v1822 = vpack.c.b16 %v1782, %v1782
      %v1823 = vpack.c.b16 %v1784, %v1783
      %v1824 = vpack.c.b16 %v1785, %v1785
      %v1825 = vpack.c.b16 %v1787, %v1786
      %v1826 = vpack.c.b16 %v1788, %v1788
      %v1827 = vpack.c.b16 %v1790, %v1789
      %v1828 = vpack.c.b16 %v1791, %v1791
      %v1829 = vpack.c.b16 %v1793, %v1792
      %v1830 = vpack.c.b16 %v1794, %v1794
      %v1831 = vpack.c.b16 %v1796, %v1795
      %v1832 = vpack.c.b16 %v1797, %v1797
      %v1833 = vpack.c.b16 %v1799, %v1798
      %v1834 = vpack.c.b16 %v1800, %v1800
      %v1835 = vpack.c.b16 %v1802, %v1801
      %v1836 = vpack.c.b16 %v1803, %v1803
      %v1837 = vpack.c.b16 %v1805, %v1804
      %v1838 = vpack.c.b16 %v1806, %v1806
      %v1839 = vrot.slane %v1807, 1
      %v1840 = vrot.slane %v1808, 1
      %v1841 = vsel %vm938, %v1839, %v1840
      %v1842 = vrot.slane %v1809, 1
      %v1843 = vrot.slane %v1810, 1
      %v1844 = vsel %vm938, %v1842, %v1843
      %v1845 = vrot.slane %v1811, 1
      %v1846 = vrot.slane %v1812, 1
      %v1847 = vsel %vm938, %v1845, %v1846
      %v1848 = vrot.slane %v1813, 1
      %v1849 = vrot.slane %v1814, 1
      %v1850 = vsel %vm938, %v1848, %v1849
      %v1851 = vrot.slane %v1815, 1
      %v1852 = vrot.slane %v1816, 1
      %v1853 = vsel %vm938, %v1851, %v1852
      %v1854 = vrot.slane %v1817, 1
      %v1855 = vrot.slane %v1818, 1
      %v1856 = vsel %vm938, %v1854, %v1855
      %v1857 = vrot.slane %v1819, 1
      %v1858 = vrot.slane %v1820, 1
      %v1859 = vsel %vm938, %v1857, %v1858
      %v1860 = vrot.slane %v1821, 1
      %v1861 = vrot.slane %v1822, 1
      %v1862 = vsel %vm938, %v1860, %v1861
      %v1863 = vrot.slane %v1823, 1
      %v1864 = vrot.slane %v1824, 1
      %v1865 = vsel %vm938, %v1863, %v1864
      %v1866 = vrot.slane %v1825, 1
      %v1867 = vrot.slane %v1826, 1
      %v1868 = vsel %vm938, %v1866, %v1867
      %v1869 = vrot.slane %v1827, 1
      %v1870 = vrot.slane %v1828, 1
      %v1871 = vsel %vm938, %v1869, %v1870
      %v1872 = vrot.slane %v1829, 1
      %v1873 = vrot.slane %v1830, 1
      %v1874 = vsel %vm938, %v1872, %v1873
      %v1875 = vrot.slane %v1831, 1
      %v1876 = vrot.slane %v1832, 1
      %v1877 = vsel %vm938, %v1875, %v1876
      %v1878 = vrot.slane %v1833, 1
      %v1879 = vrot.slane %v1834, 1
      %v1880 = vsel %vm938, %v1878, %v1879
      %v1881 = vrot.slane %v1835, 1
      %v1882 = vrot.slane %v1836, 1
      %v1883 = vsel %vm938, %v1881, %v1882
      %v1884 = vrot.slane %v1837, 1
      %v1885 = vrot.slane %v1838, 1
      %v1886 = vsel %vm938, %v1884, %v1885
      %1887 = vrot.lane.b32.xlu0 %v1841, 20
      %v1888 = vpop.permute.xlu0 %1887
      %1889 = vrot.lane.b32.xlu0 %v1844, 20
      %v1890 = vpop.permute.xlu0 %1889
      %1891 = vrot.lane.b32.xlu0 %v1847, 20
      %v1892 = vpop.permute.xlu0 %1891
      %1893 = vrot.lane.b32.xlu0 %v1850, 20
      %v1894 = vpop.permute.xlu0 %1893
      %1895 = vrot.lane.b32.xlu0 %v1853, 20
      %v1896 = vpop.permute.xlu0 %1895
      %1897 = vrot.lane.b32.xlu0 %v1856, 20
      %v1898 = vpop.permute.xlu0 %1897
      %1899 = vrot.lane.b32.xlu0 %v1859, 20
      %v1900 = vpop.permute.xlu0 %1899
      %1901 = vrot.lane.b32.xlu0 %v1862, 20
      %v1902 = vpop.permute.xlu0 %1901
      %1903 = vrot.lane.b32.xlu0 %v1865, 20
      %v1904 = vpop.permute.xlu0 %1903
      %1905 = vrot.lane.b32.xlu0 %v1868, 20
      %v1906 = vpop.permute.xlu0 %1905
      %1907 = vrot.lane.b32.xlu0 %v1871, 20
      %v1908 = vpop.permute.xlu0 %1907
      %1909 = vrot.lane.b32.xlu0 %v1874, 20
      %v1910 = vpop.permute.xlu0 %1909
      %1911 = vrot.lane.b32.xlu0 %v1877, 20
      %v1912 = vpop.permute.xlu0 %1911
      %1913 = vrot.lane.b32.xlu0 %v1880, 20
      %v1914 = vpop.permute.xlu0 %1913
      %1915 = vrot.lane.b32.xlu0 %v1883, 20
      %v1916 = vpop.permute.xlu0 %1915
      %1917 = vrot.lane.b32.xlu0 %v1886, 20
      %v1918 = vpop.permute.xlu0 %1917
      %vm1935 = vcmask 195744
      %1936 = vst.msk [vmem:[#allocation2] sm:$0xff] %vm1935, %v1888
      %1937 = vst.msk [vmem:[#allocation2 + $0x8] sm:$0xff] %vm1935, %v1890
      %1938 = vst.msk [vmem:[#allocation2 + $0x10] sm:$0xff] %vm1935, %v1892
      %1939 = vst.msk [vmem:[#allocation2 + $0x18] sm:$0xff] %vm1935, %v1894
      %1940 = vst.msk [vmem:[#allocation2 + $0x20] sm:$0xff] %vm1935, %v1896
      %1941 = vst.msk [vmem:[#allocation2 + $0x28] sm:$0xff] %vm1935, %v1898
      %1942 = vst.msk [vmem:[#allocation2 + $0x30] sm:$0xff] %vm1935, %v1900
      %1943 = vst.msk [vmem:[#allocation2 + $0x38] sm:$0xff] %vm1935, %v1902
      %1944 = vst.msk [vmem:[#allocation2 + $0x40] sm:$0xff] %vm1935, %v1904
      %1945 = vst.msk [vmem:[#allocation2 + $0x48] sm:$0xff] %vm1935, %v1906
      %1946 = vst.msk [vmem:[#allocation2 + $0x50] sm:$0xff] %vm1935, %v1908
      %1947 = vst.msk [vmem:[#allocation2 + $0x58] sm:$0xff] %vm1935, %v1910
      %1948 = vst.msk [vmem:[#allocation2 + $0x60] sm:$0xff] %vm1935, %v1912
      %1949 = vst.msk [vmem:[#allocation2 + $0x68] sm:$0xff] %vm1935, %v1914
      %1950 = vst.msk [vmem:[#allocation2 + $0x70] sm:$0xff] %vm1935, %v1916
      %1951 = vst.msk [vmem:[#allocation2 + $0x78] sm:$0xff] %vm1935, %v1918
      %s1952 = scalar_lea.vmem %s172, 24
      %v1953 = vld [vmem:[%s1952] sm:$0xf]
      %v1954 = vld [vmem:[%s1952 + $0x4] sm:$0xf]
      %v1955 = vld [vmem:[%s1952 + $0xc] sm:$0xf]
      %v1956 = vld [vmem:[%s1952 + $0x10] sm:$0xf]
      %v1957 = vld [vmem:[%s1952 + $0x18] sm:$0xf]
      %v1958 = vld [vmem:[%s1952 + $0x1c] sm:$0xf]
      %v1959 = vld [vmem:[%s1952 + $0x24] sm:$0xf]
      %v1960 = vld [vmem:[%s1952 + $0x28] sm:$0xf]
      %v1961 = vld [vmem:[%s1952 + $0x30] sm:$0xf]
      %v1962 = vld [vmem:[%s1952 + $0x34] sm:$0xf]
      %v1963 = vld [vmem:[%s1952 + $0x3c] sm:$0xf]
      %v1964 = vld [vmem:[%s1952 + $0x40] sm:$0xf]
      %v1965 = vld [vmem:[%s1952 + $0x48] sm:$0xf]
      %v1966 = vld [vmem:[%s1952 + $0x4c] sm:$0xf]
      %v1967 = vld [vmem:[%s1952 + $0x54] sm:$0xf]
      %v1968 = vld [vmem:[%s1952 + $0x58] sm:$0xf]
      %v1969 = vld [vmem:[%s1952 + $0x60] sm:$0xf]
      %v1970 = vld [vmem:[%s1952 + $0x64] sm:$0xf]
      %v1971 = vld [vmem:[%s1952 + $0x6c] sm:$0xf]
      %v1972 = vld [vmem:[%s1952 + $0x70] sm:$0xf]
      %v1973 = vld [vmem:[%s1952 + $0x78] sm:$0xf]
      %v1974 = vld [vmem:[%s1952 + $0x7c] sm:$0xf]
      %v1975 = vld [vmem:[%s1952 + $0x84] sm:$0xf]
      %v1976 = vld [vmem:[%s1952 + $0x88] sm:$0xf]
      %v1977 = vld [vmem:[%s1952 + $0x90] sm:$0xf]
      %v1978 = vld [vmem:[%s1952 + $0x94] sm:$0xf]
      %v1979 = vld [vmem:[%s1952 + $0x9c] sm:$0xf]
      %v1980 = vld [vmem:[%s1952 + $0xa0] sm:$0xf]
      %v1981 = vld [vmem:[%s1952 + $0xa8] sm:$0xf]
      %v1982 = vld [vmem:[%s1952 + $0xac] sm:$0xf]
      %v1983 = vld [vmem:[%s1952 + $0xb4] sm:$0xf]
      %v1984 = vld [vmem:[%s1952 + $0xb8] sm:$0xf]
      %v2017 = vunpack.c.l.b16 %v1953
      %v2018 = vunpack.c.l.b16 %v1954
      %v2019 = vunpack.c.l.b16 %v1955
      %v2020 = vunpack.c.l.b16 %v1956
      %v2021 = vunpack.c.l.b16 %v1957
      %v2022 = vunpack.c.l.b16 %v1958
      %v2023 = vunpack.c.l.b16 %v1959
      %v2024 = vunpack.c.l.b16 %v1960
      %v2025 = vunpack.c.l.b16 %v1961
      %v2026 = vunpack.c.l.b16 %v1962
      %v2027 = vunpack.c.l.b16 %v1963
      %v2028 = vunpack.c.l.b16 %v1964
      %v2029 = vunpack.c.l.b16 %v1965
      %v2030 = vunpack.c.l.b16 %v1966
      %v2031 = vunpack.c.l.b16 %v1967
      %v2032 = vunpack.c.l.b16 %v1968
      %v2033 = vunpack.c.l.b16 %v1969
      %v2034 = vunpack.c.l.b16 %v1970
      %v2035 = vunpack.c.l.b16 %v1971
      %v2036 = vunpack.c.l.b16 %v1972
      %v2037 = vunpack.c.l.b16 %v1973
      %v2038 = vunpack.c.l.b16 %v1974
      %v2039 = vunpack.c.l.b16 %v1975
      %v2040 = vunpack.c.l.b16 %v1976
      %v2041 = vunpack.c.l.b16 %v1977
      %v2042 = vunpack.c.l.b16 %v1978
      %v2043 = vunpack.c.l.b16 %v1979
      %v2044 = vunpack.c.l.b16 %v1980
      %v2045 = vunpack.c.l.b16 %v1981
      %v2046 = vunpack.c.l.b16 %v1982
      %v2047 = vunpack.c.l.b16 %v1983
      %v2048 = vunpack.c.l.b16 %v1984
      %v2049 = vpack.c.b16 %v2018, %v2017
      %v2050 = vpack.c.b16 %v2020, %v2019
      %v2051 = vpack.c.b16 %v2022, %v2021
      %v2052 = vpack.c.b16 %v2024, %v2023
      %v2053 = vpack.c.b16 %v2026, %v2025
      %v2054 = vpack.c.b16 %v2028, %v2027
      %v2055 = vpack.c.b16 %v2030, %v2029
      %v2056 = vpack.c.b16 %v2032, %v2031
      %v2057 = vpack.c.b16 %v2034, %v2033
      %v2058 = vpack.c.b16 %v2036, %v2035
      %v2059 = vpack.c.b16 %v2038, %v2037
      %v2060 = vpack.c.b16 %v2040, %v2039
      %v2061 = vpack.c.b16 %v2042, %v2041
      %v2062 = vpack.c.b16 %v2044, %v2043
      %v2063 = vpack.c.b16 %v2046, %v2045
      %v2064 = vpack.c.b16 %v2048, %v2047
      %2065 = vrot.lane.b32.xlu0 %v2049, 24
      %v2066 = vpop.permute.xlu0 %2065
      %2067 = vrot.lane.b32.xlu0 %v2050, 24
      %v2068 = vpop.permute.xlu0 %2067
      %2069 = vrot.lane.b32.xlu0 %v2051, 24
      %v2070 = vpop.permute.xlu0 %2069
      %2071 = vrot.lane.b32.xlu0 %v2052, 24
      %v2072 = vpop.permute.xlu0 %2071
      %2073 = vrot.lane.b32.xlu0 %v2053, 24
      %v2074 = vpop.permute.xlu0 %2073
      %2075 = vrot.lane.b32.xlu0 %v2054, 24
      %v2076 = vpop.permute.xlu0 %2075
      %2077 = vrot.lane.b32.xlu0 %v2055, 24
      %v2078 = vpop.permute.xlu0 %2077
      %2079 = vrot.lane.b32.xlu0 %v2056, 24
      %v2080 = vpop.permute.xlu0 %2079
      %2081 = vrot.lane.b32.xlu0 %v2057, 24
      %v2082 = vpop.permute.xlu0 %2081
      %2083 = vrot.lane.b32.xlu0 %v2058, 24
      %v2084 = vpop.permute.xlu0 %2083
      %2085 = vrot.lane.b32.xlu0 %v2059, 24
      %v2086 = vpop.permute.xlu0 %2085
      %2087 = vrot.lane.b32.xlu0 %v2060, 24
      %v2088 = vpop.permute.xlu0 %2087
      %2089 = vrot.lane.b32.xlu0 %v2061, 24
      %v2090 = vpop.permute.xlu0 %2089
      %2091 = vrot.lane.b32.xlu0 %v2062, 24
      %v2092 = vpop.permute.xlu0 %2091
      %2093 = vrot.lane.b32.xlu0 %v2063, 24
      %v2094 = vpop.permute.xlu0 %2093
      %2095 = vrot.lane.b32.xlu0 %v2064, 24
      %v2096 = vpop.permute.xlu0 %2095
      %vm2113 = vcmask 228544
      %2114 = vst.msk [vmem:[#allocation2] sm:$0xff] %vm2113, %v2066
      %2115 = vst.msk [vmem:[#allocation2 + $0x8] sm:$0xff] %vm2113, %v2068
      %2116 = vst.msk [vmem:[#allocation2 + $0x10] sm:$0xff] %vm2113, %v2070
      %2117 = vst.msk [vmem:[#allocation2 + $0x18] sm:$0xff] %vm2113, %v2072
      %2118 = vst.msk [vmem:[#allocation2 + $0x20] sm:$0xff] %vm2113, %v2074
      %2119 = vst.msk [vmem:[#allocation2 + $0x28] sm:$0xff] %vm2113, %v2076
      %2120 = vst.msk [vmem:[#allocation2 + $0x30] sm:$0xff] %vm2113, %v2078
      %2121 = vst.msk [vmem:[#allocation2 + $0x38] sm:$0xff] %vm2113, %v2080
      %2122 = vst.msk [vmem:[#allocation2 + $0x40] sm:$0xff] %vm2113, %v2082
      %2123 = vst.msk [vmem:[#allocation2 + $0x48] sm:$0xff] %vm2113, %v2084
      %2124 = vst.msk [vmem:[#allocation2 + $0x50] sm:$0xff] %vm2113, %v2086
      %2125 = vst.msk [vmem:[#allocation2 + $0x58] sm:$0xff] %vm2113, %v2088
      %2126 = vst.msk [vmem:[#allocation2 + $0x60] sm:$0xff] %vm2113, %v2090
      %2127 = vst.msk [vmem:[#allocation2 + $0x68] sm:$0xff] %vm2113, %v2092
      %2128 = vst.msk [vmem:[#allocation2 + $0x70] sm:$0xff] %vm2113, %v2094
      %2129 = vst.msk [vmem:[#allocation2 + $0x78] sm:$0xff] %vm2113, %v2096
      %v2130 = vld [vmem:[%s1952] sm:$0xf]
      %v2131 = vld [vmem:[%s1952 + $0x4] sm:$0xf]
      %v2132 = vld [vmem:[%s1952 + $0x8] sm:$0x1]
      %v2133 = vld [vmem:[%s1952 + $0xc] sm:$0xf]
      %v2134 = vld [vmem:[%s1952 + $0x10] sm:$0xf]
      %v2135 = vld [vmem:[%s1952 + $0x14] sm:$0x1]
      %v2136 = vld [vmem:[%s1952 + $0x18] sm:$0xf]
      %v2137 = vld [vmem:[%s1952 + $0x1c] sm:$0xf]
      %v2138 = vld [vmem:[%s1952 + $0x20] sm:$0x1]
      %v2139 = vld [vmem:[%s1952 + $0x24] sm:$0xf]
      %v2140 = vld [vmem:[%s1952 + $0x28] sm:$0xf]
      %v2141 = vld [vmem:[%s1952 + $0x2c] sm:$0x1]
      %v2142 = vld [vmem:[%s1952 + $0x30] sm:$0xf]
      %v2143 = vld [vmem:[%s1952 + $0x34] sm:$0xf]
      %v2144 = vld [vmem:[%s1952 + $0x38] sm:$0x1]
      %v2145 = vld [vmem:[%s1952 + $0x3c] sm:$0xf]
      %v2146 = vld [vmem:[%s1952 + $0x40] sm:$0xf]
      %v2147 = vld [vmem:[%s1952 + $0x44] sm:$0x1]
      %v2148 = vld [vmem:[%s1952 + $0x48] sm:$0xf]
      %v2149 = vld [vmem:[%s1952 + $0x4c] sm:$0xf]
      %v2150 = vld [vmem:[%s1952 + $0x50] sm:$0x1]
      %v2151 = vld [vmem:[%s1952 + $0x54] sm:$0xf]
      %v2152 = vld [vmem:[%s1952 + $0x58] sm:$0xf]
      %v2153 = vld [vmem:[%s1952 + $0x5c] sm:$0x1]
      %v2154 = vld [vmem:[%s1952 + $0x60] sm:$0xf]
      %v2155 = vld [vmem:[%s1952 + $0x64] sm:$0xf]
      %v2156 = vld [vmem:[%s1952 + $0x68] sm:$0x1]
      %v2157 = vld [vmem:[%s1952 + $0x6c] sm:$0xf]
      %v2158 = vld [vmem:[%s1952 + $0x70] sm:$0xf]
      %v2159 = vld [vmem:[%s1952 + $0x74] sm:$0x1]
      %v2160 = vld [vmem:[%s1952 + $0x78] sm:$0xf]
      %v2161 = vld [vmem:[%s1952 + $0x7c] sm:$0xf]
      %v2162 = vld [vmem:[%s1952 + $0x80] sm:$0x1]
      %v2163 = vld [vmem:[%s1952 + $0x84] sm:$0xf]
      %v2164 = vld [vmem:[%s1952 + $0x88] sm:$0xf]
      %v2165 = vld [vmem:[%s1952 + $0x8c] sm:$0x1]
      %v2166 = vld [vmem:[%s1952 + $0x90] sm:$0xf]
      %v2167 = vld [vmem:[%s1952 + $0x94] sm:$0xf]
      %v2168 = vld [vmem:[%s1952 + $0x98] sm:$0x1]
      %v2169 = vld [vmem:[%s1952 + $0x9c] sm:$0xf]
      %v2170 = vld [vmem:[%s1952 + $0xa0] sm:$0xf]
      %v2171 = vld [vmem:[%s1952 + $0xa4] sm:$0x1]
      %v2172 = vld [vmem:[%s1952 + $0xa8] sm:$0xf]
      %v2173 = vld [vmem:[%s1952 + $0xac] sm:$0xf]
      %v2174 = vld [vmem:[%s1952 + $0xb0] sm:$0x1]
      %v2175 = vld [vmem:[%s1952 + $0xb4] sm:$0xf]
      %v2176 = vld [vmem:[%s1952 + $0xb8] sm:$0xf]
      %v2177 = vld [vmem:[%s1952 + $0xbc] sm:$0x1]
      %v2226 = vunpack.c.l.b16 %v2130
      %v2227 = vunpack.c.l.b16 %v2131
      %v2228 = vunpack.c.l.b16 %v2132
      %v2229 = vunpack.c.l.b16 %v2133
      %v2230 = vunpack.c.l.b16 %v2134
      %v2231 = vunpack.c.l.b16 %v2135
      %v2232 = vunpack.c.l.b16 %v2136
      %v2233 = vunpack.c.l.b16 %v2137
      %v2234 = vunpack.c.l.b16 %v2138
      %v2235 = vunpack.c.l.b16 %v2139
      %v2236 = vunpack.c.l.b16 %v2140
      %v2237 = vunpack.c.l.b16 %v2141
      %v2238 = vunpack.c.l.b16 %v2142
      %v2239 = vunpack.c.l.b16 %v2143
      %v2240 = vunpack.c.l.b16 %v2144
      %v2241 = vunpack.c.l.b16 %v2145
      %v2242 = vunpack.c.l.b16 %v2146
      %v2243 = vunpack.c.l.b16 %v2147
      %v2244 = vunpack.c.l.b16 %v2148
      %v2245 = vunpack.c.l.b16 %v2149
      %v2246 = vunpack.c.l.b16 %v2150
      %v2247 = vunpack.c.l.b16 %v2151
      %v2248 = vunpack.c.l.b16 %v2152
      %v2249 = vunpack.c.l.b16 %v2153
      %v2250 = vunpack.c.l.b16 %v2154
      %v2251 = vunpack.c.l.b16 %v2155
      %v2252 = vunpack.c.l.b16 %v2156
      %v2253 = vunpack.c.l.b16 %v2157
      %v2254 = vunpack.c.l.b16 %v2158
      %v2255 = vunpack.c.l.b16 %v2159
      %v2256 = vunpack.c.l.b16 %v2160
      %v2257 = vunpack.c.l.b16 %v2161
      %v2258 = vunpack.c.l.b16 %v2162
      %v2259 = vunpack.c.l.b16 %v2163
      %v2260 = vunpack.c.l.b16 %v2164
      %v2261 = vunpack.c.l.b16 %v2165
      %v2262 = vunpack.c.l.b16 %v2166
      %v2263 = vunpack.c.l.b16 %v2167
      %v2264 = vunpack.c.l.b16 %v2168
      %v2265 = vunpack.c.l.b16 %v2169
      %v2266 = vunpack.c.l.b16 %v2170
      %v2267 = vunpack.c.l.b16 %v2171
      %v2268 = vunpack.c.l.b16 %v2172
      %v2269 = vunpack.c.l.b16 %v2173
      %v2270 = vunpack.c.l.b16 %v2174
      %v2271 = vunpack.c.l.b16 %v2175
      %v2272 = vunpack.c.l.b16 %v2176
      %v2273 = vunpack.c.l.b16 %v2177
      %v2274 = vpack.c.b16 %v2227, %v2226
      %v2275 = vpack.c.b16 %v2228, %v2228
      %v2276 = vpack.c.b16 %v2230, %v2229
      %v2277 = vpack.c.b16 %v2231, %v2231
      %v2278 = vpack.c.b16 %v2233, %v2232
      %v2279 = vpack.c.b16 %v2234, %v2234
      %v2280 = vpack.c.b16 %v2236, %v2235
      %v2281 = vpack.c.b16 %v2237, %v2237
      %v2282 = vpack.c.b16 %v2239, %v2238
      %v2283 = vpack.c.b16 %v2240, %v2240
      %v2284 = vpack.c.b16 %v2242, %v2241
      %v2285 = vpack.c.b16 %v2243, %v2243
      %v2286 = vpack.c.b16 %v2245, %v2244
      %v2287 = vpack.c.b16 %v2246, %v2246
      %v2288 = vpack.c.b16 %v2248, %v2247
      %v2289 = vpack.c.b16 %v2249, %v2249
      %v2290 = vpack.c.b16 %v2251, %v2250
      %v2291 = vpack.c.b16 %v2252, %v2252
      %v2292 = vpack.c.b16 %v2254, %v2253
      %v2293 = vpack.c.b16 %v2255, %v2255
      %v2294 = vpack.c.b16 %v2257, %v2256
      %v2295 = vpack.c.b16 %v2258, %v2258
      %v2296 = vpack.c.b16 %v2260, %v2259
      %v2297 = vpack.c.b16 %v2261, %v2261
      %v2298 = vpack.c.b16 %v2263, %v2262
      %v2299 = vpack.c.b16 %v2264, %v2264
      %v2300 = vpack.c.b16 %v2266, %v2265
      %v2301 = vpack.c.b16 %v2267, %v2267
      %v2302 = vpack.c.b16 %v2269, %v2268
      %v2303 = vpack.c.b16 %v2270, %v2270
      %v2304 = vpack.c.b16 %v2272, %v2271
      %v2305 = vpack.c.b16 %v2273, %v2273
      %v2307 = vshrl.u32 %v2274, 16
      %v2309 = vshll.u32 %v2274, 16
      %v2311 = vrot.slane %v2309, 1
      %v2312 = vor.u32 %v2307, %v2311
      %v2314 = vshll.u32 %v2275, 16
      %v2316 = vrot.slane %v2314, 1
      %v2317 = vsel %vm504, %v2312, %v2316
      %v2319 = vshrl.u32 %v2276, 16
      %v2321 = vshll.u32 %v2276, 16
      %v2323 = vrot.slane %v2321, 1
      %v2324 = vor.u32 %v2319, %v2323
      %v2326 = vshll.u32 %v2277, 16
      %v2328 = vrot.slane %v2326, 1
      %v2329 = vsel %vm504, %v2324, %v2328
      %v2331 = vshrl.u32 %v2278, 16
      %v2333 = vshll.u32 %v2278, 16
      %v2335 = vrot.slane %v2333, 1
      %v2336 = vor.u32 %v2331, %v2335
      %v2338 = vshll.u32 %v2279, 16
      %v2340 = vrot.slane %v2338, 1
      %v2341 = vsel %vm504, %v2336, %v2340
      %v2343 = vshrl.u32 %v2280, 16
      %v2345 = vshll.u32 %v2280, 16
      %v2347 = vrot.slane %v2345, 1
      %v2348 = vor.u32 %v2343, %v2347
      %v2350 = vshll.u32 %v2281, 16
      %v2352 = vrot.slane %v2350, 1
      %v2353 = vsel %vm504, %v2348, %v2352
      %v2355 = vshrl.u32 %v2282, 16
      %v2357 = vshll.u32 %v2282, 16
      %v2359 = vrot.slane %v2357, 1
      %v2360 = vor.u32 %v2355, %v2359
      %v2362 = vshll.u32 %v2283, 16
      %v2364 = vrot.slane %v2362, 1
      %v2365 = vsel %vm504, %v2360, %v2364
      %v2367 = vshrl.u32 %v2284, 16
      %v2369 = vshll.u32 %v2284, 16
      %v2371 = vrot.slane %v2369, 1
      %v2372 = vor.u32 %v2367, %v2371
      %v2374 = vshll.u32 %v2285, 16
      %v2376 = vrot.slane %v2374, 1
      %v2377 = vsel %vm504, %v2372, %v2376
      %v2379 = vshrl.u32 %v2286, 16
      %v2381 = vshll.u32 %v2286, 16
      %v2383 = vrot.slane %v2381, 1
      %v2384 = vor.u32 %v2379, %v2383
      %v2386 = vshll.u32 %v2287, 16
      %v2388 = vrot.slane %v2386, 1
      %v2389 = vsel %vm504, %v2384, %v2388
      %v2391 = vshrl.u32 %v2288, 16
      %v2393 = vshll.u32 %v2288, 16
      %v2395 = vrot.slane %v2393, 1
      %v2396 = vor.u32 %v2391, %v2395
      %v2398 = vshll.u32 %v2289, 16
      %v2400 = vrot.slane %v2398, 1
      %v2401 = vsel %vm504, %v2396, %v2400
      %v2403 = vshrl.u32 %v2290, 16
      %v2405 = vshll.u32 %v2290, 16
      %v2407 = vrot.slane %v2405, 1
      %v2408 = vor.u32 %v2403, %v2407
      %v2410 = vshll.u32 %v2291, 16
      %v2412 = vrot.slane %v2410, 1
      %v2413 = vsel %vm504, %v2408, %v2412
      %v2415 = vshrl.u32 %v2292, 16
      %v2417 = vshll.u32 %v2292, 16
      %v2419 = vrot.slane %v2417, 1
      %v2420 = vor.u32 %v2415, %v2419
      %v2422 = vshll.u32 %v2293, 16
      %v2424 = vrot.slane %v2422, 1
      %v2425 = vsel %vm504, %v2420, %v2424
      %v2427 = vshrl.u32 %v2294, 16
      %v2429 = vshll.u32 %v2294, 16
      %v2431 = vrot.slane %v2429, 1
      %v2432 = vor.u32 %v2427, %v2431
      %v2434 = vshll.u32 %v2295, 16
      %v2436 = vrot.slane %v2434, 1
      %v2437 = vsel %vm504, %v2432, %v2436
      %v2439 = vshrl.u32 %v2296, 16
      %v2441 = vshll.u32 %v2296, 16
      %v2443 = vrot.slane %v2441, 1
      %v2444 = vor.u32 %v2439, %v2443
      %v2446 = vshll.u32 %v2297, 16
      %v2448 = vrot.slane %v2446, 1
      %v2449 = vsel %vm504, %v2444, %v2448
      %v2451 = vshrl.u32 %v2298, 16
      %v2453 = vshll.u32 %v2298, 16
      %v2455 = vrot.slane %v2453, 1
      %v2456 = vor.u32 %v2451, %v2455
      %v2458 = vshll.u32 %v2299, 16
      %v2460 = vrot.slane %v2458, 1
      %v2461 = vsel %vm504, %v2456, %v2460
      %v2463 = vshrl.u32 %v2300, 16
      %v2465 = vshll.u32 %v2300, 16
      %v2467 = vrot.slane %v2465, 1
      %v2468 = vor.u32 %v2463, %v2467
      %v2470 = vshll.u32 %v2301, 16
      %v2472 = vrot.slane %v2470, 1
      %v2473 = vsel %vm504, %v2468, %v2472
      %v2475 = vshrl.u32 %v2302, 16
      %v2477 = vshll.u32 %v2302, 16
      %v2479 = vrot.slane %v2477, 1
      %v2480 = vor.u32 %v2475, %v2479
      %v2482 = vshll.u32 %v2303, 16
      %v2484 = vrot.slane %v2482, 1
      %v2485 = vsel %vm504, %v2480, %v2484
      %v2487 = vshrl.u32 %v2304, 16
      %v2489 = vshll.u32 %v2304, 16
      %v2491 = vrot.slane %v2489, 1
      %v2492 = vor.u32 %v2487, %v2491
      %v2494 = vshll.u32 %v2305, 16
      %v2496 = vrot.slane %v2494, 1
      %v2497 = vsel %vm504, %v2492, %v2496
      %2498 = vrot.lane.b32.xlu0 %v2317, 28
      %v2499 = vpop.permute.xlu0 %2498
      %2500 = vrot.lane.b32.xlu0 %v2329, 28
      %v2501 = vpop.permute.xlu0 %2500
      %2502 = vrot.lane.b32.xlu0 %v2341, 28
      %v2503 = vpop.permute.xlu0 %2502
      %2504 = vrot.lane.b32.xlu0 %v2353, 28
      %v2505 = vpop.permute.xlu0 %2504
      %2506 = vrot.lane.b32.xlu0 %v2365, 28
      %v2507 = vpop.permute.xlu0 %2506
      %2508 = vrot.lane.b32.xlu0 %v2377, 28
      %v2509 = vpop.permute.xlu0 %2508
      %2510 = vrot.lane.b32.xlu0 %v2389, 28
      %v2511 = vpop.permute.xlu0 %2510
      %2512 = vrot.lane.b32.xlu0 %v2401, 28
      %v2513 = vpop.permute.xlu0 %2512
      %2514 = vrot.lane.b32.xlu0 %v2413, 28
      %v2515 = vpop.permute.xlu0 %2514
      %2516 = vrot.lane.b32.xlu0 %v2425, 28
      %v2517 = vpop.permute.xlu0 %2516
      %2518 = vrot.lane.b32.xlu0 %v2437, 28
      %v2519 = vpop.permute.xlu0 %2518
      %2520 = vrot.lane.b32.xlu0 %v2449, 28
      %v2521 = vpop.permute.xlu0 %2520
      %2522 = vrot.lane.b32.xlu0 %v2461, 28
      %v2523 = vpop.permute.xlu0 %2522
      %2524 = vrot.lane.b32.xlu0 %v2473, 28
      %v2525 = vpop.permute.xlu0 %2524
      %2526 = vrot.lane.b32.xlu0 %v2485, 28
      %v2527 = vpop.permute.xlu0 %2526
      %2528 = vrot.lane.b32.xlu0 %v2497, 28
      %v2529 = vpop.permute.xlu0 %2528
      %vm2546 = vcmask 261344
      %2547 = vst.msk [vmem:[#allocation2] sm:$0xff] %vm2546, %v2499
      %2548 = vst.msk [vmem:[#allocation2 + $0x8] sm:$0xff] %vm2546, %v2501
      %2549 = vst.msk [vmem:[#allocation2 + $0x10] sm:$0xff] %vm2546, %v2503
      %2550 = vst.msk [vmem:[#allocation2 + $0x18] sm:$0xff] %vm2546, %v2505
      %2551 = vst.msk [vmem:[#allocation2 + $0x20] sm:$0xff] %vm2546, %v2507
      %2552 = vst.msk [vmem:[#allocation2 + $0x28] sm:$0xff] %vm2546, %v2509
      %2553 = vst.msk [vmem:[#allocation2 + $0x30] sm:$0xff] %vm2546, %v2511
      %2554 = vst.msk [vmem:[#allocation2 + $0x38] sm:$0xff] %vm2546, %v2513
      %2555 = vst.msk [vmem:[#allocation2 + $0x40] sm:$0xff] %vm2546, %v2515
      %2556 = vst.msk [vmem:[#allocation2 + $0x48] sm:$0xff] %vm2546, %v2517
      %2557 = vst.msk [vmem:[#allocation2 + $0x50] sm:$0xff] %vm2546, %v2519
      %2558 = vst.msk [vmem:[#allocation2 + $0x58] sm:$0xff] %vm2546, %v2521
      %2559 = vst.msk [vmem:[#allocation2 + $0x60] sm:$0xff] %vm2546, %v2523
      %2560 = vst.msk [vmem:[#allocation2 + $0x68] sm:$0xff] %vm2546, %v2525
      %2561 = vst.msk [vmem:[#allocation2 + $0x70] sm:$0xff] %vm2546, %v2527
      %2562 = vst.msk [vmem:[#allocation2 + $0x78] sm:$0xff] %vm2546, %v2529
      %v2563 = vld [vmem:[%s1952] sm:$0xe]
      %v2564 = vld [vmem:[%s1952 + $0x4] sm:$0xf]
      %v2565 = vld [vmem:[%s1952 + $0x8] sm:$0x1]
      %v2566 = vld [vmem:[%s1952 + $0xc] sm:$0xe]
      %v2567 = vld [vmem:[%s1952 + $0x10] sm:$0xf]
      %v2568 = vld [vmem:[%s1952 + $0x14] sm:$0x1]
      %v2569 = vld [vmem:[%s1952 + $0x18] sm:$0xe]
      %v2570 = vld [vmem:[%s1952 + $0x1c] sm:$0xf]
      %v2571 = vld [vmem:[%s1952 + $0x20] sm:$0x1]
      %v2572 = vld [vmem:[%s1952 + $0x24] sm:$0xe]
      %v2573 = vld [vmem:[%s1952 + $0x28] sm:$0xf]
      %v2574 = vld [vmem:[%s1952 + $0x2c] sm:$0x1]
      %v2575 = vld [vmem:[%s1952 + $0x30] sm:$0xe]
      %v2576 = vld [vmem:[%s1952 + $0x34] sm:$0xf]
      %v2577 = vld [vmem:[%s1952 + $0x38] sm:$0x1]
      %v2578 = vld [vmem:[%s1952 + $0x3c] sm:$0xe]
      %v2579 = vld [vmem:[%s1952 + $0x40] sm:$0xf]
      %v2580 = vld [vmem:[%s1952 + $0x44] sm:$0x1]
      %v2581 = vld [vmem:[%s1952 + $0x48] sm:$0xe]
      %v2582 = vld [vmem:[%s1952 + $0x4c] sm:$0xf]
      %v2583 = vld [vmem:[%s1952 + $0x50] sm:$0x1]
      %v2584 = vld [vmem:[%s1952 + $0x54] sm:$0xe]
      %v2585 = vld [vmem:[%s1952 + $0x58] sm:$0xf]
      %v2586 = vld [vmem:[%s1952 + $0x5c] sm:$0x1]
      %v2587 = vld [vmem:[%s1952 + $0x60] sm:$0xe]
      %v2588 = vld [vmem:[%s1952 + $0x64] sm:$0xf]
      %v2589 = vld [vmem:[%s1952 + $0x68] sm:$0x1]
      %v2590 = vld [vmem:[%s1952 + $0x6c] sm:$0xe]
      %v2591 = vld [vmem:[%s1952 + $0x70] sm:$0xf]
      %v2592 = vld [vmem:[%s1952 + $0x74] sm:$0x1]
      %v2593 = vld [vmem:[%s1952 + $0x78] sm:$0xe]
      %v2594 = vld [vmem:[%s1952 + $0x7c] sm:$0xf]
      %v2595 = vld [vmem:[%s1952 + $0x80] sm:$0x1]
      %v2596 = vld [vmem:[%s1952 + $0x84] sm:$0xe]
      %v2597 = vld [vmem:[%s1952 + $0x88] sm:$0xf]
      %v2598 = vld [vmem:[%s1952 + $0x8c] sm:$0x1]
      %v2599 = vld [vmem:[%s1952 + $0x90] sm:$0xe]
      %v2600 = vld [vmem:[%s1952 + $0x94] sm:$0xf]
      %v2601 = vld [vmem:[%s1952 + $0x98] sm:$0x1]
      %v2602 = vld [vmem:[%s1952 + $0x9c] sm:$0xe]
      %v2603 = vld [vmem:[%s1952 + $0xa0] sm:$0xf]
      %v2604 = vld [vmem:[%s1952 + $0xa4] sm:$0x1]
      %v2605 = vld [vmem:[%s1952 + $0xa8] sm:$0xe]
      %v2606 = vld [vmem:[%s1952 + $0xac] sm:$0xf]
      %v2607 = vld [vmem:[%s1952 + $0xb0] sm:$0x1]
      %v2608 = vld [vmem:[%s1952 + $0xb4] sm:$0xe]
      %v2609 = vld [vmem:[%s1952 + $0xb8] sm:$0xf]
      %v2610 = vld [vmem:[%s1952 + $0xbc] sm:$0x1]
      %v2659 = vunpack.c.l.b16 %v2563
      %v2660 = vunpack.c.l.b16 %v2564
      %v2661 = vunpack.c.l.b16 %v2565
      %v2662 = vunpack.c.l.b16 %v2566
      %v2663 = vunpack.c.l.b16 %v2567
      %v2664 = vunpack.c.l.b16 %v2568
      %v2665 = vunpack.c.l.b16 %v2569
      %v2666 = vunpack.c.l.b16 %v2570
      %v2667 = vunpack.c.l.b16 %v2571
      %v2668 = vunpack.c.l.b16 %v2572
      %v2669 = vunpack.c.l.b16 %v2573
      %v2670 = vunpack.c.l.b16 %v2574
      %v2671 = vunpack.c.l.b16 %v2575
      %v2672 = vunpack.c.l.b16 %v2576
      %v2673 = vunpack.c.l.b16 %v2577
      %v2674 = vunpack.c.l.b16 %v2578
      %v2675 = vunpack.c.l.b16 %v2579
      %v2676 = vunpack.c.l.b16 %v2580
      %v2677 = vunpack.c.l.b16 %v2581
      %v2678 = vunpack.c.l.b16 %v2582
      %v2679 = vunpack.c.l.b16 %v2583
      %v2680 = vunpack.c.l.b16 %v2584
      %v2681 = vunpack.c.l.b16 %v2585
      %v2682 = vunpack.c.l.b16 %v2586
      %v2683 = vunpack.c.l.b16 %v2587
      %v2684 = vunpack.c.l.b16 %v2588
      %v2685 = vunpack.c.l.b16 %v2589
      %v2686 = vunpack.c.l.b16 %v2590
      %v2687 = vunpack.c.l.b16 %v2591
      %v2688 = vunpack.c.l.b16 %v2592
      %v2689 = vunpack.c.l.b16 %v2593
      %v2690 = vunpack.c.l.b16 %v2594
      %v2691 = vunpack.c.l.b16 %v2595
      %v2692 = vunpack.c.l.b16 %v2596
      %v2693 = vunpack.c.l.b16 %v2597
      %v2694 = vunpack.c.l.b16 %v2598
      %v2695 = vunpack.c.l.b16 %v2599
      %v2696 = vunpack.c.l.b16 %v2600
      %v2697 = vunpack.c.l.b16 %v2601
      %v2698 = vunpack.c.l.b16 %v2602
      %v2699 = vunpack.c.l.b16 %v2603
      %v2700 = vunpack.c.l.b16 %v2604
      %v2701 = vunpack.c.l.b16 %v2605
      %v2702 = vunpack.c.l.b16 %v2606
      %v2703 = vunpack.c.l.b16 %v2607
      %v2704 = vunpack.c.l.b16 %v2608
      %v2705 = vunpack.c.l.b16 %v2609
      %v2706 = vunpack.c.l.b16 %v2610
      %v2707 = vpack.c.b16 %v2660, %v2659
      %v2708 = vpack.c.b16 %v2661, %v2661
      %v2709 = vpack.c.b16 %v2663, %v2662
      %v2710 = vpack.c.b16 %v2664, %v2664
      %v2711 = vpack.c.b16 %v2666, %v2665
      %v2712 = vpack.c.b16 %v2667, %v2667
      %v2713 = vpack.c.b16 %v2669, %v2668
      %v2714 = vpack.c.b16 %v2670, %v2670
      %v2715 = vpack.c.b16 %v2672, %v2671
      %v2716 = vpack.c.b16 %v2673, %v2673
      %v2717 = vpack.c.b16 %v2675, %v2674
      %v2718 = vpack.c.b16 %v2676, %v2676
      %v2719 = vpack.c.b16 %v2678, %v2677
      %v2720 = vpack.c.b16 %v2679, %v2679
      %v2721 = vpack.c.b16 %v2681, %v2680
      %v2722 = vpack.c.b16 %v2682, %v2682
      %v2723 = vpack.c.b16 %v2684, %v2683
      %v2724 = vpack.c.b16 %v2685, %v2685
      %v2725 = vpack.c.b16 %v2687, %v2686
      %v2726 = vpack.c.b16 %v2688, %v2688
      %v2727 = vpack.c.b16 %v2690, %v2689
      %v2728 = vpack.c.b16 %v2691, %v2691
      %v2729 = vpack.c.b16 %v2693, %v2692
      %v2730 = vpack.c.b16 %v2694, %v2694
      %v2731 = vpack.c.b16 %v2696, %v2695
      %v2732 = vpack.c.b16 %v2697, %v2697
      %v2733 = vpack.c.b16 %v2699, %v2698
      %v2734 = vpack.c.b16 %v2700, %v2700
      %v2735 = vpack.c.b16 %v2702, %v2701
      %v2736 = vpack.c.b16 %v2703, %v2703
      %v2737 = vpack.c.b16 %v2705, %v2704
      %v2738 = vpack.c.b16 %v2706, %v2706
      %v2739 = vrot.slane %v2707, 1
      %v2740 = vrot.slane %v2708, 1
      %v2741 = vsel %vm938, %v2739, %v2740
      %v2742 = vrot.slane %v2709, 1
      %v2743 = vrot.slane %v2710, 1
      %v2744 = vsel %vm938, %v2742, %v2743
      %v2745 = vrot.slane %v2711, 1
      %v2746 = vrot.slane %v2712, 1
      %v2747 = vsel %vm938, %v2745, %v2746
      %v2748 = vrot.slane %v2713, 1
      %v2749 = vrot.slane %v2714, 1
      %v2750 = vsel %vm938, %v2748, %v2749
      %v2751 = vrot.slane %v2715, 1
      %v2752 = vrot.slane %v2716, 1
      %v2753 = vsel %vm938, %v2751, %v2752
      %v2754 = vrot.slane %v2717, 1
      %v2755 = vrot.slane %v2718, 1
      %v2756 = vsel %vm938, %v2754, %v2755
      %v2757 = vrot.slane %v2719, 1
      %v2758 = vrot.slane %v2720, 1
      %v2759 = vsel %vm938, %v2757, %v2758
      %v2760 = vrot.slane %v2721, 1
      %v2761 = vrot.slane %v2722, 1
      %v2762 = vsel %vm938, %v2760, %v2761
      %v2763 = vrot.slane %v2723, 1
      %v2764 = vrot.slane %v2724, 1
      %v2765 = vsel %vm938, %v2763, %v2764
      %v2766 = vrot.slane %v2725, 1
      %v2767 = vrot.slane %v2726, 1
      %v2768 = vsel %vm938, %v2766, %v2767
      %v2769 = vrot.slane %v2727, 1
      %v2770 = vrot.slane %v2728, 1
      %v2771 = vsel %vm938, %v2769, %v2770
      %v2772 = vrot.slane %v2729, 1
      %v2773 = vrot.slane %v2730, 1
      %v2774 = vsel %vm938, %v2772, %v2773
      %v2775 = vrot.slane %v2731, 1
      %v2776 = vrot.slane %v2732, 1
      %v2777 = vsel %vm938, %v2775, %v2776
      %v2778 = vrot.slane %v2733, 1
      %v2779 = vrot.slane %v2734, 1
      %v2780 = vsel %vm938, %v2778, %v2779
      %v2781 = vrot.slane %v2735, 1
      %v2782 = vrot.slane %v2736, 1
      %v2783 = vsel %vm938, %v2781, %v2782
      %v2784 = vrot.slane %v2737, 1
      %v2785 = vrot.slane %v2738, 1
      %v2786 = vsel %vm938, %v2784, %v2785
      %2787 = vrot.lane.b32.xlu0 %v2741, 32
      %v2788 = vpop.permute.xlu0 %2787
      %2789 = vrot.lane.b32.xlu0 %v2744, 32
      %v2790 = vpop.permute.xlu0 %2789
      %2791 = vrot.lane.b32.xlu0 %v2747, 32
      %v2792 = vpop.permute.xlu0 %2791
      %2793 = vrot.lane.b32.xlu0 %v2750, 32
      %v2794 = vpop.permute.xlu0 %2793
      %2795 = vrot.lane.b32.xlu0 %v2753, 32
      %v2796 = vpop.permute.xlu0 %2795
      %2797 = vrot.lane.b32.xlu0 %v2756, 32
      %v2798 = vpop.permute.xlu0 %2797
      %2799 = vrot.lane.b32.xlu0 %v2759, 32
      %v2800 = vpop.permute.xlu0 %2799
      %2801 = vrot.lane.b32.xlu0 %v2762, 32
      %v2802 = vpop.permute.xlu0 %2801
      %2803 = vrot.lane.b32.xlu0 %v2765, 32
      %v2804 = vpop.permute.xlu0 %2803
      %2805 = vrot.lane.b32.xlu0 %v2768, 32
      %v2806 = vpop.permute.xlu0 %2805
      %2807 = vrot.lane.b32.xlu0 %v2771, 32
      %v2808 = vpop.permute.xlu0 %2807
      %2809 = vrot.lane.b32.xlu0 %v2774, 32
      %v2810 = vpop.permute.xlu0 %2809
      %2811 = vrot.lane.b32.xlu0 %v2777, 32
      %v2812 = vpop.permute.xlu0 %2811
      %2813 = vrot.lane.b32.xlu0 %v2780, 32
      %v2814 = vpop.permute.xlu0 %2813
      %2815 = vrot.lane.b32.xlu0 %v2783, 32
      %v2816 = vpop.permute.xlu0 %2815
      %2817 = vrot.lane.b32.xlu0 %v2786, 32
      %v2818 = vpop.permute.xlu0 %2817
      %vm2835 = vcmask 294144
      %2836 = vst.msk [vmem:[#allocation2] sm:$0xff] %vm2835, %v2788
      %2837 = vst.msk [vmem:[#allocation2 + $0x8] sm:$0xff] %vm2835, %v2790
      %2838 = vst.msk [vmem:[#allocation2 + $0x10] sm:$0xff] %vm2835, %v2792
      %2839 = vst.msk [vmem:[#allocation2 + $0x18] sm:$0xff] %vm2835, %v2794
      %2840 = vst.msk [vmem:[#allocation2 + $0x20] sm:$0xff] %vm2835, %v2796
      %2841 = vst.msk [vmem:[#allocation2 + $0x28] sm:$0xff] %vm2835, %v2798
      %2842 = vst.msk [vmem:[#allocation2 + $0x30] sm:$0xff] %vm2835, %v2800
      %2843 = vst.msk [vmem:[#allocation2 + $0x38] sm:$0xff] %vm2835, %v2802
      %2844 = vst.msk [vmem:[#allocation2 + $0x40] sm:$0xff] %vm2835, %v2804
      %2845 = vst.msk [vmem:[#allocation2 + $0x48] sm:$0xff] %vm2835, %v2806
      %2846 = vst.msk [vmem:[#allocation2 + $0x50] sm:$0xff] %vm2835, %v2808
      %2847 = vst.msk [vmem:[#allocation2 + $0x58] sm:$0xff] %vm2835, %v2810
      %2848 = vst.msk [vmem:[#allocation2 + $0x60] sm:$0xff] %vm2835, %v2812
      %2849 = vst.msk [vmem:[#allocation2 + $0x68] sm:$0xff] %vm2835, %v2814
      %2850 = vst.msk [vmem:[#allocation2 + $0x70] sm:$0xff] %vm2835, %v2816
      %2851 = vst.msk [vmem:[#allocation2 + $0x78] sm:$0xff] %vm2835, %v2818
      %v2852 = vld [vmem:[#allocation2] sm:$0xff]
      %v2853 = vld [vmem:[#allocation2 + $0x8] sm:$0xff]
      %v2854 = vld [vmem:[#allocation2 + $0x10] sm:$0xff]
      %v2855 = vld [vmem:[#allocation2 + $0x18] sm:$0xff]
      %v2856 = vld [vmem:[#allocation2 + $0x20] sm:$0xff]
      %v2857 = vld [vmem:[#allocation2 + $0x28] sm:$0xff]
      %v2858 = vld [vmem:[#allocation2 + $0x30] sm:$0xff]
      %v2859 = vld [vmem:[#allocation2 + $0x38] sm:$0xff]
      %v2860 = vld [vmem:[#allocation2 + $0x40] sm:$0xff]
      %v2861 = vld [vmem:[#allocation2 + $0x48] sm:$0xff]
      %v2862 = vld [vmem:[#allocation2 + $0x50] sm:$0xff]
      %v2863 = vld [vmem:[#allocation2 + $0x58] sm:$0xff]
      %v2864 = vld [vmem:[#allocation2 + $0x60] sm:$0xff]
      %v2865 = vld [vmem:[#allocation2 + $0x68] sm:$0xff]
      %v2866 = vld [vmem:[#allocation2 + $0x70] sm:$0xff]
      %v2867 = vld [vmem:[#allocation2 + $0x78] sm:$0xff]
      %v2868 = vld [vmem:[%s1] sm:$0xf]
      %v2869 = vld [vmem:[%s1 + $0x4] sm:$0xf]
      %v2870 = vld [vmem:[%s1 + $0x8] sm:$0xf]
      %v2871 = vld [vmem:[%s1 + $0xc] sm:$0xf]
      %v2872 = vld [vmem:[%s1 + $0x10] sm:$0x3]
      %v2878 = vunpack.c.l.b16 %v2868
      %v2879 = vunpack.c.l.b16 %v2869
      %v2880 = vunpack.c.l.b16 %v2870
      %v2881 = vunpack.c.l.b16 %v2871
      %v2882 = vunpack.c.l.b16 %v2872
      %v2883 = vpack.c.b16 %v2879, %v2878
      %v2884 = vpack.c.b16 %v2881, %v2880
      %v2885 = vpack.c.b16 %v2882, %v2882
      %vm2888 = vcmask 293888
      %v2890 = vsel %vm2888, %v2852, 0
      %v2893 = vsel %vm2888, %v2853, 0
      %v2896 = vsel %vm2888, %v2854, 0
      %v2899 = vsel %vm2888, %v2855, 0
      %v2902 = vsel %vm2888, %v2856, 0
      %v2905 = vsel %vm2888, %v2857, 0
      %v2908 = vsel %vm2888, %v2858, 0
      %v2911 = vsel %vm2888, %v2859, 0
      %v2914 = vsel %vm2888, %v2860, 0
      %v2917 = vsel %vm2888, %v2861, 0
      %v2920 = vsel %vm2888, %v2862, 0
      %v2923 = vsel %vm2888, %v2863, 0
      %v2926 = vsel %vm2888, %v2864, 0
      %v2929 = vsel %vm2888, %v2865, 0
      %v2932 = vsel %vm2888, %v2866, 0
      %v2935 = vsel %vm2888, %v2867, 0
      %vm2937 = vcmask 1041408
      %v2939 = vsel %vm2937, %v2885, 0
      %2941 = vmatprep.subr.bf16.mxu0 0
      %2942 = vmatpush1.bf16.msra.mxu0 %v2883
      %2943 = vmatprep.subr.bf16.mxu0 0
      %2944 = vmatpush1.bf16.msra.mxu0 %v2884
      %2945 = vmatprep.subr.bf16.mxu0 0
      %2946 = vmatpush1.bf16.msra.mxu0 %v2939
      %2947 = vmatprep.subr.bf16.mxu0 0
      %2948 = vmatpush1.bf16.msra.mxu0 0
      %2949 = vmatprep.subr.bf16.mxu0 0
      %2950 = vmatpush1.bf16.msra.mxu0 0
      %2951 = vmatprep.subr.bf16.mxu0 0
      %2952 = vmatpush1.bf16.msra.mxu0 0
      %2953 = vmatprep.subr.bf16.mxu0 0
      %2954 = vmatpush1.bf16.msra.mxu0 0
      %2955 = vmatprep.subr.bf16.mxu0 0
      %2956 = vmatpush1.bf16.msra.mxu0 0
      %2957 = vmatprep.subr.bf16.mxu0 0
      %2958 = vmatpush1.bf16.msra.mxu0 0
      %2959 = vmatprep.subr.bf16.mxu0 0
      %2960 = vmatpush1.bf16.msra.mxu0 0
      %2961 = vmatprep.subr.bf16.mxu0 0
      %2962 = vmatpush1.bf16.msra.mxu0 0
      %2963 = vmatprep.subr.bf16.mxu0 0
      %2964 = vmatpush1.bf16.msra.mxu0 0
      %2965 = vmatprep.subr.bf16.mxu0 0
      %2966 = vmatpush1.bf16.msra.mxu0 0
      %2967 = vmatprep.subr.bf16.mxu0 0
      %2968 = vmatpush1.bf16.msra.mxu0 0
      %2969 = vmatprep.subr.bf16.mxu0 0
      %2970 = vmatpush1.bf16.msra.mxu0 0
      %2971 = vmatprep.subr.bf16.mxu0 0
      %2972 = vmatpush1.bf16.msra.mxu0 0
      %2973 = vmatprep.mubr.bf16.mxu0 0
      %2974 = vmatmul.mubr.bf16.gmra.mrb[0].mxu0 %v2890
      %v2975 = vpop.f32.mrb[0].mxu0
      %v2976 = vadd.f32 0.0, %v2975
      %v2977 = vpop.f32.mrb[0].mxu0
      %v2978 = vpop.f32.mrb[0].mxu0
      %v2979 = vadd.f32 0.0, %v2978
      %v2980 = vpop.f32.mrb[0].mxu0
      %2981 = vmatprep.mubr.bf16.mxu0 0
      %2982 = vmatmul.mubr.bf16.gmra.mrb[0].mxu0 %v2893
      %v2983 = vpop.f32.mrb[0].mxu0
      %v2984 = vadd.f32 0.0, %v2983
      %v2985 = vpop.f32.mrb[0].mxu0
      %v2986 = vpop.f32.mrb[0].mxu0
      %v2987 = vadd.f32 0.0, %v2986
      %v2988 = vpop.f32.mrb[0].mxu0
      %2989 = vmatprep.mubr.bf16.mxu0 0
      %2990 = vmatmul.mubr.bf16.gmra.mrb[0].mxu0 %v2896
      %v2991 = vpop.f32.mrb[0].mxu0
      %v2992 = vadd.f32 0.0, %v2991
      %v2993 = vpop.f32.mrb[0].mxu0
      %v2994 = vpop.f32.mrb[0].mxu0
      %v2995 = vadd.f32 0.0, %v2994
      %v2996 = vpop.f32.mrb[0].mxu0
      %2997 = vmatprep.mubr.bf16.mxu0 0
      %2998 = vmatmul.mubr.bf16.gmra.mrb[0].mxu0 %v2899
      %v2999 = vpop.f32.mrb[0].mxu0
      %v3000 = vadd.f32 0.0, %v2999
      %v3001 = vpop.f32.mrb[0].mxu0
      %v3002 = vpop.f32.mrb[0].mxu0
      %v3003 = vadd.f32 0.0, %v3002
      %v3004 = vpop.f32.mrb[0].mxu0
      %3005 = vmatprep.mubr.bf16.mxu0 0
      %3006 = vmatmul.mubr.bf16.gmra.mrb[0].mxu0 %v2902
      %v3007 = vpop.f32.mrb[0].mxu0
      %v3008 = vadd.f32 0.0, %v3007
      %v3009 = vpop.f32.mrb[0].mxu0
      %v3010 = vpop.f32.mrb[0].mxu0
      %v3011 = vadd.f32 0.0, %v3010
      %v3012 = vpop.f32.mrb[0].mxu0
      %3013 = vmatprep.mubr.bf16.mxu0 0
      %3014 = vmatmul.mubr.bf16.gmra.mrb[0].mxu0 %v2905
      %v3015 = vpop.f32.mrb[0].mxu0
      %v3016 = vadd.f32 0.0, %v3015
      %v3017 = vpop.f32.mrb[0].mxu0
      %v3018 = vpop.f32.mrb[0].mxu0
      %v3019 = vadd.f32 0.0, %v3018
      %v3020 = vpop.f32.mrb[0].mxu0
      %3021 = vmatprep.mubr.bf16.mxu0 0
      %3022 = vmatmul.mubr.bf16.gmra.mrb[0].mxu0 %v2908
      %v3023 = vpop.f32.mrb[0].mxu0
      %v3024 = vadd.f32 0.0, %v3023
      %v3025 = vpop.f32.mrb[0].mxu0
      %v3026 = vpop.f32.mrb[0].mxu0
      %v3027 = vadd.f32 0.0, %v3026
      %v3028 = vpop.f32.mrb[0].mxu0
      %3029 = vmatprep.mubr.bf16.mxu0 0
      %3030 = vmatmul.mubr.bf16.gmra.mrb[0].mxu0 %v2911
      %v3031 = vpop.f32.mrb[0].mxu0
      %v3032 = vadd.f32 0.0, %v3031
      %v3033 = vpop.f32.mrb[0].mxu0
      %v3034 = vpop.f32.mrb[0].mxu0
      %v3035 = vadd.f32 0.0, %v3034
      %v3036 = vpop.f32.mrb[0].mxu0
      %3037 = vmatprep.mubr.bf16.mxu0 0
      %3038 = vmatmul.mubr.bf16.gmra.mrb[0].mxu0 %v2914
      %v3039 = vpop.f32.mrb[0].mxu0
      %v3040 = vadd.f32 0.0, %v3039
      %v3041 = vpop.f32.mrb[0].mxu0
      %v3042 = vpop.f32.mrb[0].mxu0
      %v3043 = vadd.f32 0.0, %v3042
      %v3044 = vpop.f32.mrb[0].mxu0
      %3045 = vmatprep.mubr.bf16.mxu0 0
      %3046 = vmatmul.mubr.bf16.gmra.mrb[0].mxu0 %v2917
      %v3047 = vpop.f32.mrb[0].mxu0
      %v3048 = vadd.f32 0.0, %v3047
      %v3049 = vpop.f32.mrb[0].mxu0
      %v3050 = vpop.f32.mrb[0].mxu0
      %v3051 = vadd.f32 0.0, %v3050
      %v3052 = vpop.f32.mrb[0].mxu0
      %3053 = vmatprep.mubr.bf16.mxu0 0
      %3054 = vmatmul.mubr.bf16.gmra.mrb[0].mxu0 %v2920
      %v3055 = vpop.f32.mrb[0].mxu0
      %v3056 = vadd.f32 0.0, %v3055
      %v3057 = vpop.f32.mrb[0].mxu0
      %v3058 = vpop.f32.mrb[0].mxu0
      %v3059 = vadd.f32 0.0, %v3058
      %v3060 = vpop.f32.mrb[0].mxu0
      %3061 = vmatprep.mubr.bf16.mxu0 0
      %3062 = vmatmul.mubr.bf16.gmra.mrb[0].mxu0 %v2923
      %v3063 = vpop.f32.mrb[0].mxu0
      %v3064 = vadd.f32 0.0, %v3063
      %v3065 = vpop.f32.mrb[0].mxu0
      %v3066 = vpop.f32.mrb[0].mxu0
      %v3067 = vadd.f32 0.0, %v3066
      %v3068 = vpop.f32.mrb[0].mxu0
      %3069 = vmatprep.mubr.bf16.mxu0 0
      %3070 = vmatmul.mubr.bf16.gmra.mrb[0].mxu0 %v2926
      %v3071 = vpop.f32.mrb[0].mxu0
      %v3072 = vadd.f32 0.0, %v3071
      %v3073 = vpop.f32.mrb[0].mxu0
      %v3074 = vpop.f32.mrb[0].mxu0
      %v3075 = vadd.f32 0.0, %v3074
      %v3076 = vpop.f32.mrb[0].mxu0
      %3077 = vmatprep.mubr.bf16.mxu0 0
      %3078 = vmatmul.mubr.bf16.gmra.mrb[0].mxu0 %v2929
      %v3079 = vpop.f32.mrb[0].mxu0
      %v3080 = vadd.f32 0.0, %v3079
      %v3081 = vpop.f32.mrb[0].mxu0
      %v3082 = vpop.f32.mrb[0].mxu0
      %v3083 = vadd.f32 0.0, %v3082
      %v3084 = vpop.f32.mrb[0].mxu0
      %3085 = vmatprep.mubr.bf16.mxu0 0
      %3086 = vmatmul.mubr.bf16.gmra.mrb[0].mxu0 %v2932
      %v3087 = vpop.f32.mrb[0].mxu0
      %v3088 = vadd.f32 0.0, %v3087
      %v3089 = vpop.f32.mrb[0].mxu0
      %v3090 = vpop.f32.mrb[0].mxu0
      %v3091 = vadd.f32 0.0, %v3090
      %v3092 = vpop.f32.mrb[0].mxu0
      %3093 = vmatprep.mubr.bf16.mxu0 0
      %3094 = vmatmul.mubr.bf16.gmra.mrb[0].mxu0 %v2935
      %v3095 = vpop.f32.mrb[0].mxu0
      %v3096 = vadd.f32 0.0, %v3095
      %v3097 = vpop.f32.mrb[0].mxu0
      %v3098 = vpop.f32.mrb[0].mxu0
      %v3099 = vadd.f32 0.0, %v3098
      %v3100 = vpop.f32.mrb[0].mxu0
      %3101 = vdwg.mxu0
      %3102 = vst.msk [vmem:[%s177] sm:$0xff] %vm311, %v2976
      %3103 = vst.msk [vmem:[%s177 + $0x8] sm:$0xff] %vm311, %v2979
      %3104 = vst.msk [vmem:[%s177 + $0x10] sm:$0xff] %vm311, %v2984
      %3105 = vst.msk [vmem:[%s177 + $0x18] sm:$0xff] %vm311, %v2987
      %3106 = vst.msk [vmem:[%s177 + $0x20] sm:$0xff] %vm311, %v2992
      %3107 = vst.msk [vmem:[%s177 + $0x28] sm:$0xff] %vm311, %v2995
      %3108 = vst.msk [vmem:[%s177 + $0x30] sm:$0xff] %vm311, %v3000
      %3109 = vst.msk [vmem:[%s177 + $0x38] sm:$0xff] %vm311, %v3003
      %3110 = vst.msk [vmem:[%s177 + $0x40] sm:$0xff] %vm311, %v3008
      %3111 = vst.msk [vmem:[%s177 + $0x48] sm:$0xff] %vm311, %v3011
      %3112 = vst.msk [vmem:[%s177 + $0x50] sm:$0xff] %vm311, %v3016
      %3113 = vst.msk [vmem:[%s177 + $0x58] sm:$0xff] %vm311, %v3019
      %3114 = vst.msk [vmem:[%s177 + $0x60] sm:$0xff] %vm311, %v3024
      %3115 = vst.msk [vmem:[%s177 + $0x68] sm:$0xff] %vm311, %v3027
      %3116 = vst.msk [vmem:[%s177 + $0x70] sm:$0xff] %vm311, %v3032
      %3117 = vst.msk [vmem:[%s177 + $0x78] sm:$0xff] %vm311, %v3035
      %3118 = vst.msk [vmem:[%s177 + $0x80] sm:$0xff] %vm311, %v3040
      %3119 = vst.msk [vmem:[%s177 + $0x88] sm:$0xff] %vm311, %v3043
      %3120 = vst.msk [vmem:[%s177 + $0x90] sm:$0xff] %vm311, %v3048
      %3121 = vst.msk [vmem:[%s177 + $0x98] sm:$0xff] %vm311, %v3051
      %3122 = vst.msk [vmem:[%s177 + $0xa0] sm:$0xff] %vm311, %v3056
      %3123 = vst.msk [vmem:[%s177 + $0xa8] sm:$0xff] %vm311, %v3059
      %3124 = vst.msk [vmem:[%s177 + $0xb0] sm:$0xff] %vm311, %v3064
      %3125 = vst.msk [vmem:[%s177 + $0xb8] sm:$0xff] %vm311, %v3067
      %3126 = vst.msk [vmem:[%s177 + $0xc0] sm:$0xff] %vm311, %v3072
      %3127 = vst.msk [vmem:[%s177 + $0xc8] sm:$0xff] %vm311, %v3075
      %3128 = vst.msk [vmem:[%s177 + $0xd0] sm:$0xff] %vm311, %v3080
      %3129 = vst.msk [vmem:[%s177 + $0xd8] sm:$0xff] %vm311, %v3083
      %3130 = vst.msk [vmem:[%s177 + $0xe0] sm:$0xff] %vm311, %v3088
      %3131 = vst.msk [vmem:[%s177 + $0xe8] sm:$0xff] %vm311, %v3091
      %3132 = vst.msk [vmem:[%s177 + $0xf0] sm:$0xff] %vm311, %v3096
      %3133 = vst.msk [vmem:[%s177 + $0xf8] sm:$0xff] %vm311, %v3099
      %v3134 = vsel %vm311, %v2976, 0.0
      %v3135 = vsel %vm311, %v2979, 0.0
      %v3136 = vadd.f32 %v3134, %v3135
      %v3137 = vsel %vm311, %v2984, 0.0
      %v3138 = vadd.f32 %v3136, %v3137
      %v3139 = vsel %vm311, %v2987, 0.0
      %v3140 = vadd.f32 %v3138, %v3139
      %v3141 = vsel %vm311, %v2992, 0.0
      %v3142 = vadd.f32 %v3140, %v3141
      %v3143 = vsel %vm311, %v2995, 0.0
      %v3144 = vadd.f32 %v3142, %v3143
      %v3145 = vsel %vm311, %v3000, 0.0
      %v3146 = vadd.f32 %v3144, %v3145
      %v3147 = vsel %vm311, %v3003, 0.0
      %v3148 = vadd.f32 %v3146, %v3147
      %v3149 = vsel %vm311, %v3008, 0.0
      %v3150 = vadd.f32 %v3148, %v3149
      %v3151 = vsel %vm311, %v3011, 0.0
      %v3152 = vadd.f32 %v3150, %v3151
      %v3153 = vsel %vm311, %v3016, 0.0
      %v3154 = vadd.f32 %v3152, %v3153
      %v3155 = vsel %vm311, %v3019, 0.0
      %v3156 = vadd.f32 %v3154, %v3155
      %v3157 = vsel %vm311, %v3024, 0.0
      %v3158 = vadd.f32 %v3156, %v3157
      %v3159 = vsel %vm311, %v3027, 0.0
      %v3160 = vadd.f32 %v3158, %v3159
      %v3161 = vsel %vm311, %v3032, 0.0
      %v3162 = vadd.f32 %v3160, %v3161
      %v3163 = vsel %vm311, %v3035, 0.0
      %v3164 = vadd.f32 %v3162, %v3163
      %v3165 = vsel %vm311, %v3040, 0.0
      %v3166 = vadd.f32 %v3164, %v3165
      %v3167 = vsel %vm311, %v3043, 0.0
      %v3168 = vadd.f32 %v3166, %v3167
      %v3169 = vsel %vm311, %v3048, 0.0
      %v3170 = vadd.f32 %v3168, %v3169
      %v3171 = vsel %vm311, %v3051, 0.0
      %v3172 = vadd.f32 %v3170, %v3171
      %v3173 = vsel %vm311, %v3056, 0.0
      %v3174 = vadd.f32 %v3172, %v3173
      %v3175 = vsel %vm311, %v3059, 0.0
      %v3176 = vadd.f32 %v3174, %v3175
      %v3177 = vsel %vm311, %v3064, 0.0
      %v3178 = vadd.f32 %v3176, %v3177
      %v3179 = vsel %vm311, %v3067, 0.0
      %v3180 = vadd.f32 %v3178, %v3179
      %v3181 = vsel %vm311, %v3072, 0.0
      %v3182 = vadd.f32 %v3180, %v3181
      %v3183 = vsel %vm311, %v3075, 0.0
      %v3184 = vadd.f32 %v3182, %v3183
      %v3185 = vsel %vm311, %v3080, 0.0
      %v3186 = vadd.f32 %v3184, %v3185
      %v3187 = vsel %vm311, %v3083, 0.0
      %v3188 = vadd.f32 %v3186, %v3187
      %v3189 = vsel %vm311, %v3088, 0.0
      %v3190 = vadd.f32 %v3188, %v3189
      %v3191 = vsel %vm311, %v3091, 0.0
      %v3192 = vadd.f32 %v3190, %v3191
      %v3193 = vsel %vm311, %v3096, 0.0
      %v3194 = vadd.f32 %v3192, %v3193
      %v3195 = vsel %vm311, %v3099, 0.0
      %v3196 = vadd.f32 %v3194, %v3195
      %v3197 = vrot.slane %v3196, 4
      %v3198 = vadd.f32 %v3196, %v3197
      %v3199 = vrot.slane %v3198, 2
      %v3200 = vadd.f32 %v3198, %v3199
      %v3201 = vrot.slane %v3200, 1
      %v3202 = vadd.f32 %v3200, %v3201
      %vm3203 = vcmask 24576
      %3204 = vst.msk [vmem:[%s181] sm:$0x1] %vm3203, %v3202
      %v3205 = vmul.f32 %v2976, %v2976
      %v3206 = vmul.f32 %v2979, %v2979
      %v3207 = vmul.f32 %v2984, %v2984
      %v3208 = vmul.f32 %v2987, %v2987
      %v3209 = vmul.f32 %v2992, %v2992
      %v3210 = vmul.f32 %v2995, %v2995
      %v3211 = vmul.f32 %v3000, %v3000
      %v3212 = vmul.f32 %v3003, %v3003
      %v3213 = vmul.f32 %v3008, %v3008
      %v3214 = vmul.f32 %v3011, %v3011
      %v3215 = vmul.f32 %v3016, %v3016
      %v3216 = vmul.f32 %v3019, %v3019
      %v3217 = vmul.f32 %v3024, %v3024
      %v3218 = vmul.f32 %v3027, %v3027
      %v3219 = vmul.f32 %v3032, %v3032
      %v3220 = vmul.f32 %v3035, %v3035
      %v3221 = vmul.f32 %v3040, %v3040
      %v3222 = vmul.f32 %v3043, %v3043
      %v3223 = vmul.f32 %v3048, %v3048
      %v3224 = vmul.f32 %v3051, %v3051
      %v3225 = vmul.f32 %v3056, %v3056
      %v3226 = vmul.f32 %v3059, %v3059
      %v3227 = vmul.f32 %v3064, %v3064
      %v3228 = vmul.f32 %v3067, %v3067
      %v3229 = vmul.f32 %v3072, %v3072
      %v3230 = vmul.f32 %v3075, %v3075
      %v3231 = vmul.f32 %v3080, %v3080
      %v3232 = vmul.f32 %v3083, %v3083
      %v3233 = vmul.f32 %v3088, %v3088
      %v3234 = vmul.f32 %v3091, %v3091
      %v3235 = vmul.f32 %v3096, %v3096
      %v3236 = vmul.f32 %v3099, %v3099
      %v3237 = vsel %vm311, %v3205, 0.0
      %v3238 = vsel %vm311, %v3206, 0.0
      %v3239 = vadd.f32 %v3237, %v3238
      %v3240 = vsel %vm311, %v3207, 0.0
      %v3241 = vadd.f32 %v3239, %v3240
      %v3242 = vsel %vm311, %v3208, 0.0
      %v3243 = vadd.f32 %v3241, %v3242
      %v3244 = vsel %vm311, %v3209, 0.0
      %v3245 = vadd.f32 %v3243, %v3244
      %v3246 = vsel %vm311, %v3210, 0.0
      %v3247 = vadd.f32 %v3245, %v3246
      %v3248 = vsel %vm311, %v3211, 0.0
      %v3249 = vadd.f32 %v3247, %v3248
      %v3250 = vsel %vm311, %v3212, 0.0
      %v3251 = vadd.f32 %v3249, %v3250
      %v3252 = vsel %vm311, %v3213, 0.0
      %v3253 = vadd.f32 %v3251, %v3252
      %v3254 = vsel %vm311, %v3214, 0.0
      %v3255 = vadd.f32 %v3253, %v3254
      %v3256 = vsel %vm311, %v3215, 0.0
      %v3257 = vadd.f32 %v3255, %v3256
      %v3258 = vsel %vm311, %v3216, 0.0
      %v3259 = vadd.f32 %v3257, %v3258
      %v3260 = vsel %vm311, %v3217, 0.0
      %v3261 = vadd.f32 %v3259, %v3260
      %v3262 = vsel %vm311, %v3218, 0.0
      %v3263 = vadd.f32 %v3261, %v3262
      %v3264 = vsel %vm311, %v3219, 0.0
      %v3265 = vadd.f32 %v3263, %v3264
      %v3266 = vsel %vm311, %v3220, 0.0
      %v3267 = vadd.f32 %v3265, %v3266
      %v3268 = vsel %vm311, %v3221, 0.0
      %v3269 = vadd.f32 %v3267, %v3268
      %v3270 = vsel %vm311, %v3222, 0.0
      %v3271 = vadd.f32 %v3269, %v3270
      %v3272 = vsel %vm311, %v3223, 0.0
      %v3273 = vadd.f32 %v3271, %v3272
      %v3274 = vsel %vm311, %v3224, 0.0
      %v3275 = vadd.f32 %v3273, %v3274
      %v3276 = vsel %vm311, %v3225, 0.0
      %v3277 = vadd.f32 %v3275, %v3276
      %v3278 = vsel %vm311, %v3226, 0.0
      %v3279 = vadd.f32 %v3277, %v3278
      %v3280 = vsel %vm311, %v3227, 0.0
      %v3281 = vadd.f32 %v3279, %v3280
      %v3282 = vsel %vm311, %v3228, 0.0
      %v3283 = vadd.f32 %v3281, %v3282
      %v3284 = vsel %vm311, %v3229, 0.0
      %v3285 = vadd.f32 %v3283, %v3284
      %v3286 = vsel %vm311, %v3230, 0.0
      %v3287 = vadd.f32 %v3285, %v3286
      %v3288 = vsel %vm311, %v3231, 0.0
      %v3289 = vadd.f32 %v3287, %v3288
      %v3290 = vsel %vm311, %v3232, 0.0
      %v3291 = vadd.f32 %v3289, %v3290
      %v3292 = vsel %vm311, %v3233, 0.0
      %v3293 = vadd.f32 %v3291, %v3292
      %v3294 = vsel %vm311, %v3234, 0.0
      %v3295 = vadd.f32 %v3293, %v3294
      %v3296 = vsel %vm311, %v3235, 0.0
      %v3297 = vadd.f32 %v3295, %v3296
      %v3298 = vsel %vm311, %v3236, 0.0
      %v3299 = vadd.f32 %v3297, %v3298
      %v3300 = vrot.slane %v3299, 4
      %v3301 = vadd.f32 %v3299, %v3300
      %v3302 = vrot.slane %v3301, 2
      %v3303 = vadd.f32 %v3301, %v3302
      %v3304 = vrot.slane %v3303, 1
      %v3305 = vadd.f32 %v3303, %v3304
      %3306 = vst.msk [vmem:[%s181 + $0x1] sm:$0x1] %vm3203, %v3305
      %p3307 = scmp.lt.s32.totalorder %s15, 1
      %s3308 = scalar_select %p3307, %s15, 1
      %s3309 = smul.addr %s3308, 32
      %s3310 = smul.addr %s3309, 8
      %s3311 = scalar_lea.vmem %s2, %s3310
      %p3312 = scmp.lt.s32.totalorder %s15, 1
      %s3313 = scalar_select %p3312, %s15, 1
      %s3314 = smul.addr %s3313, 2
      %s3315 = scalar_lea.vmem %s3, %s3314
      // Predicated region
      $region29: #{dis_block.4} parent=27 // pred_check
        %p3316 = pneg %p80
      $region30: #{dis_block.4} parent=27 // pred_check_branch
        %3318 = sbr.rel (%p3316) target = $region32
      $region31: #{dis_block.4} parent=27 // pred_region
        _
      $region32: #{dis_block.4} parent=27 // pred_fallthru
        _
      // Predicated region
      $region33: #{dis_block.4} parent=27 // pred_check
        %p3319 = pneg %p106
      $region34: #{dis_block.4} parent=27 // pred_check_branch
        %3321 = sbr.rel (%p3319) target = $region36
      $region35: #{dis_block.4} parent=27 // pred_region
        _
      $region36: #{dis_block.4} parent=27 // pred_fallthru
        _
    $region28: #{dis_block.4} parent=5 // pred_fallthru
      _
    %p3322 = scmp.le.s32.totalorder 2, %s10
    // Predicated region
    $region37: #{dis_block.4} parent=5 // pred_check
      %p3323 = pneg %p3322
    $region38: #{dis_block.4} parent=5 // pred_check_branch
      %3325 = sbr.rel (%p3323) target = $region40
    $region39: #{dis_block.4} parent=5 // pred_region
      %s3326 = ssub.s32 %s10, 2
      // Predicated region
      $region41: #{dis_block.4} parent=39 // pred_check
        %p3327 = pneg %p86
      $region42: #{dis_block.4} parent=39 // pred_check_branch
        %3329 = sbr.rel (%p3327) target = $region44
      $region43: #{dis_block.4} parent=39 // pred_region
        %p3330 = scmp.lt.s32.totalorder %s16, 1
        %s3331 = scalar_select %p3330, %s16, 1
        %s3332 = smul.addr %s3331, 32
        %s3333 = smul.addr %s3332, 8
        %s3334 = scalar_lea.vmem %s2, %s3333
      $region44: #{dis_block.4} parent=39 // pred_fallthru
        _
      // Predicated region
      $region45: #{dis_block.4} parent=39 // pred_check
        %p3335 = pneg %p112
      $region46: #{dis_block.4} parent=39 // pred_check_branch
        %3337 = sbr.rel (%p3335) target = $region48
      $region47: #{dis_block.4} parent=39 // pred_region
        %p3338 = scmp.lt.s32.totalorder %s16, 1
        %s3339 = scalar_select %p3338, %s16, 1
        %s3340 = smul.addr %s3339, 2
        %s3341 = scalar_lea.vmem %s3, %s3340
      $region48: #{dis_block.4} parent=39 // pred_fallthru
        _
    $region40: #{dis_block.4} parent=5 // pred_fallthru
      _
  $region6: #{dis_block.4} parent=0 // loop_footer
    %s14 = sadd.s32 1, %s10
  $region7: #{dis_block.4} parent=0 // loop_footer_branch
    %9 = sbr.rel target = $region3
  $region8: #{dis_block.4} parent=0 // loop_exit
    _

</llo_original>
